<compile_context>
chip_gen: v5e
topology: v5e:2x2
jax: 0.10.0
libtpu: 0.0.40
codegen_flags: <defaults>
</compile_context>

<pallas_src>
import jax
import jax.numpy as jnp
from jax.experimental import pallas as pl
from jax.experimental.pallas import tpu as pltpu


# Rows of the output processed per register-resident accumulator chunk.
# At c_tile=128 / f32: acc (4, Wo, 128) + one shifted window of the same
# shape stay comfortably under the 64-vreg file even at Wo ~ 25.
_ROW_CHUNK = 4


def _fdam_xcorr_kernel(z_ref, x_ref, o_ref):
    # Per grid step (one batch element, one channel tile):
    #   z_ref: (1, Hz, Wz, Ct)   template block
    #   x_ref: (1, Hx, Wx, Ct)   search   block
    #   o_ref: (1, Ho, Wo, Ct)   output   block, Ho = Hx-Hz+1, Wo = Wx-Wz+1
    Hz, Wz = z_ref.shape[1], z_ref.shape[2]
    Ho, Wo = o_ref.shape[1], o_ref.shape[2]

    # Load the (tiny) template once; it stays resident in a handful of vregs.
    # Per-tap z[u, v] is a static slice -> (Ct,) splat, broadcast implicitly.
    z = z_ref[0].astype(jnp.float32)                      # (Hz, Wz, Ct)

    rows_per_chunk = min(_ROW_CHUNK, Ho)

    # Static loop over output-row chunks.  All slice indices below are Python
    # ints, so every load/store is a fully static (aligned where possible)
    # slice; the accumulator is an SSA value (register-resident) and is
    # written to VMEM exactly once per chunk — no per-tap RMW of a scratch.
    for r0 in range(0, Ho, rows_per_chunk):
        rows = min(rows_per_chunk, Ho - r0)

        # Peeled first tap (u = v = 0): initialize instead of zero-then-add.
        xw = x_ref[0, pl.ds(r0, rows), pl.ds(0, Wo), :].astype(jnp.float32)
        acc = xw * z[0, 0]                                # (rows, Wo, Ct)

        for u in range(Hz):
            for v in range(Wz):
                if u == 0 and v == 0:
                    continue
                xw = x_ref[0, pl.ds(r0 + u, rows),
                           pl.ds(v, Wo), :].astype(jnp.float32)
                acc = acc + xw * z[u, v]

        # Single lane-dense (Ct multiple of 128) store per chunk.
        o_ref[0, pl.ds(r0, rows), :, :] = acc.astype(o_ref.dtype)


def _pick_channel_tile(c):
    # 128-first: bounds vreg pressure for the register-resident accumulator
    # and yields >=2 parallel grid steps (both v7x TensorCores busy) for the
    # common B=1, C=256/512 tracking-inference case.  Larger tiles buy
    # nothing — this op is overhead/DMA-bound, not VMEM-capacity-bound.
    if c % 128 == 0:
        return 128
    return c   # fallback: single (possibly lane-masked) channel block


@jax.jit
def fdam_forward_nhwc(z_f, x_f):
    """Depthwise cross-correlation head, NHWC in / NHWC out (preferred path).

    Args:
      z_f: template features, (B, Hz, Wz, C)
      x_f: search  features, (B, Hx, Wx, C)
    Returns:
      (B, Hx-Hz+1, Wx-Wz+1, C), dtype of x_f.
    """
    B, Hz, Wz, C = z_f.shape
    Bx, Hx, Wx, Cx = x_f.shape
    assert B == Bx and C == Cx, "z_f / x_f batch & channel dims must match"
    assert Hx >= Hz and Wx >= Wz
    Ho, Wo = Hx - Hz + 1, Wx - Wz + 1

    c_tile = _pick_channel_tile(C)
    n_c = C // c_tile

    elem = jnp.dtype(x_f.dtype).itemsize
    cost = pl.CostEstimate(
        flops=2 * B * C * Ho * Wo * Hz * Wz,
        transcendentals=0,
        bytes_accessed=(z_f.size + x_f.size) * elem + B * Ho * Wo * C * elem,
    )

    return pl.pallas_call(
        _fdam_xcorr_kernel,
        out_shape=jax.ShapeDtypeStruct((B, Ho, Wo, C), x_f.dtype),
        grid_spec=pltpu.PrefetchScalarGridSpec(
            num_scalar_prefetch=0,
            grid=(B, n_c),
            in_specs=[
                pl.BlockSpec((1, Hz, Wz, c_tile), lambda b, c: (b, 0, 0, c)),
                pl.BlockSpec((1, Hx, Wx, c_tile), lambda b, c: (b, 0, 0, c)),
            ],
            out_specs=pl.BlockSpec((1, Ho, Wo, c_tile),
                                   lambda b, c: (b, 0, 0, c)),
        ),
        compiler_params=pltpu.CompilerParams(
            dimension_semantics=("parallel", "parallel")),
        cost_estimate=cost,
    )(z_f, x_f)


@jax.jit
def fdam_forward(z_f, x_f):
    """NCHW compatibility adapter (PyTorch layout).

    Prefer `fdam_forward_nhwc` and keep the tracker head NHWC end-to-end:
    these transposes are extra HBM round-trips that dominate this op's cost.
    """
    z_nhwc = jnp.transpose(z_f, (0, 2, 3, 1))
    x_nhwc = jnp.transpose(x_f, (0, 2, 3, 1))
    out_nhwc = fdam_forward_nhwc(z_nhwc, x_nhwc)
    return jnp.transpose(out_nhwc, (0, 3, 1, 2))


def _reference_xcorr_nhwc(z_f, x_f):
    """Pure-JAX reference (depthwise cross-correlation), NHWC in/out."""
    B, Hz, Wz, C = z_f.shape
    _, Hx, Wx, _ = x_f.shape
    Ho, Wo = Hx - Hz + 1, Wx - Wz + 1
    out = jnp.zeros((B, Ho, Wo, C), jnp.float32)
    for u in range(Hz):
        for v in range(Wz):
            out = out + (x_f[:, u:u + Ho, v:v + Wo, :].astype(jnp.float32)
                         * z_f[:, u:u + 1, v:v + 1, :].astype(jnp.float32))
    return out.astype(x_f.dtype)


if __name__ == "__main__":
    key = jax.random.PRNGKey(0)
    k1, k2 = jax.random.split(key)

    # Small but representative SiamFDA-head shapes (NHWC, lane-dense C).
    B, C = 2, 256
    Hz = Wz = 5       # template spatial size
    Hx = Wx = 16      # search spatial size -> 12x12 output

    z_f = jax.random.normal(k1, (B, Hz, Wz, C), dtype=jnp.float32)
    x_f = jax.random.normal(k2, (B, Hx, Wx, C), dtype=jnp.float32)

    # Primary (transpose-free) NHWC path, f32.
    out = jax.block_until_ready(fdam_forward_nhwc(z_f, x_f))
    ref = _reference_xcorr_nhwc(z_f, x_f)
    assert out.shape == (B, Hx - Hz + 1, Wx - Wz + 1, C), out.shape
    assert jnp.allclose(out, ref, atol=1e-4, rtol=1e-4), "NHWC mismatch vs ref"

    # bf16 inputs (halves HBM traffic; f32 accumulate inside the kernel).
    z_bf, x_bf = z_f.astype(jnp.bfloat16), x_f.astype(jnp.bfloat16)
    out_bf = jax.block_until_ready(fdam_forward_nhwc(z_bf, x_bf))
    ref_bf = _reference_xcorr_nhwc(z_bf, x_bf)
    assert out_bf.dtype == jnp.bfloat16
    assert jnp.allclose(out_bf.astype(jnp.float32), ref_bf.astype(jnp.float32),
                        atol=5e-1, rtol=5e-2), "bf16 mismatch vs ref"

    # NCHW (PyTorch-layout) compatibility adapter.
    z_nchw = jnp.transpose(z_f, (0, 3, 1, 2))
    x_nchw = jnp.transpose(x_f, (0, 3, 1, 2))
    out_nchw = jax.block_until_ready(fdam_forward(z_nchw, x_nchw))
    ref_nchw = jnp.transpose(ref, (0, 3, 1, 2))
    assert jnp.allclose(out_nchw, ref_nchw, atol=1e-4, rtol=1e-4), \
        "NCHW adapter mismatch vs ref"

    print("KERNEL_OK")
</pallas_src>

<mosaic_0001>
module attributes {stable_mosaic.version = 11 : i64} {
  func.func @_fdam_xcorr_kernel(%arg0: i32, %arg1: i32, %arg2: memref<1x5x5x128xf32, #tpu.memory_space<vmem>>, %arg3: memref<1x16x16x128xf32, #tpu.memory_space<vmem>>, %arg4: memref<1x12x12x128xf32, #tpu.memory_space<vmem>>) attributes {dimension_semantics = [#tpu.dimension_semantics<parallel>, #tpu.dimension_semantics<parallel>], iteration_bounds = array<i64: 2, 2>, scalar_prefetch = 0 : i64, scratch_operands = 0 : i64, tpu.core_type = #tpu.core_type<tc>, window_params = [{transform_indices = @transform_0, window_bounds = array<i64: 1, 5, 5, 128>}, {transform_indices = @transform_1, window_bounds = array<i64: 1, 16, 16, 128>}, {transform_indices = @transform_2, window_bounds = array<i64: 1, 12, 12, 128>}]} {
    %c0 = arith.constant 0 : index
    %c0_0 = arith.constant 0 : index
    %c0_1 = arith.constant 0 : index
    %c0_2 = arith.constant 0 : index
    %0 = vector.load %arg2[%c0, %c0_0, %c0_1, %c0_2] : memref<1x5x5x128xf32, #tpu.memory_space<vmem>>, vector<1x5x5x128xf32>
    %1 = vector.shape_cast %0 : vector<1x5x5x128xf32> to vector<5x5x128xf32>
    %c0_3 = arith.constant 0 : index
    %c0_4 = arith.constant 0 : index
    %c0_5 = arith.constant 0 : index
    %c0_6 = arith.constant 0 : index
    %2 = vector.load %arg3[%c0_3, %c0_4, %c0_5, %c0_6] : memref<1x16x16x128xf32, #tpu.memory_space<vmem>>, vector<1x4x12x128xf32>
    %3 = vector.shape_cast %2 : vector<1x4x12x128xf32> to vector<4x12x128xf32>
    %4 = vector.extract_strided_slice %1 {offsets = [0, 0, 0], sizes = [1, 1, 128], strides = [1, 1, 1]} : vector<5x5x128xf32> to vector<1x1x128xf32>
    %5 = vector.shape_cast %4 : vector<1x1x128xf32> to vector<128xf32>
    %6 = vector.shape_cast %5 : vector<128xf32> to vector<1x1x128xf32>
    %7 = vector.broadcast %6 : vector<1x1x128xf32> to vector<4x12x128xf32>
    %8 = arith.mulf %3, %7 : vector<4x12x128xf32>
    %c0_7 = arith.constant 0 : index
    %c0_8 = arith.constant 0 : index
    %c1 = arith.constant 1 : index
    %c0_9 = arith.constant 0 : index
    %9 = vector.load %arg3[%c0_7, %c0_8, %c1, %c0_9] : memref<1x16x16x128xf32, #tpu.memory_space<vmem>>, vector<1x4x12x128xf32>
    %10 = vector.shape_cast %9 : vector<1x4x12x128xf32> to vector<4x12x128xf32>
    %11 = vector.extract_strided_slice %1 {offsets = [0, 1, 0], sizes = [1, 1, 128], strides = [1, 1, 1]} : vector<5x5x128xf32> to vector<1x1x128xf32>
    %12 = vector.shape_cast %11 : vector<1x1x128xf32> to vector<128xf32>
    %13 = vector.shape_cast %12 : vector<128xf32> to vector<1x1x128xf32>
    %14 = vector.broadcast %13 : vector<1x1x128xf32> to vector<4x12x128xf32>
    %15 = arith.mulf %10, %14 : vector<4x12x128xf32>
    %16 = arith.addf %8, %15 : vector<4x12x128xf32>
    %c0_10 = arith.constant 0 : index
    %c0_11 = arith.constant 0 : index
    %c2 = arith.constant 2 : index
    %c0_12 = arith.constant 0 : index
    %17 = vector.load %arg3[%c0_10, %c0_11, %c2, %c0_12] : memref<1x16x16x128xf32, #tpu.memory_space<vmem>>, vector<1x4x12x128xf32>
    %18 = vector.shape_cast %17 : vector<1x4x12x128xf32> to vector<4x12x128xf32>
    %19 = vector.extract_strided_slice %1 {offsets = [0, 2, 0], sizes = [1, 1, 128], strides = [1, 1, 1]} : vector<5x5x128xf32> to vector<1x1x128xf32>
    %20 = vector.shape_cast %19 : vector<1x1x128xf32> to vector<128xf32>
    %21 = vector.shape_cast %20 : vector<128xf32> to vector<1x1x128xf32>
    %22 = vector.broadcast %21 : vector<1x1x128xf32> to vector<4x12x128xf32>
    %23 = arith.mulf %18, %22 : vector<4x12x128xf32>
    %24 = arith.addf %16, %23 : vector<4x12x128xf32>
    %c0_13 = arith.constant 0 : index
    %c0_14 = arith.constant 0 : index
    %c3 = arith.constant 3 : index
    %c0_15 = arith.constant 0 : index
    %25 = vector.load %arg3[%c0_13, %c0_14, %c3, %c0_15] : memref<1x16x16x128xf32, #tpu.memory_space<vmem>>, vector<1x4x12x128xf32>
    %26 = vector.shape_cast %25 : vector<1x4x12x128xf32> to vector<4x12x128xf32>
    %27 = vector.extract_strided_slice %1 {offsets = [0, 3, 0], sizes = [1, 1, 128], strides = [1, 1, 1]} : vector<5x5x128xf32> to vector<1x1x128xf32>
    %28 = vector.shape_cast %27 : vector<1x1x128xf32> to vector<128xf32>
    %29 = vector.shape_cast %28 : vector<128xf32> to vector<1x1x128xf32>
    %30 = vector.broadcast %29 : vector<1x1x128xf32> to vector<4x12x128xf32>
    %31 = arith.mulf %26, %30 : vector<4x12x128xf32>
    %32 = arith.addf %24, %31 : vector<4x12x128xf32>
    %c0_16 = arith.constant 0 : index
    %c0_17 = arith.constant 0 : index
    %c4 = arith.constant 4 : index
    %c0_18 = arith.constant 0 : index
    %33 = vector.load %arg3[%c0_16, %c0_17, %c4, %c0_18] : memref<1x16x16x128xf32, #tpu.memory_space<vmem>>, vector<1x4x12x128xf32>
    %34 = vector.shape_cast %33 : vector<1x4x12x128xf32> to vector<4x12x128xf32>
    %35 = vector.extract_strided_slice %1 {offsets = [0, 4, 0], sizes = [1, 1, 128], strides = [1, 1, 1]} : vector<5x5x128xf32> to vector<1x1x128xf32>
    %36 = vector.shape_cast %35 : vector<1x1x128xf32> to vector<128xf32>
    %37 = vector.shape_cast %36 : vector<128xf32> to vector<1x1x128xf32>
    %38 = vector.broadcast %37 : vector<1x1x128xf32> to vector<4x12x128xf32>
    %39 = arith.mulf %34, %38 : vector<4x12x128xf32>
    %40 = arith.addf %32, %39 : vector<4x12x128xf32>
    %c0_19 = arith.constant 0 : index
    %c1_20 = arith.constant 1 : index
    %c0_21 = arith.constant 0 : index
    %c0_22 = arith.constant 0 : index
    %41 = vector.load %arg3[%c0_19, %c1_20, %c0_21, %c0_22] : memref<1x16x16x128xf32, #tpu.memory_space<vmem>>, vector<1x4x12x128xf32>
    %42 = vector.shape_cast %41 : vector<1x4x12x128xf32> to vector<4x12x128xf32>
    %43 = vector.extract_strided_slice %1 {offsets = [1, 0, 0], sizes = [1, 1, 128], strides = [1, 1, 1]} : vector<5x5x128xf32> to vector<1x1x128xf32>
    %44 = vector.shape_cast %43 : vector<1x1x128xf32> to vector<128xf32>
    %45 = vector.shape_cast %44 : vector<128xf32> to vector<1x1x128xf32>
    %46 = vector.broadcast %45 : vector<1x1x128xf32> to vector<4x12x128xf32>
    %47 = arith.mulf %42, %46 : vector<4x12x128xf32>
    %48 = arith.addf %40, %47 : vector<4x12x128xf32>
    %c0_23 = arith.constant 0 : index
    %c1_24 = arith.constant 1 : index
    %c1_25 = arith.constant 1 : index
    %c0_26 = arith.constant 0 : index
    %49 = vector.load %arg3[%c0_23, %c1_24, %c1_25, %c0_26] : memref<1x16x16x128xf32, #tpu.memory_space<vmem>>, vector<1x4x12x128xf32>
    %50 = vector.shape_cast %49 : vector<1x4x12x128xf32> to vector<4x12x128xf32>
    %51 = vector.extract_strided_slice %1 {offsets = [1, 1, 0], sizes = [1, 1, 128], strides = [1, 1, 1]} : vector<5x5x128xf32> to vector<1x1x128xf32>
    %52 = vector.shape_cast %51 : vector<1x1x128xf32> to vector<128xf32>
    %53 = vector.shape_cast %52 : vector<128xf32> to vector<1x1x128xf32>
    %54 = vector.broadcast %53 : vector<1x1x128xf32> to vector<4x12x128xf32>
    %55 = arith.mulf %50, %54 : vector<4x12x128xf32>
    %56 = arith.addf %48, %55 : vector<4x12x128xf32>
    %c0_27 = arith.constant 0 : index
    %c1_28 = arith.constant 1 : index
    %c2_29 = arith.constant 2 : index
    %c0_30 = arith.constant 0 : index
    %57 = vector.load %arg3[%c0_27, %c1_28, %c2_29, %c0_30] : memref<1x16x16x128xf32, #tpu.memory_space<vmem>>, vector<1x4x12x128xf32>
    %58 = vector.shape_cast %57 : vector<1x4x12x128xf32> to vector<4x12x128xf32>
    %59 = vector.extract_strided_slice %1 {offsets = [1, 2, 0], sizes = [1, 1, 128], strides = [1, 1, 1]} : vector<5x5x128xf32> to vector<1x1x128xf32>
    %60 = vector.shape_cast %59 : vector<1x1x128xf32> to vector<128xf32>
    %61 = vector.shape_cast %60 : vector<128xf32> to vector<1x1x128xf32>
    %62 = vector.broadcast %61 : vector<1x1x128xf32> to vector<4x12x128xf32>
    %63 = arith.mulf %58, %62 : vector<4x12x128xf32>
    %64 = arith.addf %56, %63 : vector<4x12x128xf32>
    %c0_31 = arith.constant 0 : index
    %c1_32 = arith.constant 1 : index
    %c3_33 = arith.constant 3 : index
    %c0_34 = arith.constant 0 : index
    %65 = vector.load %arg3[%c0_31, %c1_32, %c3_33, %c0_34] : memref<1x16x16x128xf32, #tpu.memory_space<vmem>>, vector<1x4x12x128xf32>
    %66 = vector.shape_cast %65 : vector<1x4x12x128xf32> to vector<4x12x128xf32>
    %67 = vector.extract_strided_slice %1 {offsets = [1, 3, 0], sizes = [1, 1, 128], strides = [1, 1, 1]} : vector<5x5x128xf32> to vector<1x1x128xf32>
    %68 = vector.shape_cast %67 : vector<1x1x128xf32> to vector<128xf32>
    %69 = vector.shape_cast %68 : vector<128xf32> to vector<1x1x128xf32>
    %70 = vector.broadcast %69 : vector<1x1x128xf32> to vector<4x12x128xf32>
    %71 = arith.mulf %66, %70 : vector<4x12x128xf32>
    %72 = arith.addf %64, %71 : vector<4x12x128xf32>
    %c0_35 = arith.constant 0 : index
    %c1_36 = arith.constant 1 : index
    %c4_37 = arith.constant 4 : index
    %c0_38 = arith.constant 0 : index
    %73 = vector.load %arg3[%c0_35, %c1_36, %c4_37, %c0_38] : memref<1x16x16x128xf32, #tpu.memory_space<vmem>>, vector<1x4x12x128xf32>
    %74 = vector.shape_cast %73 : vector<1x4x12x128xf32> to vector<4x12x128xf32>
    %75 = vector.extract_strided_slice %1 {offsets = [1, 4, 0], sizes = [1, 1, 128], strides = [1, 1, 1]} : vector<5x5x128xf32> to vector<1x1x128xf32>
    %76 = vector.shape_cast %75 : vector<1x1x128xf32> to vector<128xf32>
    %77 = vector.shape_cast %76 : vector<128xf32> to vector<1x1x128xf32>
    %78 = vector.broadcast %77 : vector<1x1x128xf32> to vector<4x12x128xf32>
    %79 = arith.mulf %74, %78 : vector<4x12x128xf32>
    %80 = arith.addf %72, %79 : vector<4x12x128xf32>
    %c0_39 = arith.constant 0 : index
    %c2_40 = arith.constant 2 : index
    %c0_41 = arith.constant 0 : index
    %c0_42 = arith.constant 0 : index
    %81 = vector.load %arg3[%c0_39, %c2_40, %c0_41, %c0_42] : memref<1x16x16x128xf32, #tpu.memory_space<vmem>>, vector<1x4x12x128xf32>
    %82 = vector.shape_cast %81 : vector<1x4x12x128xf32> to vector<4x12x128xf32>
    %83 = vector.extract_strided_slice %1 {offsets = [2, 0, 0], sizes = [1, 1, 128], strides = [1, 1, 1]} : vector<5x5x128xf32> to vector<1x1x128xf32>
    %84 = vector.shape_cast %83 : vector<1x1x128xf32> to vector<128xf32>
    %85 = vector.shape_cast %84 : vector<128xf32> to vector<1x1x128xf32>
    %86 = vector.broadcast %85 : vector<1x1x128xf32> to vector<4x12x128xf32>
    %87 = arith.mulf %82, %86 : vector<4x12x128xf32>
    %88 = arith.addf %80, %87 : vector<4x12x128xf32>
    %c0_43 = arith.constant 0 : index
    %c2_44 = arith.constant 2 : index
    %c1_45 = arith.constant 1 : index
    %c0_46 = arith.constant 0 : index
    %89 = vector.load %arg3[%c0_43, %c2_44, %c1_45, %c0_46] : memref<1x16x16x128xf32, #tpu.memory_space<vmem>>, vector<1x4x12x128xf32>
    %90 = vector.shape_cast %89 : vector<1x4x12x128xf32> to vector<4x12x128xf32>
    %91 = vector.extract_strided_slice %1 {offsets = [2, 1, 0], sizes = [1, 1, 128], strides = [1, 1, 1]} : vector<5x5x128xf32> to vector<1x1x128xf32>
    %92 = vector.shape_cast %91 : vector<1x1x128xf32> to vector<128xf32>
    %93 = vector.shape_cast %92 : vector<128xf32> to vector<1x1x128xf32>
    %94 = vector.broadcast %93 : vector<1x1x128xf32> to vector<4x12x128xf32>
    %95 = arith.mulf %90, %94 : vector<4x12x128xf32>
    %96 = arith.addf %88, %95 : vector<4x12x128xf32>
    %c0_47 = arith.constant 0 : index
    %c2_48 = arith.constant 2 : index
    %c2_49 = arith.constant 2 : index
    %c0_50 = arith.constant 0 : index
    %97 = vector.load %arg3[%c0_47, %c2_48, %c2_49, %c0_50] : memref<1x16x16x128xf32, #tpu.memory_space<vmem>>, vector<1x4x12x128xf32>
    %98 = vector.shape_cast %97 : vector<1x4x12x128xf32> to vector<4x12x128xf32>
    %99 = vector.extract_strided_slice %1 {offsets = [2, 2, 0], sizes = [1, 1, 128], strides = [1, 1, 1]} : vector<5x5x128xf32> to vector<1x1x128xf32>
    %100 = vector.shape_cast %99 : vector<1x1x128xf32> to vector<128xf32>
    %101 = vector.shape_cast %100 : vector<128xf32> to vector<1x1x128xf32>
    %102 = vector.broadcast %101 : vector<1x1x128xf32> to vector<4x12x128xf32>
    %103 = arith.mulf %98, %102 : vector<4x12x128xf32>
    %104 = arith.addf %96, %103 : vector<4x12x128xf32>
    %c0_51 = arith.constant 0 : index
    %c2_52 = arith.constant 2 : index
    %c3_53 = arith.constant 3 : index
    %c0_54 = arith.constant 0 : index
    %105 = vector.load %arg3[%c0_51, %c2_52, %c3_53, %c0_54] : memref<1x16x16x128xf32, #tpu.memory_space<vmem>>, vector<1x4x12x128xf32>
    %106 = vector.shape_cast %105 : vector<1x4x12x128xf32> to vector<4x12x128xf32>
    %107 = vector.extract_strided_slice %1 {offsets = [2, 3, 0], sizes = [1, 1, 128], strides = [1, 1, 1]} : vector<5x5x128xf32> to vector<1x1x128xf32>
    %108 = vector.shape_cast %107 : vector<1x1x128xf32> to vector<128xf32>
    %109 = vector.shape_cast %108 : vector<128xf32> to vector<1x1x128xf32>
    %110 = vector.broadcast %109 : vector<1x1x128xf32> to vector<4x12x128xf32>
    %111 = arith.mulf %106, %110 : vector<4x12x128xf32>
    %112 = arith.addf %104, %111 : vector<4x12x128xf32>
    %c0_55 = arith.constant 0 : index
    %c2_56 = arith.constant 2 : index
    %c4_57 = arith.constant 4 : index
    %c0_58 = arith.constant 0 : index
    %113 = vector.load %arg3[%c0_55, %c2_56, %c4_57, %c0_58] : memref<1x16x16x128xf32, #tpu.memory_space<vmem>>, vector<1x4x12x128xf32>
    %114 = vector.shape_cast %113 : vector<1x4x12x128xf32> to vector<4x12x128xf32>
    %115 = vector.extract_strided_slice %1 {offsets = [2, 4, 0], sizes = [1, 1, 128], strides = [1, 1, 1]} : vector<5x5x128xf32> to vector<1x1x128xf32>
    %116 = vector.shape_cast %115 : vector<1x1x128xf32> to vector<128xf32>
    %117 = vector.shape_cast %116 : vector<128xf32> to vector<1x1x128xf32>
    %118 = vector.broadcast %117 : vector<1x1x128xf32> to vector<4x12x128xf32>
    %119 = arith.mulf %114, %118 : vector<4x12x128xf32>
    %120 = arith.addf %112, %119 : vector<4x12x128xf32>
    %c0_59 = arith.constant 0 : index
    %c3_60 = arith.constant 3 : index
    %c0_61 = arith.constant 0 : index
    %c0_62 = arith.constant 0 : index
    %121 = vector.load %arg3[%c0_59, %c3_60, %c0_61, %c0_62] : memref<1x16x16x128xf32, #tpu.memory_space<vmem>>, vector<1x4x12x128xf32>
    %122 = vector.shape_cast %121 : vector<1x4x12x128xf32> to vector<4x12x128xf32>
    %123 = vector.extract_strided_slice %1 {offsets = [3, 0, 0], sizes = [1, 1, 128], strides = [1, 1, 1]} : vector<5x5x128xf32> to vector<1x1x128xf32>
    %124 = vector.shape_cast %123 : vector<1x1x128xf32> to vector<128xf32>
    %125 = vector.shape_cast %124 : vector<128xf32> to vector<1x1x128xf32>
    %126 = vector.broadcast %125 : vector<1x1x128xf32> to vector<4x12x128xf32>
    %127 = arith.mulf %122, %126 : vector<4x12x128xf32>
    %128 = arith.addf %120, %127 : vector<4x12x128xf32>
    %c0_63 = arith.constant 0 : index
    %c3_64 = arith.constant 3 : index
    %c1_65 = arith.constant 1 : index
    %c0_66 = arith.constant 0 : index
    %129 = vector.load %arg3[%c0_63, %c3_64, %c1_65, %c0_66] : memref<1x16x16x128xf32, #tpu.memory_space<vmem>>, vector<1x4x12x128xf32>
    %130 = vector.shape_cast %129 : vector<1x4x12x128xf32> to vector<4x12x128xf32>
    %131 = vector.extract_strided_slice %1 {offsets = [3, 1, 0], sizes = [1, 1, 128], strides = [1, 1, 1]} : vector<5x5x128xf32> to vector<1x1x128xf32>
    %132 = vector.shape_cast %131 : vector<1x1x128xf32> to vector<128xf32>
    %133 = vector.shape_cast %132 : vector<128xf32> to vector<1x1x128xf32>
    %134 = vector.broadcast %133 : vector<1x1x128xf32> to vector<4x12x128xf32>
    %135 = arith.mulf %130, %134 : vector<4x12x128xf32>
    %136 = arith.addf %128, %135 : vector<4x12x128xf32>
    %c0_67 = arith.constant 0 : index
    %c3_68 = arith.constant 3 : index
    %c2_69 = arith.constant 2 : index
    %c0_70 = arith.constant 0 : index
    %137 = vector.load %arg3[%c0_67, %c3_68, %c2_69, %c0_70] : memref<1x16x16x128xf32, #tpu.memory_space<vmem>>, vector<1x4x12x128xf32>
    %138 = vector.shape_cast %137 : vector<1x4x12x128xf32> to vector<4x12x128xf32>
    %139 = vector.extract_strided_slice %1 {offsets = [3, 2, 0], sizes = [1, 1, 128], strides = [1, 1, 1]} : vector<5x5x128xf32> to vector<1x1x128xf32>
    %140 = vector.shape_cast %139 : vector<1x1x128xf32> to vector<128xf32>
    %141 = vector.shape_cast %140 : vector<128xf32> to vector<1x1x128xf32>
    %142 = vector.broadcast %141 : vector<1x1x128xf32> to vector<4x12x128xf32>
    %143 = arith.mulf %138, %142 : vector<4x12x128xf32>
    %144 = arith.addf %136, %143 : vector<4x12x128xf32>
    %c0_71 = arith.constant 0 : index
    %c3_72 = arith.constant 3 : index
    %c3_73 = arith.constant 3 : index
    %c0_74 = arith.constant 0 : index
    %145 = vector.load %arg3[%c0_71, %c3_72, %c3_73, %c0_74] : memref<1x16x16x128xf32, #tpu.memory_space<vmem>>, vector<1x4x12x128xf32>
    %146 = vector.shape_cast %145 : vector<1x4x12x128xf32> to vector<4x12x128xf32>
    %147 = vector.extract_strided_slice %1 {offsets = [3, 3, 0], sizes = [1, 1, 128], strides = [1, 1, 1]} : vector<5x5x128xf32> to vector<1x1x128xf32>
    %148 = vector.shape_cast %147 : vector<1x1x128xf32> to vector<128xf32>
    %149 = vector.shape_cast %148 : vector<128xf32> to vector<1x1x128xf32>
    %150 = vector.broadcast %149 : vector<1x1x128xf32> to vector<4x12x128xf32>
    %151 = arith.mulf %146, %150 : vector<4x12x128xf32>
    %152 = arith.addf %144, %151 : vector<4x12x128xf32>
    %c0_75 = arith.constant 0 : index
    %c3_76 = arith.constant 3 : index
    %c4_77 = arith.constant 4 : index
    %c0_78 = arith.constant 0 : index
    %153 = vector.load %arg3[%c0_75, %c3_76, %c4_77, %c0_78] : memref<1x16x16x128xf32, #tpu.memory_space<vmem>>, vector<1x4x12x128xf32>
    %154 = vector.shape_cast %153 : vector<1x4x12x128xf32> to vector<4x12x128xf32>
    %155 = vector.extract_strided_slice %1 {offsets = [3, 4, 0], sizes = [1, 1, 128], strides = [1, 1, 1]} : vector<5x5x128xf32> to vector<1x1x128xf32>
    %156 = vector.shape_cast %155 : vector<1x1x128xf32> to vector<128xf32>
    %157 = vector.shape_cast %156 : vector<128xf32> to vector<1x1x128xf32>
    %158 = vector.broadcast %157 : vector<1x1x128xf32> to vector<4x12x128xf32>
    %159 = arith.mulf %154, %158 : vector<4x12x128xf32>
    %160 = arith.addf %152, %159 : vector<4x12x128xf32>
    %c0_79 = arith.constant 0 : index
    %c4_80 = arith.constant 4 : index
    %c0_81 = arith.constant 0 : index
    %c0_82 = arith.constant 0 : index
    %161 = vector.load %arg3[%c0_79, %c4_80, %c0_81, %c0_82] : memref<1x16x16x128xf32, #tpu.memory_space<vmem>>, vector<1x4x12x128xf32>
    %162 = vector.shape_cast %161 : vector<1x4x12x128xf32> to vector<4x12x128xf32>
    %163 = vector.extract_strided_slice %1 {offsets = [4, 0, 0], sizes = [1, 1, 128], strides = [1, 1, 1]} : vector<5x5x128xf32> to vector<1x1x128xf32>
    %164 = vector.shape_cast %163 : vector<1x1x128xf32> to vector<128xf32>
    %165 = vector.shape_cast %164 : vector<128xf32> to vector<1x1x128xf32>
    %166 = vector.broadcast %165 : vector<1x1x128xf32> to vector<4x12x128xf32>
    %167 = arith.mulf %162, %166 : vector<4x12x128xf32>
    %168 = arith.addf %160, %167 : vector<4x12x128xf32>
    %c0_83 = arith.constant 0 : index
    %c4_84 = arith.constant 4 : index
    %c1_85 = arith.constant 1 : index
    %c0_86 = arith.constant 0 : index
    %169 = vector.load %arg3[%c0_83, %c4_84, %c1_85, %c0_86] : memref<1x16x16x128xf32, #tpu.memory_space<vmem>>, vector<1x4x12x128xf32>
    %170 = vector.shape_cast %169 : vector<1x4x12x128xf32> to vector<4x12x128xf32>
    %171 = vector.extract_strided_slice %1 {offsets = [4, 1, 0], sizes = [1, 1, 128], strides = [1, 1, 1]} : vector<5x5x128xf32> to vector<1x1x128xf32>
    %172 = vector.shape_cast %171 : vector<1x1x128xf32> to vector<128xf32>
    %173 = vector.shape_cast %172 : vector<128xf32> to vector<1x1x128xf32>
    %174 = vector.broadcast %173 : vector<1x1x128xf32> to vector<4x12x128xf32>
    %175 = arith.mulf %170, %174 : vector<4x12x128xf32>
    %176 = arith.addf %168, %175 : vector<4x12x128xf32>
    %c0_87 = arith.constant 0 : index
    %c4_88 = arith.constant 4 : index
    %c2_89 = arith.constant 2 : index
    %c0_90 = arith.constant 0 : index
    %177 = vector.load %arg3[%c0_87, %c4_88, %c2_89, %c0_90] : memref<1x16x16x128xf32, #tpu.memory_space<vmem>>, vector<1x4x12x128xf32>
    %178 = vector.shape_cast %177 : vector<1x4x12x128xf32> to vector<4x12x128xf32>
    %179 = vector.extract_strided_slice %1 {offsets = [4, 2, 0], sizes = [1, 1, 128], strides = [1, 1, 1]} : vector<5x5x128xf32> to vector<1x1x128xf32>
    %180 = vector.shape_cast %179 : vector<1x1x128xf32> to vector<128xf32>
    %181 = vector.shape_cast %180 : vector<128xf32> to vector<1x1x128xf32>
    %182 = vector.broadcast %181 : vector<1x1x128xf32> to vector<4x12x128xf32>
    %183 = arith.mulf %178, %182 : vector<4x12x128xf32>
    %184 = arith.addf %176, %183 : vector<4x12x128xf32>
    %c0_91 = arith.constant 0 : index
    %c4_92 = arith.constant 4 : index
    %c3_93 = arith.constant 3 : index
    %c0_94 = arith.constant 0 : index
    %185 = vector.load %arg3[%c0_91, %c4_92, %c3_93, %c0_94] : memref<1x16x16x128xf32, #tpu.memory_space<vmem>>, vector<1x4x12x128xf32>
    %186 = vector.shape_cast %185 : vector<1x4x12x128xf32> to vector<4x12x128xf32>
    %187 = vector.extract_strided_slice %1 {offsets = [4, 3, 0], sizes = [1, 1, 128], strides = [1, 1, 1]} : vector<5x5x128xf32> to vector<1x1x128xf32>
    %188 = vector.shape_cast %187 : vector<1x1x128xf32> to vector<128xf32>
    %189 = vector.shape_cast %188 : vector<128xf32> to vector<1x1x128xf32>
    %190 = vector.broadcast %189 : vector<1x1x128xf32> to vector<4x12x128xf32>
    %191 = arith.mulf %186, %190 : vector<4x12x128xf32>
    %192 = arith.addf %184, %191 : vector<4x12x128xf32>
    %c0_95 = arith.constant 0 : index
    %c4_96 = arith.constant 4 : index
    %c4_97 = arith.constant 4 : index
    %c0_98 = arith.constant 0 : index
    %193 = vector.load %arg3[%c0_95, %c4_96, %c4_97, %c0_98] : memref<1x16x16x128xf32, #tpu.memory_space<vmem>>, vector<1x4x12x128xf32>
    %194 = vector.shape_cast %193 : vector<1x4x12x128xf32> to vector<4x12x128xf32>
    %195 = vector.extract_strided_slice %1 {offsets = [4, 4, 0], sizes = [1, 1, 128], strides = [1, 1, 1]} : vector<5x5x128xf32> to vector<1x1x128xf32>
    %196 = vector.shape_cast %195 : vector<1x1x128xf32> to vector<128xf32>
    %197 = vector.shape_cast %196 : vector<128xf32> to vector<1x1x128xf32>
    %198 = vector.broadcast %197 : vector<1x1x128xf32> to vector<4x12x128xf32>
    %199 = arith.mulf %194, %198 : vector<4x12x128xf32>
    %200 = arith.addf %192, %199 : vector<4x12x128xf32>
    %c0_99 = arith.constant 0 : index
    %c0_100 = arith.constant 0 : index
    %c0_101 = arith.constant 0 : index
    %c0_102 = arith.constant 0 : index
    %201 = vector.load %arg4[%c0_99, %c0_100, %c0_101, %c0_102] : memref<1x12x12x128xf32, #tpu.memory_space<vmem>>, vector<1x4x12x128xf32>
    %202 = vector.shape_cast %201 : vector<1x4x12x128xf32> to vector<4x12x128xf32>
    %203 = vector.shape_cast %200 : vector<4x12x128xf32> to vector<1x4x12x128xf32>
    tpu.vector_store %arg4[%c0_99, %c0_100, %c0_101, %c0_102], %203 {strides = array<i32>} : memref<1x12x12x128xf32, #tpu.memory_space<vmem>>, vector<1x4x12x128xf32>,
    %c0_103 = arith.constant 0 : index
    %c4_104 = arith.constant 4 : index
    %c0_105 = arith.constant 0 : index
    %c0_106 = arith.constant 0 : index
    %204 = vector.load %arg3[%c0_103, %c4_104, %c0_105, %c0_106] : memref<1x16x16x128xf32, #tpu.memory_space<vmem>>, vector<1x4x12x128xf32>
    %205 = vector.shape_cast %204 : vector<1x4x12x128xf32> to vector<4x12x128xf32>
    %206 = vector.extract_strided_slice %1 {offsets = [0, 0, 0], sizes = [1, 1, 128], strides = [1, 1, 1]} : vector<5x5x128xf32> to vector<1x1x128xf32>
    %207 = vector.shape_cast %206 : vector<1x1x128xf32> to vector<128xf32>
    %208 = vector.shape_cast %207 : vector<128xf32> to vector<1x1x128xf32>
    %209 = vector.broadcast %208 : vector<1x1x128xf32> to vector<4x12x128xf32>
    %210 = arith.mulf %205, %209 : vector<4x12x128xf32>
    %c0_107 = arith.constant 0 : index
    %c4_108 = arith.constant 4 : index
    %c1_109 = arith.constant 1 : index
    %c0_110 = arith.constant 0 : index
    %211 = vector.load %arg3[%c0_107, %c4_108, %c1_109, %c0_110] : memref<1x16x16x128xf32, #tpu.memory_space<vmem>>, vector<1x4x12x128xf32>
    %212 = vector.shape_cast %211 : vector<1x4x12x128xf32> to vector<4x12x128xf32>
    %213 = vector.extract_strided_slice %1 {offsets = [0, 1, 0], sizes = [1, 1, 128], strides = [1, 1, 1]} : vector<5x5x128xf32> to vector<1x1x128xf32>
    %214 = vector.shape_cast %213 : vector<1x1x128xf32> to vector<128xf32>
    %215 = vector.shape_cast %214 : vector<128xf32> to vector<1x1x128xf32>
    %216 = vector.broadcast %215 : vector<1x1x128xf32> to vector<4x12x128xf32>
    %217 = arith.mulf %212, %216 : vector<4x12x128xf32>
    %218 = arith.addf %210, %217 : vector<4x12x128xf32>
    %c0_111 = arith.constant 0 : index
    %c4_112 = arith.constant 4 : index
    %c2_113 = arith.constant 2 : index
    %c0_114 = arith.constant 0 : index
    %219 = vector.load %arg3[%c0_111, %c4_112, %c2_113, %c0_114] : memref<1x16x16x128xf32, #tpu.memory_space<vmem>>, vector<1x4x12x128xf32>
    %220 = vector.shape_cast %219 : vector<1x4x12x128xf32> to vector<4x12x128xf32>
    %221 = vector.extract_strided_slice %1 {offsets = [0, 2, 0], sizes = [1, 1, 128], strides = [1, 1, 1]} : vector<5x5x128xf32> to vector<1x1x128xf32>
    %222 = vector.shape_cast %221 : vector<1x1x128xf32> to vector<128xf32>
    %223 = vector.shape_cast %222 : vector<128xf32> to vector<1x1x128xf32>
    %224 = vector.broadcast %223 : vector<1x1x128xf32> to vector<4x12x128xf32>
    %225 = arith.mulf %220, %224 : vector<4x12x128xf32>
    %226 = arith.addf %218, %225 : vector<4x12x128xf32>
    %c0_115 = arith.constant 0 : index
    %c4_116 = arith.constant 4 : index
    %c3_117 = arith.constant 3 : index
    %c0_118 = arith.constant 0 : index
    %227 = vector.load %arg3[%c0_115, %c4_116, %c3_117, %c0_118] : memref<1x16x16x128xf32, #tpu.memory_space<vmem>>, vector<1x4x12x128xf32>
    %228 = vector.shape_cast %227 : vector<1x4x12x128xf32> to vector<4x12x128xf32>
    %229 = vector.extract_strided_slice %1 {offsets = [0, 3, 0], sizes = [1, 1, 128], strides = [1, 1, 1]} : vector<5x5x128xf32> to vector<1x1x128xf32>
    %230 = vector.shape_cast %229 : vector<1x1x128xf32> to vector<128xf32>
    %231 = vector.shape_cast %230 : vector<128xf32> to vector<1x1x128xf32>
    %232 = vector.broadcast %231 : vector<1x1x128xf32> to vector<4x12x128xf32>
    %233 = arith.mulf %228, %232 : vector<4x12x128xf32>
    %234 = arith.addf %226, %233 : vector<4x12x128xf32>
    %c0_119 = arith.constant 0 : index
    %c4_120 = arith.constant 4 : index
    %c4_121 = arith.constant 4 : index
    %c0_122 = arith.constant 0 : index
    %235 = vector.load %arg3[%c0_119, %c4_120, %c4_121, %c0_122] : memref<1x16x16x128xf32, #tpu.memory_space<vmem>>, vector<1x4x12x128xf32>
    %236 = vector.shape_cast %235 : vector<1x4x12x128xf32> to vector<4x12x128xf32>
    %237 = vector.extract_strided_slice %1 {offsets = [0, 4, 0], sizes = [1, 1, 128], strides = [1, 1, 1]} : vector<5x5x128xf32> to vector<1x1x128xf32>
    %238 = vector.shape_cast %237 : vector<1x1x128xf32> to vector<128xf32>
    %239 = vector.shape_cast %238 : vector<128xf32> to vector<1x1x128xf32>
    %240 = vector.broadcast %239 : vector<1x1x128xf32> to vector<4x12x128xf32>
    %241 = arith.mulf %236, %240 : vector<4x12x128xf32>
    %242 = arith.addf %234, %241 : vector<4x12x128xf32>
    %c0_123 = arith.constant 0 : index
    %c5 = arith.constant 5 : index
    %c0_124 = arith.constant 0 : index
    %c0_125 = arith.constant 0 : index
    %243 = vector.load %arg3[%c0_123, %c5, %c0_124, %c0_125] : memref<1x16x16x128xf32, #tpu.memory_space<vmem>>, vector<1x4x12x128xf32>
    %244 = vector.shape_cast %243 : vector<1x4x12x128xf32> to vector<4x12x128xf32>
    %245 = vector.extract_strided_slice %1 {offsets = [1, 0, 0], sizes = [1, 1, 128], strides = [1, 1, 1]} : vector<5x5x128xf32> to vector<1x1x128xf32>
    %246 = vector.shape_cast %245 : vector<1x1x128xf32> to vector<128xf32>
    %247 = vector.shape_cast %246 : vector<128xf32> to vector<1x1x128xf32>
    %248 = vector.broadcast %247 : vector<1x1x128xf32> to vector<4x12x128xf32>
    %249 = arith.mulf %244, %248 : vector<4x12x128xf32>
    %250 = arith.addf %242, %249 : vector<4x12x128xf32>
    %c0_126 = arith.constant 0 : index
    %c5_127 = arith.constant 5 : index
    %c1_128 = arith.constant 1 : index
    %c0_129 = arith.constant 0 : index
    %251 = vector.load %arg3[%c0_126, %c5_127, %c1_128, %c0_129] : memref<1x16x16x128xf32, #tpu.memory_space<vmem>>, vector<1x4x12x128xf32>
    %252 = vector.shape_cast %251 : vector<1x4x12x128xf32> to vector<4x12x128xf32>
    %253 = vector.extract_strided_slice %1 {offsets = [1, 1, 0], sizes = [1, 1, 128], strides = [1, 1, 1]} : vector<5x5x128xf32> to vector<1x1x128xf32>
    %254 = vector.shape_cast %253 : vector<1x1x128xf32> to vector<128xf32>
    %255 = vector.shape_cast %254 : vector<128xf32> to vector<1x1x128xf32>
    %256 = vector.broadcast %255 : vector<1x1x128xf32> to vector<4x12x128xf32>
    %257 = arith.mulf %252, %256 : vector<4x12x128xf32>
    %258 = arith.addf %250, %257 : vector<4x12x128xf32>
    %c0_130 = arith.constant 0 : index
    %c5_131 = arith.constant 5 : index
    %c2_132 = arith.constant 2 : index
    %c0_133 = arith.constant 0 : index
    %259 = vector.load %arg3[%c0_130, %c5_131, %c2_132, %c0_133] : memref<1x16x16x128xf32, #tpu.memory_space<vmem>>, vector<1x4x12x128xf32>
    %260 = vector.shape_cast %259 : vector<1x4x12x128xf32> to vector<4x12x128xf32>
    %261 = vector.extract_strided_slice %1 {offsets = [1, 2, 0], sizes = [1, 1, 128], strides = [1, 1, 1]} : vector<5x5x128xf32> to vector<1x1x128xf32>
    %262 = vector.shape_cast %261 : vector<1x1x128xf32> to vector<128xf32>
    %263 = vector.shape_cast %262 : vector<128xf32> to vector<1x1x128xf32>
    %264 = vector.broadcast %263 : vector<1x1x128xf32> to vector<4x12x128xf32>
    %265 = arith.mulf %260, %264 : vector<4x12x128xf32>
    %266 = arith.addf %258, %265 : vector<4x12x128xf32>
    %c0_134 = arith.constant 0 : index
    %c5_135 = arith.constant 5 : index
    %c3_136 = arith.constant 3 : index
    %c0_137 = arith.constant 0 : index
    %267 = vector.load %arg3[%c0_134, %c5_135, %c3_136, %c0_137] : memref<1x16x16x128xf32, #tpu.memory_space<vmem>>, vector<1x4x12x128xf32>
    %268 = vector.shape_cast %267 : vector<1x4x12x128xf32> to vector<4x12x128xf32>
    %269 = vector.extract_strided_slice %1 {offsets = [1, 3, 0], sizes = [1, 1, 128], strides = [1, 1, 1]} : vector<5x5x128xf32> to vector<1x1x128xf32>
    %270 = vector.shape_cast %269 : vector<1x1x128xf32> to vector<128xf32>
    %271 = vector.shape_cast %270 : vector<128xf32> to vector<1x1x128xf32>
    %272 = vector.broadcast %271 : vector<1x1x128xf32> to vector<4x12x128xf32>
    %273 = arith.mulf %268, %272 : vector<4x12x128xf32>
    %274 = arith.addf %266, %273 : vector<4x12x128xf32>
    %c0_138 = arith.constant 0 : index
    %c5_139 = arith.constant 5 : index
    %c4_140 = arith.constant 4 : index
    %c0_141 = arith.constant 0 : index
    %275 = vector.load %arg3[%c0_138, %c5_139, %c4_140, %c0_141] : memref<1x16x16x128xf32, #tpu.memory_space<vmem>>, vector<1x4x12x128xf32>
    %276 = vector.shape_cast %275 : vector<1x4x12x128xf32> to vector<4x12x128xf32>
    %277 = vector.extract_strided_slice %1 {offsets = [1, 4, 0], sizes = [1, 1, 128], strides = [1, 1, 1]} : vector<5x5x128xf32> to vector<1x1x128xf32>
    %278 = vector.shape_cast %277 : vector<1x1x128xf32> to vector<128xf32>
    %279 = vector.shape_cast %278 : vector<128xf32> to vector<1x1x128xf32>
    %280 = vector.broadcast %279 : vector<1x1x128xf32> to vector<4x12x128xf32>
    %281 = arith.mulf %276, %280 : vector<4x12x128xf32>
    %282 = arith.addf %274, %281 : vector<4x12x128xf32>
    %c0_142 = arith.constant 0 : index
    %c6 = arith.constant 6 : index
    %c0_143 = arith.constant 0 : index
    %c0_144 = arith.constant 0 : index
    %283 = vector.load %arg3[%c0_142, %c6, %c0_143, %c0_144] : memref<1x16x16x128xf32, #tpu.memory_space<vmem>>, vector<1x4x12x128xf32>
    %284 = vector.shape_cast %283 : vector<1x4x12x128xf32> to vector<4x12x128xf32>
    %285 = vector.extract_strided_slice %1 {offsets = [2, 0, 0], sizes = [1, 1, 128], strides = [1, 1, 1]} : vector<5x5x128xf32> to vector<1x1x128xf32>
    %286 = vector.shape_cast %285 : vector<1x1x128xf32> to vector<128xf32>
    %287 = vector.shape_cast %286 : vector<128xf32> to vector<1x1x128xf32>
    %288 = vector.broadcast %287 : vector<1x1x128xf32> to vector<4x12x128xf32>
    %289 = arith.mulf %284, %288 : vector<4x12x128xf32>
    %290 = arith.addf %282, %289 : vector<4x12x128xf32>
    %c0_145 = arith.constant 0 : index
    %c6_146 = arith.constant 6 : index
    %c1_147 = arith.constant 1 : index
    %c0_148 = arith.constant 0 : index
    %291 = vector.load %arg3[%c0_145, %c6_146, %c1_147, %c0_148] : memref<1x16x16x128xf32, #tpu.memory_space<vmem>>, vector<1x4x12x128xf32>
    %292 = vector.shape_cast %291 : vector<1x4x12x128xf32> to vector<4x12x128xf32>
    %293 = vector.extract_strided_slice %1 {offsets = [2, 1, 0], sizes = [1, 1, 128], strides = [1, 1, 1]} : vector<5x5x128xf32> to vector<1x1x128xf32>
    %294 = vector.shape_cast %293 : vector<1x1x128xf32> to vector<128xf32>
    %295 = vector.shape_cast %294 : vector<128xf32> to vector<1x1x128xf32>
    %296 = vector.broadcast %295 : vector<1x1x128xf32> to vector<4x12x128xf32>
    %297 = arith.mulf %292, %296 : vector<4x12x128xf32>
    %298 = arith.addf %290, %297 : vector<4x12x128xf32>
    %c0_149 = arith.constant 0 : index
    %c6_150 = arith.constant 6 : index
    %c2_151 = arith.constant 2 : index
    %c0_152 = arith.constant 0 : index
    %299 = vector.load %arg3[%c0_149, %c6_150, %c2_151, %c0_152] : memref<1x16x16x128xf32, #tpu.memory_space<vmem>>, vector<1x4x12x128xf32>
    %300 = vector.shape_cast %299 : vector<1x4x12x128xf32> to vector<4x12x128xf32>
    %301 = vector.extract_strided_slice %1 {offsets = [2, 2, 0], sizes = [1, 1, 128], strides = [1, 1, 1]} : vector<5x5x128xf32> to vector<1x1x128xf32>
    %302 = vector.shape_cast %301 : vector<1x1x128xf32> to vector<128xf32>
    %303 = vector.shape_cast %302 : vector<128xf32> to vector<1x1x128xf32>
    %304 = vector.broadcast %303 : vector<1x1x128xf32> to vector<4x12x128xf32>
    %305 = arith.mulf %300, %304 : vector<4x12x128xf32>
    %306 = arith.addf %298, %305 : vector<4x12x128xf32>
    %c0_153 = arith.constant 0 : index
    %c6_154 = arith.constant 6 : index
    %c3_155 = arith.constant 3 : index
    %c0_156 = arith.constant 0 : index
    %307 = vector.load %arg3[%c0_153, %c6_154, %c3_155, %c0_156] : memref<1x16x16x128xf32, #tpu.memory_space<vmem>>, vector<1x4x12x128xf32>
    %308 = vector.shape_cast %307 : vector<1x4x12x128xf32> to vector<4x12x128xf32>
    %309 = vector.extract_strided_slice %1 {offsets = [2, 3, 0], sizes = [1, 1, 128], strides = [1, 1, 1]} : vector<5x5x128xf32> to vector<1x1x128xf32>
    %310 = vector.shape_cast %309 : vector<1x1x128xf32> to vector<128xf32>
    %311 = vector.shape_cast %310 : vector<128xf32> to vector<1x1x128xf32>
    %312 = vector.broadcast %311 : vector<1x1x128xf32> to vector<4x12x128xf32>
    %313 = arith.mulf %308, %312 : vector<4x12x128xf32>
    %314 = arith.addf %306, %313 : vector<4x12x128xf32>
    %c0_157 = arith.constant 0 : index
    %c6_158 = arith.constant 6 : index
    %c4_159 = arith.constant 4 : index
    %c0_160 = arith.constant 0 : index
    %315 = vector.load %arg3[%c0_157, %c6_158, %c4_159, %c0_160] : memref<1x16x16x128xf32, #tpu.memory_space<vmem>>, vector<1x4x12x128xf32>
    %316 = vector.shape_cast %315 : vector<1x4x12x128xf32> to vector<4x12x128xf32>
    %317 = vector.extract_strided_slice %1 {offsets = [2, 4, 0], sizes = [1, 1, 128], strides = [1, 1, 1]} : vector<5x5x128xf32> to vector<1x1x128xf32>
    %318 = vector.shape_cast %317 : vector<1x1x128xf32> to vector<128xf32>
    %319 = vector.shape_cast %318 : vector<128xf32> to vector<1x1x128xf32>
    %320 = vector.broadcast %319 : vector<1x1x128xf32> to vector<4x12x128xf32>
    %321 = arith.mulf %316, %320 : vector<4x12x128xf32>
    %322 = arith.addf %314, %321 : vector<4x12x128xf32>
    %c0_161 = arith.constant 0 : index
    %c7 = arith.constant 7 : index
    %c0_162 = arith.constant 0 : index
    %c0_163 = arith.constant 0 : index
    %323 = vector.load %arg3[%c0_161, %c7, %c0_162, %c0_163] : memref<1x16x16x128xf32, #tpu.memory_space<vmem>>, vector<1x4x12x128xf32>
    %324 = vector.shape_cast %323 : vector<1x4x12x128xf32> to vector<4x12x128xf32>
    %325 = vector.extract_strided_slice %1 {offsets = [3, 0, 0], sizes = [1, 1, 128], strides = [1, 1, 1]} : vector<5x5x128xf32> to vector<1x1x128xf32>
    %326 = vector.shape_cast %325 : vector<1x1x128xf32> to vector<128xf32>
    %327 = vector.shape_cast %326 : vector<128xf32> to vector<1x1x128xf32>
    %328 = vector.broadcast %327 : vector<1x1x128xf32> to vector<4x12x128xf32>
    %329 = arith.mulf %324, %328 : vector<4x12x128xf32>
    %330 = arith.addf %322, %329 : vector<4x12x128xf32>
    %c0_164 = arith.constant 0 : index
    %c7_165 = arith.constant 7 : index
    %c1_166 = arith.constant 1 : index
    %c0_167 = arith.constant 0 : index
    %331 = vector.load %arg3[%c0_164, %c7_165, %c1_166, %c0_167] : memref<1x16x16x128xf32, #tpu.memory_space<vmem>>, vector<1x4x12x128xf32>
    %332 = vector.shape_cast %331 : vector<1x4x12x128xf32> to vector<4x12x128xf32>
    %333 = vector.extract_strided_slice %1 {offsets = [3, 1, 0], sizes = [1, 1, 128], strides = [1, 1, 1]} : vector<5x5x128xf32> to vector<1x1x128xf32>
    %334 = vector.shape_cast %333 : vector<1x1x128xf32> to vector<128xf32>
    %335 = vector.shape_cast %334 : vector<128xf32> to vector<1x1x128xf32>
    %336 = vector.broadcast %335 : vector<1x1x128xf32> to vector<4x12x128xf32>
    %337 = arith.mulf %332, %336 : vector<4x12x128xf32>
    %338 = arith.addf %330, %337 : vector<4x12x128xf32>
    %c0_168 = arith.constant 0 : index
    %c7_169 = arith.constant 7 : index
    %c2_170 = arith.constant 2 : index
    %c0_171 = arith.constant 0 : index
    %339 = vector.load %arg3[%c0_168, %c7_169, %c2_170, %c0_171] : memref<1x16x16x128xf32, #tpu.memory_space<vmem>>, vector<1x4x12x128xf32>
    %340 = vector.shape_cast %339 : vector<1x4x12x128xf32> to vector<4x12x128xf32>
    %341 = vector.extract_strided_slice %1 {offsets = [3, 2, 0], sizes = [1, 1, 128], strides = [1, 1, 1]} : vector<5x5x128xf32> to vector<1x1x128xf32>
    %342 = vector.shape_cast %341 : vector<1x1x128xf32> to vector<128xf32>
    %343 = vector.shape_cast %342 : vector<128xf32> to vector<1x1x128xf32>
    %344 = vector.broadcast %343 : vector<1x1x128xf32> to vector<4x12x128xf32>
    %345 = arith.mulf %340, %344 : vector<4x12x128xf32>
    %346 = arith.addf %338, %345 : vector<4x12x128xf32>
    %c0_172 = arith.constant 0 : index
    %c7_173 = arith.constant 7 : index
    %c3_174 = arith.constant 3 : index
    %c0_175 = arith.constant 0 : index
    %347 = vector.load %arg3[%c0_172, %c7_173, %c3_174, %c0_175] : memref<1x16x16x128xf32, #tpu.memory_space<vmem>>, vector<1x4x12x128xf32>
    %348 = vector.shape_cast %347 : vector<1x4x12x128xf32> to vector<4x12x128xf32>
    %349 = vector.extract_strided_slice %1 {offsets = [3, 3, 0], sizes = [1, 1, 128], strides = [1, 1, 1]} : vector<5x5x128xf32> to vector<1x1x128xf32>
    %350 = vector.shape_cast %349 : vector<1x1x128xf32> to vector<128xf32>
    %351 = vector.shape_cast %350 : vector<128xf32> to vector<1x1x128xf32>
    %352 = vector.broadcast %351 : vector<1x1x128xf32> to vector<4x12x128xf32>
    %353 = arith.mulf %348, %352 : vector<4x12x128xf32>
    %354 = arith.addf %346, %353 : vector<4x12x128xf32>
    %c0_176 = arith.constant 0 : index
    %c7_177 = arith.constant 7 : index
    %c4_178 = arith.constant 4 : index
    %c0_179 = arith.constant 0 : index
    %355 = vector.load %arg3[%c0_176, %c7_177, %c4_178, %c0_179] : memref<1x16x16x128xf32, #tpu.memory_space<vmem>>, vector<1x4x12x128xf32>
    %356 = vector.shape_cast %355 : vector<1x4x12x128xf32> to vector<4x12x128xf32>
    %357 = vector.extract_strided_slice %1 {offsets = [3, 4, 0], sizes = [1, 1, 128], strides = [1, 1, 1]} : vector<5x5x128xf32> to vector<1x1x128xf32>
    %358 = vector.shape_cast %357 : vector<1x1x128xf32> to vector<128xf32>
    %359 = vector.shape_cast %358 : vector<128xf32> to vector<1x1x128xf32>
    %360 = vector.broadcast %359 : vector<1x1x128xf32> to vector<4x12x128xf32>
    %361 = arith.mulf %356, %360 : vector<4x12x128xf32>
    %362 = arith.addf %354, %361 : vector<4x12x128xf32>
    %c0_180 = arith.constant 0 : index
    %c8 = arith.constant 8 : index
    %c0_181 = arith.constant 0 : index
    %c0_182 = arith.constant 0 : index
    %363 = vector.load %arg3[%c0_180, %c8, %c0_181, %c0_182] : memref<1x16x16x128xf32, #tpu.memory_space<vmem>>, vector<1x4x12x128xf32>
    %364 = vector.shape_cast %363 : vector<1x4x12x128xf32> to vector<4x12x128xf32>
    %365 = vector.extract_strided_slice %1 {offsets = [4, 0, 0], sizes = [1, 1, 128], strides = [1, 1, 1]} : vector<5x5x128xf32> to vector<1x1x128xf32>
    %366 = vector.shape_cast %365 : vector<1x1x128xf32> to vector<128xf32>
    %367 = vector.shape_cast %366 : vector<128xf32> to vector<1x1x128xf32>
    %368 = vector.broadcast %367 : vector<1x1x128xf32> to vector<4x12x128xf32>
    %369 = arith.mulf %364, %368 : vector<4x12x128xf32>
    %370 = arith.addf %362, %369 : vector<4x12x128xf32>
    %c0_183 = arith.constant 0 : index
    %c8_184 = arith.constant 8 : index
    %c1_185 = arith.constant 1 : index
    %c0_186 = arith.constant 0 : index
    %371 = vector.load %arg3[%c0_183, %c8_184, %c1_185, %c0_186] : memref<1x16x16x128xf32, #tpu.memory_space<vmem>>, vector<1x4x12x128xf32>
    %372 = vector.shape_cast %371 : vector<1x4x12x128xf32> to vector<4x12x128xf32>
    %373 = vector.extract_strided_slice %1 {offsets = [4, 1, 0], sizes = [1, 1, 128], strides = [1, 1, 1]} : vector<5x5x128xf32> to vector<1x1x128xf32>
    %374 = vector.shape_cast %373 : vector<1x1x128xf32> to vector<128xf32>
    %375 = vector.shape_cast %374 : vector<128xf32> to vector<1x1x128xf32>
    %376 = vector.broadcast %375 : vector<1x1x128xf32> to vector<4x12x128xf32>
    %377 = arith.mulf %372, %376 : vector<4x12x128xf32>
    %378 = arith.addf %370, %377 : vector<4x12x128xf32>
    %c0_187 = arith.constant 0 : index
    %c8_188 = arith.constant 8 : index
    %c2_189 = arith.constant 2 : index
    %c0_190 = arith.constant 0 : index
    %379 = vector.load %arg3[%c0_187, %c8_188, %c2_189, %c0_190] : memref<1x16x16x128xf32, #tpu.memory_space<vmem>>, vector<1x4x12x128xf32>
    %380 = vector.shape_cast %379 : vector<1x4x12x128xf32> to vector<4x12x128xf32>
    %381 = vector.extract_strided_slice %1 {offsets = [4, 2, 0], sizes = [1, 1, 128], strides = [1, 1, 1]} : vector<5x5x128xf32> to vector<1x1x128xf32>
    %382 = vector.shape_cast %381 : vector<1x1x128xf32> to vector<128xf32>
    %383 = vector.shape_cast %382 : vector<128xf32> to vector<1x1x128xf32>
    %384 = vector.broadcast %383 : vector<1x1x128xf32> to vector<4x12x128xf32>
    %385 = arith.mulf %380, %384 : vector<4x12x128xf32>
    %386 = arith.addf %378, %385 : vector<4x12x128xf32>
    %c0_191 = arith.constant 0 : index
    %c8_192 = arith.constant 8 : index
    %c3_193 = arith.constant 3 : index
    %c0_194 = arith.constant 0 : index
    %387 = vector.load %arg3[%c0_191, %c8_192, %c3_193, %c0_194] : memref<1x16x16x128xf32, #tpu.memory_space<vmem>>, vector<1x4x12x128xf32>
    %388 = vector.shape_cast %387 : vector<1x4x12x128xf32> to vector<4x12x128xf32>
    %389 = vector.extract_strided_slice %1 {offsets = [4, 3, 0], sizes = [1, 1, 128], strides = [1, 1, 1]} : vector<5x5x128xf32> to vector<1x1x128xf32>
    %390 = vector.shape_cast %389 : vector<1x1x128xf32> to vector<128xf32>
    %391 = vector.shape_cast %390 : vector<128xf32> to vector<1x1x128xf32>
    %392 = vector.broadcast %391 : vector<1x1x128xf32> to vector<4x12x128xf32>
    %393 = arith.mulf %388, %392 : vector<4x12x128xf32>
    %394 = arith.addf %386, %393 : vector<4x12x128xf32>
    %c0_195 = arith.constant 0 : index
    %c8_196 = arith.constant 8 : index
    %c4_197 = arith.constant 4 : index
    %c0_198 = arith.constant 0 : index
    %395 = vector.load %arg3[%c0_195, %c8_196, %c4_197, %c0_198] : memref<1x16x16x128xf32, #tpu.memory_space<vmem>>, vector<1x4x12x128xf32>
    %396 = vector.shape_cast %395 : vector<1x4x12x128xf32> to vector<4x12x128xf32>
    %397 = vector.extract_strided_slice %1 {offsets = [4, 4, 0], sizes = [1, 1, 128], strides = [1, 1, 1]} : vector<5x5x128xf32> to vector<1x1x128xf32>
    %398 = vector.shape_cast %397 : vector<1x1x128xf32> to vector<128xf32>
    %399 = vector.shape_cast %398 : vector<128xf32> to vector<1x1x128xf32>
    %400 = vector.broadcast %399 : vector<1x1x128xf32> to vector<4x12x128xf32>
    %401 = arith.mulf %396, %400 : vector<4x12x128xf32>
    %402 = arith.addf %394, %401 : vector<4x12x128xf32>
    %c0_199 = arith.constant 0 : index
    %c4_200 = arith.constant 4 : index
    %c0_201 = arith.constant 0 : index
    %c0_202 = arith.constant 0 : index
    %403 = vector.load %arg4[%c0_199, %c4_200, %c0_201, %c0_202] : memref<1x12x12x128xf32, #tpu.memory_space<vmem>>, vector<1x4x12x128xf32>
    %404 = vector.shape_cast %403 : vector<1x4x12x128xf32> to vector<4x12x128xf32>
    %405 = vector.shape_cast %402 : vector<4x12x128xf32> to vector<1x4x12x128xf32>
    tpu.vector_store %arg4[%c0_199, %c4_200, %c0_201, %c0_202], %405 {strides = array<i32>} : memref<1x12x12x128xf32, #tpu.memory_space<vmem>>, vector<1x4x12x128xf32>,
    %c0_203 = arith.constant 0 : index
    %c8_204 = arith.constant 8 : index
    %c0_205 = arith.constant 0 : index
    %c0_206 = arith.constant 0 : index
    %406 = vector.load %arg3[%c0_203, %c8_204, %c0_205, %c0_206] : memref<1x16x16x128xf32, #tpu.memory_space<vmem>>, vector<1x4x12x128xf32>
    %407 = vector.shape_cast %406 : vector<1x4x12x128xf32> to vector<4x12x128xf32>
    %408 = vector.extract_strided_slice %1 {offsets = [0, 0, 0], sizes = [1, 1, 128], strides = [1, 1, 1]} : vector<5x5x128xf32> to vector<1x1x128xf32>
    %409 = vector.shape_cast %408 : vector<1x1x128xf32> to vector<128xf32>
    %410 = vector.shape_cast %409 : vector<128xf32> to vector<1x1x128xf32>
    %411 = vector.broadcast %410 : vector<1x1x128xf32> to vector<4x12x128xf32>
    %412 = arith.mulf %407, %411 : vector<4x12x128xf32>
    %c0_207 = arith.constant 0 : index
    %c8_208 = arith.constant 8 : index
    %c1_209 = arith.constant 1 : index
    %c0_210 = arith.constant 0 : index
    %413 = vector.load %arg3[%c0_207, %c8_208, %c1_209, %c0_210] : memref<1x16x16x128xf32, #tpu.memory_space<vmem>>, vector<1x4x12x128xf32>
    %414 = vector.shape_cast %413 : vector<1x4x12x128xf32> to vector<4x12x128xf32>
    %415 = vector.extract_strided_slice %1 {offsets = [0, 1, 0], sizes = [1, 1, 128], strides = [1, 1, 1]} : vector<5x5x128xf32> to vector<1x1x128xf32>
    %416 = vector.shape_cast %415 : vector<1x1x128xf32> to vector<128xf32>
    %417 = vector.shape_cast %416 : vector<128xf32> to vector<1x1x128xf32>
    %418 = vector.broadcast %417 : vector<1x1x128xf32> to vector<4x12x128xf32>
    %419 = arith.mulf %414, %418 : vector<4x12x128xf32>
    %420 = arith.addf %412, %419 : vector<4x12x128xf32>
    %c0_211 = arith.constant 0 : index
    %c8_212 = arith.constant 8 : index
    %c2_213 = arith.constant 2 : index
    %c0_214 = arith.constant 0 : index
    %421 = vector.load %arg3[%c0_211, %c8_212, %c2_213, %c0_214] : memref<1x16x16x128xf32, #tpu.memory_space<vmem>>, vector<1x4x12x128xf32>
    %422 = vector.shape_cast %421 : vector<1x4x12x128xf32> to vector<4x12x128xf32>
    %423 = vector.extract_strided_slice %1 {offsets = [0, 2, 0], sizes = [1, 1, 128], strides = [1, 1, 1]} : vector<5x5x128xf32> to vector<1x1x128xf32>
    %424 = vector.shape_cast %423 : vector<1x1x128xf32> to vector<128xf32>
    %425 = vector.shape_cast %424 : vector<128xf32> to vector<1x1x128xf32>
    %426 = vector.broadcast %425 : vector<1x1x128xf32> to vector<4x12x128xf32>
    %427 = arith.mulf %422, %426 : vector<4x12x128xf32>
    %428 = arith.addf %420, %427 : vector<4x12x128xf32>
    %c0_215 = arith.constant 0 : index
    %c8_216 = arith.constant 8 : index
    %c3_217 = arith.constant 3 : index
    %c0_218 = arith.constant 0 : index
    %429 = vector.load %arg3[%c0_215, %c8_216, %c3_217, %c0_218] : memref<1x16x16x128xf32, #tpu.memory_space<vmem>>, vector<1x4x12x128xf32>
    %430 = vector.shape_cast %429 : vector<1x4x12x128xf32> to vector<4x12x128xf32>
    %431 = vector.extract_strided_slice %1 {offsets = [0, 3, 0], sizes = [1, 1, 128], strides = [1, 1, 1]} : vector<5x5x128xf32> to vector<1x1x128xf32>
    %432 = vector.shape_cast %431 : vector<1x1x128xf32> to vector<128xf32>
    %433 = vector.shape_cast %432 : vector<128xf32> to vector<1x1x128xf32>
    %434 = vector.broadcast %433 : vector<1x1x128xf32> to vector<4x12x128xf32>
    %435 = arith.mulf %430, %434 : vector<4x12x128xf32>
    %436 = arith.addf %428, %435 : vector<4x12x128xf32>
    %c0_219 = arith.constant 0 : index
    %c8_220 = arith.constant 8 : index
    %c4_221 = arith.constant 4 : index
    %c0_222 = arith.constant 0 : index
    %437 = vector.load %arg3[%c0_219, %c8_220, %c4_221, %c0_222] : memref<1x16x16x128xf32, #tpu.memory_space<vmem>>, vector<1x4x12x128xf32>
    %438 = vector.shape_cast %437 : vector<1x4x12x128xf32> to vector<4x12x128xf32>
    %439 = vector.extract_strided_slice %1 {offsets = [0, 4, 0], sizes = [1, 1, 128], strides = [1, 1, 1]} : vector<5x5x128xf32> to vector<1x1x128xf32>
    %440 = vector.shape_cast %439 : vector<1x1x128xf32> to vector<128xf32>
    %441 = vector.shape_cast %440 : vector<128xf32> to vector<1x1x128xf32>
    %442 = vector.broadcast %441 : vector<1x1x128xf32> to vector<4x12x128xf32>
    %443 = arith.mulf %438, %442 : vector<4x12x128xf32>
    %444 = arith.addf %436, %443 : vector<4x12x128xf32>
    %c0_223 = arith.constant 0 : index
    %c9 = arith.constant 9 : index
    %c0_224 = arith.constant 0 : index
    %c0_225 = arith.constant 0 : index
    %445 = vector.load %arg3[%c0_223, %c9, %c0_224, %c0_225] : memref<1x16x16x128xf32, #tpu.memory_space<vmem>>, vector<1x4x12x128xf32>
    %446 = vector.shape_cast %445 : vector<1x4x12x128xf32> to vector<4x12x128xf32>
    %447 = vector.extract_strided_slice %1 {offsets = [1, 0, 0], sizes = [1, 1, 128], strides = [1, 1, 1]} : vector<5x5x128xf32> to vector<1x1x128xf32>
    %448 = vector.shape_cast %447 : vector<1x1x128xf32> to vector<128xf32>
    %449 = vector.shape_cast %448 : vector<128xf32> to vector<1x1x128xf32>
    %450 = vector.broadcast %449 : vector<1x1x128xf32> to vector<4x12x128xf32>
    %451 = arith.mulf %446, %450 : vector<4x12x128xf32>
    %452 = arith.addf %444, %451 : vector<4x12x128xf32>
    %c0_226 = arith.constant 0 : index
    %c9_227 = arith.constant 9 : index
    %c1_228 = arith.constant 1 : index
    %c0_229 = arith.constant 0 : index
    %453 = vector.load %arg3[%c0_226, %c9_227, %c1_228, %c0_229] : memref<1x16x16x128xf32, #tpu.memory_space<vmem>>, vector<1x4x12x128xf32>
    %454 = vector.shape_cast %453 : vector<1x4x12x128xf32> to vector<4x12x128xf32>
    %455 = vector.extract_strided_slice %1 {offsets = [1, 1, 0], sizes = [1, 1, 128], strides = [1, 1, 1]} : vector<5x5x128xf32> to vector<1x1x128xf32>
    %456 = vector.shape_cast %455 : vector<1x1x128xf32> to vector<128xf32>
    %457 = vector.shape_cast %456 : vector<128xf32> to vector<1x1x128xf32>
    %458 = vector.broadcast %457 : vector<1x1x128xf32> to vector<4x12x128xf32>
    %459 = arith.mulf %454, %458 : vector<4x12x128xf32>
    %460 = arith.addf %452, %459 : vector<4x12x128xf32>
    %c0_230 = arith.constant 0 : index
    %c9_231 = arith.constant 9 : index
    %c2_232 = arith.constant 2 : index
    %c0_233 = arith.constant 0 : index
    %461 = vector.load %arg3[%c0_230, %c9_231, %c2_232, %c0_233] : memref<1x16x16x128xf32, #tpu.memory_space<vmem>>, vector<1x4x12x128xf32>
    %462 = vector.shape_cast %461 : vector<1x4x12x128xf32> to vector<4x12x128xf32>
    %463 = vector.extract_strided_slice %1 {offsets = [1, 2, 0], sizes = [1, 1, 128], strides = [1, 1, 1]} : vector<5x5x128xf32> to vector<1x1x128xf32>
    %464 = vector.shape_cast %463 : vector<1x1x128xf32> to vector<128xf32>
    %465 = vector.shape_cast %464 : vector<128xf32> to vector<1x1x128xf32>
    %466 = vector.broadcast %465 : vector<1x1x128xf32> to vector<4x12x128xf32>
    %467 = arith.mulf %462, %466 : vector<4x12x128xf32>
    %468 = arith.addf %460, %467 : vector<4x12x128xf32>
    %c0_234 = arith.constant 0 : index
    %c9_235 = arith.constant 9 : index
    %c3_236 = arith.constant 3 : index
    %c0_237 = arith.constant 0 : index
    %469 = vector.load %arg3[%c0_234, %c9_235, %c3_236, %c0_237] : memref<1x16x16x128xf32, #tpu.memory_space<vmem>>, vector<1x4x12x128xf32>
    %470 = vector.shape_cast %469 : vector<1x4x12x128xf32> to vector<4x12x128xf32>
    %471 = vector.extract_strided_slice %1 {offsets = [1, 3, 0], sizes = [1, 1, 128], strides = [1, 1, 1]} : vector<5x5x128xf32> to vector<1x1x128xf32>
    %472 = vector.shape_cast %471 : vector<1x1x128xf32> to vector<128xf32>
    %473 = vector.shape_cast %472 : vector<128xf32> to vector<1x1x128xf32>
    %474 = vector.broadcast %473 : vector<1x1x128xf32> to vector<4x12x128xf32>
    %475 = arith.mulf %470, %474 : vector<4x12x128xf32>
    %476 = arith.addf %468, %475 : vector<4x12x128xf32>
    %c0_238 = arith.constant 0 : index
    %c9_239 = arith.constant 9 : index
    %c4_240 = arith.constant 4 : index
    %c0_241 = arith.constant 0 : index
    %477 = vector.load %arg3[%c0_238, %c9_239, %c4_240, %c0_241] : memref<1x16x16x128xf32, #tpu.memory_space<vmem>>, vector<1x4x12x128xf32>
    %478 = vector.shape_cast %477 : vector<1x4x12x128xf32> to vector<4x12x128xf32>
    %479 = vector.extract_strided_slice %1 {offsets = [1, 4, 0], sizes = [1, 1, 128], strides = [1, 1, 1]} : vector<5x5x128xf32> to vector<1x1x128xf32>
    %480 = vector.shape_cast %479 : vector<1x1x128xf32> to vector<128xf32>
    %481 = vector.shape_cast %480 : vector<128xf32> to vector<1x1x128xf32>
    %482 = vector.broadcast %481 : vector<1x1x128xf32> to vector<4x12x128xf32>
    %483 = arith.mulf %478, %482 : vector<4x12x128xf32>
    %484 = arith.addf %476, %483 : vector<4x12x128xf32>
    %c0_242 = arith.constant 0 : index
    %c10 = arith.constant 10 : index
    %c0_243 = arith.constant 0 : index
    %c0_244 = arith.constant 0 : index
    %485 = vector.load %arg3[%c0_242, %c10, %c0_243, %c0_244] : memref<1x16x16x128xf32, #tpu.memory_space<vmem>>, vector<1x4x12x128xf32>
    %486 = vector.shape_cast %485 : vector<1x4x12x128xf32> to vector<4x12x128xf32>
    %487 = vector.extract_strided_slice %1 {offsets = [2, 0, 0], sizes = [1, 1, 128], strides = [1, 1, 1]} : vector<5x5x128xf32> to vector<1x1x128xf32>
    %488 = vector.shape_cast %487 : vector<1x1x128xf32> to vector<128xf32>
    %489 = vector.shape_cast %488 : vector<128xf32> to vector<1x1x128xf32>
    %490 = vector.broadcast %489 : vector<1x1x128xf32> to vector<4x12x128xf32>
    %491 = arith.mulf %486, %490 : vector<4x12x128xf32>
    %492 = arith.addf %484, %491 : vector<4x12x128xf32>
    %c0_245 = arith.constant 0 : index
    %c10_246 = arith.constant 10 : index
    %c1_247 = arith.constant 1 : index
    %c0_248 = arith.constant 0 : index
    %493 = vector.load %arg3[%c0_245, %c10_246, %c1_247, %c0_248] : memref<1x16x16x128xf32, #tpu.memory_space<vmem>>, vector<1x4x12x128xf32>
    %494 = vector.shape_cast %493 : vector<1x4x12x128xf32> to vector<4x12x128xf32>
    %495 = vector.extract_strided_slice %1 {offsets = [2, 1, 0], sizes = [1, 1, 128], strides = [1, 1, 1]} : vector<5x5x128xf32> to vector<1x1x128xf32>
    %496 = vector.shape_cast %495 : vector<1x1x128xf32> to vector<128xf32>
    %497 = vector.shape_cast %496 : vector<128xf32> to vector<1x1x128xf32>
    %498 = vector.broadcast %497 : vector<1x1x128xf32> to vector<4x12x128xf32>
    %499 = arith.mulf %494, %498 : vector<4x12x128xf32>
    %500 = arith.addf %492, %499 : vector<4x12x128xf32>
    %c0_249 = arith.constant 0 : index
    %c10_250 = arith.constant 10 : index
    %c2_251 = arith.constant 2 : index
    %c0_252 = arith.constant 0 : index
    %501 = vector.load %arg3[%c0_249, %c10_250, %c2_251, %c0_252] : memref<1x16x16x128xf32, #tpu.memory_space<vmem>>, vector<1x4x12x128xf32>
    %502 = vector.shape_cast %501 : vector<1x4x12x128xf32> to vector<4x12x128xf32>
    %503 = vector.extract_strided_slice %1 {offsets = [2, 2, 0], sizes = [1, 1, 128], strides = [1, 1, 1]} : vector<5x5x128xf32> to vector<1x1x128xf32>
    %504 = vector.shape_cast %503 : vector<1x1x128xf32> to vector<128xf32>
    %505 = vector.shape_cast %504 : vector<128xf32> to vector<1x1x128xf32>
    %506 = vector.broadcast %505 : vector<1x1x128xf32> to vector<4x12x128xf32>
    %507 = arith.mulf %502, %506 : vector<4x12x128xf32>
    %508 = arith.addf %500, %507 : vector<4x12x128xf32>
    %c0_253 = arith.constant 0 : index
    %c10_254 = arith.constant 10 : index
    %c3_255 = arith.constant 3 : index
    %c0_256 = arith.constant 0 : index
    %509 = vector.load %arg3[%c0_253, %c10_254, %c3_255, %c0_256] : memref<1x16x16x128xf32, #tpu.memory_space<vmem>>, vector<1x4x12x128xf32>
    %510 = vector.shape_cast %509 : vector<1x4x12x128xf32> to vector<4x12x128xf32>
    %511 = vector.extract_strided_slice %1 {offsets = [2, 3, 0], sizes = [1, 1, 128], strides = [1, 1, 1]} : vector<5x5x128xf32> to vector<1x1x128xf32>
    %512 = vector.shape_cast %511 : vector<1x1x128xf32> to vector<128xf32>
    %513 = vector.shape_cast %512 : vector<128xf32> to vector<1x1x128xf32>
    %514 = vector.broadcast %513 : vector<1x1x128xf32> to vector<4x12x128xf32>
    %515 = arith.mulf %510, %514 : vector<4x12x128xf32>
    %516 = arith.addf %508, %515 : vector<4x12x128xf32>
    %c0_257 = arith.constant 0 : index
    %c10_258 = arith.constant 10 : index
    %c4_259 = arith.constant 4 : index
    %c0_260 = arith.constant 0 : index
    %517 = vector.load %arg3[%c0_257, %c10_258, %c4_259, %c0_260] : memref<1x16x16x128xf32, #tpu.memory_space<vmem>>, vector<1x4x12x128xf32>
    %518 = vector.shape_cast %517 : vector<1x4x12x128xf32> to vector<4x12x128xf32>
    %519 = vector.extract_strided_slice %1 {offsets = [2, 4, 0], sizes = [1, 1, 128], strides = [1, 1, 1]} : vector<5x5x128xf32> to vector<1x1x128xf32>
    %520 = vector.shape_cast %519 : vector<1x1x128xf32> to vector<128xf32>
    %521 = vector.shape_cast %520 : vector<128xf32> to vector<1x1x128xf32>
    %522 = vector.broadcast %521 : vector<1x1x128xf32> to vector<4x12x128xf32>
    %523 = arith.mulf %518, %522 : vector<4x12x128xf32>
    %524 = arith.addf %516, %523 : vector<4x12x128xf32>
    %c0_261 = arith.constant 0 : index
    %c11 = arith.constant 11 : index
    %c0_262 = arith.constant 0 : index
    %c0_263 = arith.constant 0 : index
    %525 = vector.load %arg3[%c0_261, %c11, %c0_262, %c0_263] : memref<1x16x16x128xf32, #tpu.memory_space<vmem>>, vector<1x4x12x128xf32>
    %526 = vector.shape_cast %525 : vector<1x4x12x128xf32> to vector<4x12x128xf32>
    %527 = vector.extract_strided_slice %1 {offsets = [3, 0, 0], sizes = [1, 1, 128], strides = [1, 1, 1]} : vector<5x5x128xf32> to vector<1x1x128xf32>
    %528 = vector.shape_cast %527 : vector<1x1x128xf32> to vector<128xf32>
    %529 = vector.shape_cast %528 : vector<128xf32> to vector<1x1x128xf32>
    %530 = vector.broadcast %529 : vector<1x1x128xf32> to vector<4x12x128xf32>
    %531 = arith.mulf %526, %530 : vector<4x12x128xf32>
    %532 = arith.addf %524, %531 : vector<4x12x128xf32>
    %c0_264 = arith.constant 0 : index
    %c11_265 = arith.constant 11 : index
    %c1_266 = arith.constant 1 : index
    %c0_267 = arith.constant 0 : index
    %533 = vector.load %arg3[%c0_264, %c11_265, %c1_266, %c0_267] : memref<1x16x16x128xf32, #tpu.memory_space<vmem>>, vector<1x4x12x128xf32>
    %534 = vector.shape_cast %533 : vector<1x4x12x128xf32> to vector<4x12x128xf32>
    %535 = vector.extract_strided_slice %1 {offsets = [3, 1, 0], sizes = [1, 1, 128], strides = [1, 1, 1]} : vector<5x5x128xf32> to vector<1x1x128xf32>
    %536 = vector.shape_cast %535 : vector<1x1x128xf32> to vector<128xf32>
    %537 = vector.shape_cast %536 : vector<128xf32> to vector<1x1x128xf32>
    %538 = vector.broadcast %537 : vector<1x1x128xf32> to vector<4x12x128xf32>
    %539 = arith.mulf %534, %538 : vector<4x12x128xf32>
    %540 = arith.addf %532, %539 : vector<4x12x128xf32>
    %c0_268 = arith.constant 0 : index
    %c11_269 = arith.constant 11 : index
    %c2_270 = arith.constant 2 : index
    %c0_271 = arith.constant 0 : index
    %541 = vector.load %arg3[%c0_268, %c11_269, %c2_270, %c0_271] : memref<1x16x16x128xf32, #tpu.memory_space<vmem>>, vector<1x4x12x128xf32>
    %542 = vector.shape_cast %541 : vector<1x4x12x128xf32> to vector<4x12x128xf32>
    %543 = vector.extract_strided_slice %1 {offsets = [3, 2, 0], sizes = [1, 1, 128], strides = [1, 1, 1]} : vector<5x5x128xf32> to vector<1x1x128xf32>
    %544 = vector.shape_cast %543 : vector<1x1x128xf32> to vector<128xf32>
    %545 = vector.shape_cast %544 : vector<128xf32> to vector<1x1x128xf32>
    %546 = vector.broadcast %545 : vector<1x1x128xf32> to vector<4x12x128xf32>
    %547 = arith.mulf %542, %546 : vector<4x12x128xf32>
    %548 = arith.addf %540, %547 : vector<4x12x128xf32>
    %c0_272 = arith.constant 0 : index
    %c11_273 = arith.constant 11 : index
    %c3_274 = arith.constant 3 : index
    %c0_275 = arith.constant 0 : index
    %549 = vector.load %arg3[%c0_272, %c11_273, %c3_274, %c0_275] : memref<1x16x16x128xf32, #tpu.memory_space<vmem>>, vector<1x4x12x128xf32>
    %550 = vector.shape_cast %549 : vector<1x4x12x128xf32> to vector<4x12x128xf32>
    %551 = vector.extract_strided_slice %1 {offsets = [3, 3, 0], sizes = [1, 1, 128], strides = [1, 1, 1]} : vector<5x5x128xf32> to vector<1x1x128xf32>
    %552 = vector.shape_cast %551 : vector<1x1x128xf32> to vector<128xf32>
    %553 = vector.shape_cast %552 : vector<128xf32> to vector<1x1x128xf32>
    %554 = vector.broadcast %553 : vector<1x1x128xf32> to vector<4x12x128xf32>
    %555 = arith.mulf %550, %554 : vector<4x12x128xf32>
    %556 = arith.addf %548, %555 : vector<4x12x128xf32>
    %c0_276 = arith.constant 0 : index
    %c11_277 = arith.constant 11 : index
    %c4_278 = arith.constant 4 : index
    %c0_279 = arith.constant 0 : index
    %557 = vector.load %arg3[%c0_276, %c11_277, %c4_278, %c0_279] : memref<1x16x16x128xf32, #tpu.memory_space<vmem>>, vector<1x4x12x128xf32>
    %558 = vector.shape_cast %557 : vector<1x4x12x128xf32> to vector<4x12x128xf32>
    %559 = vector.extract_strided_slice %1 {offsets = [3, 4, 0], sizes = [1, 1, 128], strides = [1, 1, 1]} : vector<5x5x128xf32> to vector<1x1x128xf32>
    %560 = vector.shape_cast %559 : vector<1x1x128xf32> to vector<128xf32>
    %561 = vector.shape_cast %560 : vector<128xf32> to vector<1x1x128xf32>
    %562 = vector.broadcast %561 : vector<1x1x128xf32> to vector<4x12x128xf32>
    %563 = arith.mulf %558, %562 : vector<4x12x128xf32>
    %564 = arith.addf %556, %563 : vector<4x12x128xf32>
    %c0_280 = arith.constant 0 : index
    %c12 = arith.constant 12 : index
    %c0_281 = arith.constant 0 : index
    %c0_282 = arith.constant 0 : index
    %565 = vector.load %arg3[%c0_280, %c12, %c0_281, %c0_282] : memref<1x16x16x128xf32, #tpu.memory_space<vmem>>, vector<1x4x12x128xf32>
    %566 = vector.shape_cast %565 : vector<1x4x12x128xf32> to vector<4x12x128xf32>
    %567 = vector.extract_strided_slice %1 {offsets = [4, 0, 0], sizes = [1, 1, 128], strides = [1, 1, 1]} : vector<5x5x128xf32> to vector<1x1x128xf32>
    %568 = vector.shape_cast %567 : vector<1x1x128xf32> to vector<128xf32>
    %569 = vector.shape_cast %568 : vector<128xf32> to vector<1x1x128xf32>
    %570 = vector.broadcast %569 : vector<1x1x128xf32> to vector<4x12x128xf32>
    %571 = arith.mulf %566, %570 : vector<4x12x128xf32>
    %572 = arith.addf %564, %571 : vector<4x12x128xf32>
    %c0_283 = arith.constant 0 : index
    %c12_284 = arith.constant 12 : index
    %c1_285 = arith.constant 1 : index
    %c0_286 = arith.constant 0 : index
    %573 = vector.load %arg3[%c0_283, %c12_284, %c1_285, %c0_286] : memref<1x16x16x128xf32, #tpu.memory_space<vmem>>, vector<1x4x12x128xf32>
    %574 = vector.shape_cast %573 : vector<1x4x12x128xf32> to vector<4x12x128xf32>
    %575 = vector.extract_strided_slice %1 {offsets = [4, 1, 0], sizes = [1, 1, 128], strides = [1, 1, 1]} : vector<5x5x128xf32> to vector<1x1x128xf32>
    %576 = vector.shape_cast %575 : vector<1x1x128xf32> to vector<128xf32>
    %577 = vector.shape_cast %576 : vector<128xf32> to vector<1x1x128xf32>
    %578 = vector.broadcast %577 : vector<1x1x128xf32> to vector<4x12x128xf32>
    %579 = arith.mulf %574, %578 : vector<4x12x128xf32>
    %580 = arith.addf %572, %579 : vector<4x12x128xf32>
    %c0_287 = arith.constant 0 : index
    %c12_288 = arith.constant 12 : index
    %c2_289 = arith.constant 2 : index
    %c0_290 = arith.constant 0 : index
    %581 = vector.load %arg3[%c0_287, %c12_288, %c2_289, %c0_290] : memref<1x16x16x128xf32, #tpu.memory_space<vmem>>, vector<1x4x12x128xf32>
    %582 = vector.shape_cast %581 : vector<1x4x12x128xf32> to vector<4x12x128xf32>
    %583 = vector.extract_strided_slice %1 {offsets = [4, 2, 0], sizes = [1, 1, 128], strides = [1, 1, 1]} : vector<5x5x128xf32> to vector<1x1x128xf32>
    %584 = vector.shape_cast %583 : vector<1x1x128xf32> to vector<128xf32>
    %585 = vector.shape_cast %584 : vector<128xf32> to vector<1x1x128xf32>
    %586 = vector.broadcast %585 : vector<1x1x128xf32> to vector<4x12x128xf32>
    %587 = arith.mulf %582, %586 : vector<4x12x128xf32>
    %588 = arith.addf %580, %587 : vector<4x12x128xf32>
    %c0_291 = arith.constant 0 : index
    %c12_292 = arith.constant 12 : index
    %c3_293 = arith.constant 3 : index
    %c0_294 = arith.constant 0 : index
    %589 = vector.load %arg3[%c0_291, %c12_292, %c3_293, %c0_294] : memref<1x16x16x128xf32, #tpu.memory_space<vmem>>, vector<1x4x12x128xf32>
    %590 = vector.shape_cast %589 : vector<1x4x12x128xf32> to vector<4x12x128xf32>
    %591 = vector.extract_strided_slice %1 {offsets = [4, 3, 0], sizes = [1, 1, 128], strides = [1, 1, 1]} : vector<5x5x128xf32> to vector<1x1x128xf32>
    %592 = vector.shape_cast %591 : vector<1x1x128xf32> to vector<128xf32>
    %593 = vector.shape_cast %592 : vector<128xf32> to vector<1x1x128xf32>
    %594 = vector.broadcast %593 : vector<1x1x128xf32> to vector<4x12x128xf32>
    %595 = arith.mulf %590, %594 : vector<4x12x128xf32>
    %596 = arith.addf %588, %595 : vector<4x12x128xf32>
    %c0_295 = arith.constant 0 : index
    %c12_296 = arith.constant 12 : index
    %c4_297 = arith.constant 4 : index
    %c0_298 = arith.constant 0 : index
    %597 = vector.load %arg3[%c0_295, %c12_296, %c4_297, %c0_298] : memref<1x16x16x128xf32, #tpu.memory_space<vmem>>, vector<1x4x12x128xf32>
    %598 = vector.shape_cast %597 : vector<1x4x12x128xf32> to vector<4x12x128xf32>
    %599 = vector.extract_strided_slice %1 {offsets = [4, 4, 0], sizes = [1, 1, 128], strides = [1, 1, 1]} : vector<5x5x128xf32> to vector<1x1x128xf32>
    %600 = vector.shape_cast %599 : vector<1x1x128xf32> to vector<128xf32>
    %601 = vector.shape_cast %600 : vector<128xf32> to vector<1x1x128xf32>
    %602 = vector.broadcast %601 : vector<1x1x128xf32> to vector<4x12x128xf32>
    %603 = arith.mulf %598, %602 : vector<4x12x128xf32>
    %604 = arith.addf %596, %603 : vector<4x12x128xf32>
    %c0_299 = arith.constant 0 : index
    %c8_300 = arith.constant 8 : index
    %c0_301 = arith.constant 0 : index
    %c0_302 = arith.constant 0 : index
    %605 = vector.load %arg4[%c0_299, %c8_300, %c0_301, %c0_302] : memref<1x12x12x128xf32, #tpu.memory_space<vmem>>, vector<1x4x12x128xf32>
    %606 = vector.shape_cast %605 : vector<1x4x12x128xf32> to vector<4x12x128xf32>
    %607 = vector.shape_cast %604 : vector<4x12x128xf32> to vector<1x4x12x128xf32>
    tpu.vector_store %arg4[%c0_299, %c8_300, %c0_301, %c0_302], %607 {strides = array<i32>} : memref<1x12x12x128xf32, #tpu.memory_space<vmem>>, vector<1x4x12x128xf32>,
    return
  }
  func.func @transform_0(%arg0: i32, %arg1: i32) -> (i32, i32, i32, i32) {
    %c0_i32 = arith.constant 0 : i32
    %c0_i32_0 = arith.constant 0 : i32
    %c0_i32_1 = arith.constant 0 : i32
    return %arg0, %c0_i32, %c0_i32_0, %arg1 : i32, i32, i32, i32
  }
  func.func @transform_1(%arg0: i32, %arg1: i32) -> (i32, i32, i32, i32) {
    %c0_i32 = arith.constant 0 : i32
    %c0_i32_0 = arith.constant 0 : i32
    %c0_i32_1 = arith.constant 0 : i32
    return %arg0, %c0_i32, %c0_i32_0, %arg1 : i32, i32, i32, i32
  }
  func.func @transform_2(%arg0: i32, %arg1: i32) -> (i32, i32, i32, i32) {
    %c0_i32 = arith.constant 0 : i32
    %c0_i32_0 = arith.constant 0 : i32
    %c0_i32_1 = arith.constant 0 : i32
    return %arg0, %c0_i32, %c0_i32_0, %arg1 : i32, i32, i32, i32
  }
}

</mosaic_0001>

<llo_original>
// kernel: fdam_forward_nhwc.1
$region0: #{fdam_forward_nhwc.1}
  #allocation0 [shape = 'u32[]', space=smem, size = 0x4, offset = 0x4, fixed_abs, tag = 'smem constant byte address 0x4 - core index']
  #allocation1 [shape = 'u32[72,128]{1,0:T(1,128)}', space=vmem, size = 0x9000, scoped, tag = 'internal scratch']
  %s0 = inlined_call_operand.vmem [shape: f32[2,5,5,256], index: 0, kind: input, shape index: {}]
  %s1 = inlined_call_operand.hbm [shape: f32[2,16,16,256], index: 1, kind: input, shape index: {}]
  %s2 = inlined_call_operand.vmem [shape: f32[2,12,12,256], index: 2, kind: output, shape index: {}]
  %s3 = sld [smem:[#allocation0]]
  $region117: #{fdam_forward_nhwc.1} parent=0
    _
  %s5 = ssub.s32 1, %s3
  %s6 = scalar_select 0, %s5, %s3
  $region1: #{fdam_forward_nhwc.1} parent=0
    #allocation2 [shape = 'u8[40960]{0}', space=vmem, size = 0xa000, scoped, tag = 'input window, operand 0']
    #allocation3 [shape = 'u8[262144]{0}', space=vmem, size = 0x40000, scoped, tag = 'input window, operand 1']
    #allocation4 [shape = 's32[2]{0}', space=sflag, size = 0x8, scoped, tag = 'scoped memory for fdam_forward_nhwc.1']
    #allocation5 [shape = 'u8[196608]{0}', space=vmem, size = 0x30000, scoped, tag = 'output window, operand 0']
    %7 = vsyncpa [#allocation4], 0
    %s8 = scalar_lea.sflag [#allocation4], 1
    %9 = vsyncpa %s8, 0
    loop: start=0, step=1, limit=6
    $region2: #{fdam_forward_nhwc.1} parent=1 // loop_pre_header
      _
    $region3: #{fdam_forward_nhwc.1} parent=1 // loop_header
      %s11 = sphi 0, %s15
      %p12 = scmp.ge.s32.totalorder %s11, 6
      %s18 = sphi 0, %s30
      %s19 = sphi 0, %s26
      %s20 = sphi 0, %s18
      %s21 = sphi 0, %s19
      %s22 = sphi 0, %s20
      %s23 = sphi 0, %s21
      %s35 = sphi 0, %s37
      %s38 = sphi 0, %s35
      %s39 = sphi 0, %s38
      %s55 = sphi 0, %s39
      %s63 = sphi 0, %s65
      %s66 = sphi 0, %s63
      %s67 = sphi 0, %s66
      %s83 = sphi 0, %s67
      %s91 = sphi 0, %s93
      %s94 = sphi 0, %s91
      %s95 = sphi 0, %s94
      %s111 = sphi 0, %s95
    $region4: #{fdam_forward_nhwc.1} parent=1 // loop_header_branch
      %14 = sbr.rel (%p12) target = $region8
    $region5: #{fdam_forward_nhwc.1} parent=1 // loop_body
      %s16 = ssub.s32 %s11, 1
      %s17 = ssub.s32 %s11, 2
      %s24 = sadd.s32 1, %s19
      %p25 = scmp.ge.s32.totalorder %s24, 2
      %s26 = scalar_select %p25, 0, %s24
      %s27 = sadd.s32 1, %s18
      %s28 = scalar_select %p25, %s27, %s18
      %p29 = scmp.ge.s32.totalorder %s28, 2
      %s30 = scalar_select %p29, 0, %s28
      %s31 = ssub.s32 %s18, %s30
      %s32 = ssub.s32 %s19, %s26
      %s33 = sor.u32 %s31, %s32
      %p34 = scmp.eq.s32.totalorder %s33, 0
      %s36 = sadd.s32 %s35, 1
      %s37 = scalar_select %p34, %s35, %s36
      %p40 = pneg %p34
      %p41 = scmp.eq.s32.totalorder %s11, 3
      %p42 = por %p40, %p41
      %p43 = scmp.ne.s32.totalorder %s35, %s38
      %p44 = scmp.eq.s32.totalorder %s11, 0
      %p45 = por %p43, %p44
      %p46 = scmp.ne.s32.totalorder %s35, %s38
      %p47 = scmp.eq.s32.totalorder %s16, 3
      %p48 = por %p46, %p47
      %p49 = scmp.ne.s32.totalorder %s38, %s39
      %p50 = scmp.eq.s32.totalorder %s16, 0
      %p51 = por %p49, %p50
      %p52 = scmp.ne.s32.totalorder %s38, %s39
      %p53 = scmp.eq.s32.totalorder %s17, 3
      %p54 = por %p52, %p53
      %p56 = scmp.ne.s32.totalorder %s39, %s55
      %p57 = scmp.eq.s32.totalorder %s17, 0
      %p58 = por %p56, %p57
      %s59 = ssub.s32 %s18, %s30
      %s60 = ssub.s32 %s19, %s26
      %s61 = sor.u32 %s59, %s60
      %p62 = scmp.eq.s32.totalorder %s61, 0
      %s64 = sadd.s32 %s63, 1
      %s65 = scalar_select %p62, %s63, %s64
      %p68 = pneg %p62
      %p69 = scmp.eq.s32.totalorder %s11, 3
      %p70 = por %p68, %p69
      %p71 = scmp.ne.s32.totalorder %s63, %s66
      %p72 = scmp.eq.s32.totalorder %s11, 0
      %p73 = por %p71, %p72
      %p74 = scmp.ne.s32.totalorder %s63, %s66
      %p75 = scmp.eq.s32.totalorder %s16, 3
      %p76 = por %p74, %p75
      %p77 = scmp.ne.s32.totalorder %s66, %s67
      %p78 = scmp.eq.s32.totalorder %s16, 0
      %p79 = por %p77, %p78
      %p80 = scmp.ne.s32.totalorder %s66, %s67
      %p81 = scmp.eq.s32.totalorder %s17, 3
      %p82 = por %p80, %p81
      %p84 = scmp.ne.s32.totalorder %s67, %s83
      %p85 = scmp.eq.s32.totalorder %s17, 0
      %p86 = por %p84, %p85
      %s87 = ssub.s32 %s18, %s30
      %s88 = ssub.s32 %s19, %s26
      %s89 = sor.u32 %s87, %s88
      %p90 = scmp.eq.s32.totalorder %s89, 0
      %s92 = sadd.s32 %s91, 1
      %s93 = scalar_select %p90, %s91, %s92
      %p96 = pneg %p90
      %p97 = scmp.eq.s32.totalorder %s11, 3
      %p98 = por %p96, %p97
      %p99 = scmp.ne.s32.totalorder %s91, %s94
      %p100 = scmp.eq.s32.totalorder %s11, 0
      %p101 = por %p99, %p100
      %p102 = scmp.ne.s32.totalorder %s91, %s94
      %p103 = scmp.eq.s32.totalorder %s16, 3
      %p104 = por %p102, %p103
      %p105 = scmp.ne.s32.totalorder %s94, %s95
      %p106 = scmp.eq.s32.totalorder %s16, 0
      %p107 = por %p105, %p106
      %p108 = scmp.ne.s32.totalorder %s94, %s95
      %p109 = scmp.eq.s32.totalorder %s17, 3
      %p110 = por %p108, %p109
      %p112 = scmp.ne.s32.totalorder %s95, %s111
      %p113 = scmp.eq.s32.totalorder %s17, 0
      %p114 = por %p112, %p113
      %p115 = scmp.le.s32.totalorder 1, %s11
      %p116 = scmp.lt.s32.totalorder %s11, 5
      %p117 = pnand %p115, %p116
      %p118 = pneg %p117
      // Predicated region
      $region9: #{fdam_forward_nhwc.1} parent=5 // pred_check
        _
      $region10: #{fdam_forward_nhwc.1} parent=5 // pred_check_branch
        %120 = sbr.rel (%p117) target = $region12
      $region11: #{fdam_forward_nhwc.1} parent=5 // pred_region
        %s121 = ssub.s32 %s11, 1
      $region12: #{fdam_forward_nhwc.1} parent=5 // pred_fallthru
        _
      %p122 = scmp.lt.s32.totalorder %s11, 4
      // Predicated region
      $region13: #{fdam_forward_nhwc.1} parent=5 // pred_check
        %p123 = pneg %p122
      $region14: #{fdam_forward_nhwc.1} parent=5 // pred_check_branch
        %125 = sbr.rel (%p123) target = $region16
      $region15: #{fdam_forward_nhwc.1} parent=5 // pred_region
        // Predicated region
        $region17: #{fdam_forward_nhwc.1} parent=15 // pred_check
          %p126 = pneg %p45
        $region18: #{fdam_forward_nhwc.1} parent=15 // pred_check_branch
          %128 = sbr.rel (%p126) target = $region20
        $region19: #{fdam_forward_nhwc.1} parent=15 // pred_region
          %s129 = sand.u32 %s35, 1
          %s130 = sand.u32 %s35, 1
          %s131 = smul.addr %s130, 40
          %s132 = scalar_lea.vmem [#allocation2], %s131
          %s133 = smul.addr %s18, 10
          %s134 = sadd.s32 %s19, %s133
          %s135 = smul.addr %s134, 8
          %s136 = scalar_lea.vmem %s0, %s135
          // Predicated region
          $region21: #{fdam_forward_nhwc.1} parent=19 // pred_check
            _
          $region22: #{fdam_forward_nhwc.1} parent=19 // pred_check_branch
            %138 = sbr.rel (0) target = $region24
          $region23: #{fdam_forward_nhwc.1} parent=19 // pred_region
            // Predicated region
            $region25: #{fdam_forward_nhwc.1} parent=23 // pred_check
              _
            $region26: #{fdam_forward_nhwc.1} parent=23 // pred_check_branch
              %140 = sbr.rel (0) target = $region28
            $region27: #{fdam_forward_nhwc.1} parent=23 // pred_region
              // Predicated region
              $region40: #{fdam_forward_nhwc.1} parent=27 // pred_check
                _
              $region41: #{fdam_forward_nhwc.1} parent=27 // pred_check_branch
                %164 = sbr.rel (0) target = $region43
              $region42: #{fdam_forward_nhwc.1} parent=27 // pred_region
                loop: start=0, step=1, limit=1
                $region44: #{fdam_forward_nhwc.1} parent=42 // loop_pre_header
                  _
                $region45: #{fdam_forward_nhwc.1} parent=42 // loop_header
                  %s166 = sphi 0, %s170
                  %p167 = scmp.ge.s32.totalorder %s166, 1
                  %s171 = sphi %s136, %s136
                  %s172 = sphi %s132, %s132
                $region46: #{fdam_forward_nhwc.1} parent=42 // loop_header_branch
                  %169 = sbr.rel (%p167) target = $region50
                $region47: #{fdam_forward_nhwc.1} parent=42 // loop_body
                  %v173 = vld [vmem:[%s171] sm:$0xff]
                  %174 = vst [vmem:[%s172] sm:$0xff] %v173
                  %v175 = vld [vmem:[%s171 + $0x10] sm:$0xff]
                  %176 = vst [vmem:[%s172 + $0x8] sm:$0xff] %v175
                  %v177 = vld [vmem:[%s171 + $0x20] sm:$0xff]
                  %178 = vst [vmem:[%s172 + $0x10] sm:$0xff] %v177
                  %v179 = vld [vmem:[%s171 + $0x30] sm:$0xff]
                  %180 = vst [vmem:[%s172 + $0x18] sm:$0xff] %v179
                  %v181 = vld [vmem:[%s171 + $0x40] sm:$0xff]
                  %182 = vst [vmem:[%s172 + $0x20] sm:$0xff] %v181
                $region48: #{fdam_forward_nhwc.1} parent=42 // loop_footer
                  %s170 = sadd.s32 1, %s166
                $region49: #{fdam_forward_nhwc.1} parent=42 // loop_footer_branch
                  %165 = sbr.rel target = $region45
                $region50: #{fdam_forward_nhwc.1} parent=42 // loop_exit
                  _
              $region43: #{fdam_forward_nhwc.1} parent=27 // pred_fallthru
                _
              // Predicated region
              $region51: #{fdam_forward_nhwc.1} parent=27 // pred_check
                _
              $region52: #{fdam_forward_nhwc.1} parent=27 // pred_check_branch
                %184 = sbr.rel target = $region54
              $region53: #{fdam_forward_nhwc.1} parent=27 // pred_region
                _
              $region54: #{fdam_forward_nhwc.1} parent=27 // pred_fallthru
                _
            $region28: #{fdam_forward_nhwc.1} parent=23 // pred_fallthru
              _
            // Predicated region
            $region29: #{fdam_forward_nhwc.1} parent=23 // pred_check
              _
            $region30: #{fdam_forward_nhwc.1} parent=23 // pred_check_branch
              %142 = sbr.rel target = $region32
            $region31: #{fdam_forward_nhwc.1} parent=23 // pred_region
              %s144 = ssub.s32 256, 1
              loop: start=0, step=1, limit=1
              $region33: #{fdam_forward_nhwc.1} parent=31 // loop_pre_header
                _
              $region34: #{fdam_forward_nhwc.1} parent=31 // loop_header
                %s146 = sphi 0, %s150
                %p147 = scmp.ge.s32.totalorder %s146, 1
                %s151 = sphi %s136, %s136
                %s152 = sphi %s132, %s132
              $region35: #{fdam_forward_nhwc.1} parent=31 // loop_header_branch
                %149 = sbr.rel (%p147) target = $region39
              $region36: #{fdam_forward_nhwc.1} parent=31 // loop_body
                %v153 = vld [vmem:[%s151] sm:%s144]
                %154 = vst [vmem:[%s152] sm:%s144] %v153
                %v155 = vld [vmem:[%s151 + $0x10] sm:%s144]
                %156 = vst [vmem:[%s152 + $0x8] sm:%s144] %v155
                %v157 = vld [vmem:[%s151 + $0x20] sm:%s144]
                %158 = vst [vmem:[%s152 + $0x10] sm:%s144] %v157
                %v159 = vld [vmem:[%s151 + $0x30] sm:%s144]
                %160 = vst [vmem:[%s152 + $0x18] sm:%s144] %v159
                %v161 = vld [vmem:[%s151 + $0x40] sm:%s144]
                %162 = vst [vmem:[%s152 + $0x20] sm:%s144] %v161
              $region37: #{fdam_forward_nhwc.1} parent=31 // loop_footer
                %s150 = sadd.s32 1, %s146
              $region38: #{fdam_forward_nhwc.1} parent=31 // loop_footer_branch
                %145 = sbr.rel target = $region34
              $region39: #{fdam_forward_nhwc.1} parent=31 // loop_exit
                _
            $region32: #{fdam_forward_nhwc.1} parent=23 // pred_fallthru
              _
          $region24: #{fdam_forward_nhwc.1} parent=19 // pred_fallthru
            _
          %185 = vnop
        $region20: #{fdam_forward_nhwc.1} parent=15 // pred_fallthru
          _
        // Predicated region
        $region55: #{fdam_forward_nhwc.1} parent=15 // pred_check
          %p186 = pneg %p73
        $region56: #{fdam_forward_nhwc.1} parent=15 // pred_check_branch
          %188 = sbr.rel (%p186) target = $region58
        $region57: #{fdam_forward_nhwc.1} parent=15 // pred_region
          %s189 = sand.u32 %s63, 1
          %s190 = scalar_lea.sflag [#allocation4], %s189
          %s191 = sand.u32 %s63, 1
          %s192 = smul.addr %s191, 256
          %s193 = scalar_lea.vmem [#allocation3], %s192
          %195 = vsyncadd %s190, 0
          %s196 = smul.addr %s18, 64
          %s197 = sadd.s32 %s19, %s196
          %s198 = smul.addr %s197, 8
          %s199 = scalar_lea.hbm %s1, %s198
          %s200 = sshll.u32 %s199, 4
          %s201 = int_to_ptr.hbm [resolvable:$true] %s200
          %s202 = sshll.u32 %s193, 4
          %s203 = int_to_ptr.vmem [resolvable:$true] %s202
          %208 = dma.hbm_to_vmem [thread:$0]  %s201, 4096, %s203, %s190, 256, 128, 8
        $region58: #{fdam_forward_nhwc.1} parent=15 // pred_fallthru
          _
      $region16: #{fdam_forward_nhwc.1} parent=5 // pred_fallthru
        _
      %p209 = scmp.le.s32.totalorder 1, %s11
      %p210 = scmp.lt.s32.totalorder %s11, 5
      %p211 = pnand %p209, %p210
      %p212 = pneg %p211
      // Predicated region
      $region59: #{fdam_forward_nhwc.1} parent=5 // pred_check
        _
      $region60: #{fdam_forward_nhwc.1} parent=5 // pred_check_branch
        %214 = sbr.rel (%p211) target = $region62
      $region61: #{fdam_forward_nhwc.1} parent=5 // pred_region
        %s215 = ssub.s32 %s11, 1
        %s216 = sand.u32 %s38, 1
        %s217 = sand.u32 %s38, 1
        %s218 = smul.addr %s217, 40
        %s219 = scalar_lea.vmem [#allocation2], %s218
        // Predicated region
        $region63: #{fdam_forward_nhwc.1} parent=61 // pred_check
          %p220 = pneg %p51
        $region64: #{fdam_forward_nhwc.1} parent=61 // pred_check_branch
          %222 = sbr.rel (%p220) target = $region66
        $region65: #{fdam_forward_nhwc.1} parent=61 // pred_region
          _
        $region66: #{fdam_forward_nhwc.1} parent=61 // pred_fallthru
          _
        %s223 = sand.u32 %s66, 1
        %s224 = scalar_lea.sflag [#allocation4], %s223
        %s225 = sand.u32 %s66, 1
        %s226 = smul.addr %s225, 256
        %s227 = scalar_lea.vmem [#allocation3], %s226
        // Predicated region
        $region67: #{fdam_forward_nhwc.1} parent=61 // pred_check
          %p228 = pneg %p79
        $region68: #{fdam_forward_nhwc.1} parent=61 // pred_check_branch
          %230 = sbr.rel (%p228) target = $region70
        $region69: #{fdam_forward_nhwc.1} parent=61 // pred_region
          %232 = dma.done %s224, 4096
        $region70: #{fdam_forward_nhwc.1} parent=61 // pred_fallthru
          _
        %s233 = sand.u32 %s38, 1
        %s234 = sand.u32 %s38, 1
        %s235 = smul.addr %s234, 40
        %s236 = scalar_lea.vmem [#allocation2], %s235
        %p237 = pneg %p51
        %p238 = pneg %p48
        %s239 = sand.u32 %s66, 1
        %s240 = scalar_lea.sflag [#allocation4], %s239
        %s241 = sand.u32 %s66, 1
        %s242 = smul.addr %s241, 256
        %s243 = scalar_lea.vmem [#allocation3], %s242
        %p244 = pneg %p79
        %p245 = pneg %p76
        %p246 = pneg %p107
        %p247 = pneg %p104
        %s248 = sand.u32 %s94, 1
        %s249 = sand.u32 %s94, 1
        %s250 = smul.addr %s249, 192
        %s251 = scalar_lea.vmem [#allocation5], %s250
        %v252 = vld [vmem:[%s219] sm:$0x1f]
        %v253 = vld [vmem:[%s219 + $0x8] sm:$0x1f]
        %v254 = vld [vmem:[%s219 + $0x10] sm:$0x1f]
        %v255 = vld [vmem:[%s219 + $0x18] sm:$0x1f]
        %v256 = vld [vmem:[%s219 + $0x20] sm:$0x1f]
        %v257 = vld [vmem:[%s227] sm:$0xff]
        %v258 = vld [vmem:[%s227 + $0x8] sm:$0xf]
        %v259 = vld [vmem:[%s227 + $0x10] sm:$0xff]
        %v260 = vld [vmem:[%s227 + $0x18] sm:$0xf]
        %v261 = vld [vmem:[%s227 + $0x20] sm:$0xff]
        %v262 = vld [vmem:[%s227 + $0x28] sm:$0xf]
        %v263 = vld [vmem:[%s227 + $0x30] sm:$0xff]
        %v264 = vld [vmem:[%s227 + $0x38] sm:$0xf]
        %v265 = vperm.slane %v252, 0
        %v266 = vmul.f32 %v257, %v265
        %v267 = vmul.f32 %v258, %v265
        %v268 = vmul.f32 %v259, %v265
        %v269 = vmul.f32 %v260, %v265
        %v270 = vmul.f32 %v261, %v265
        %v271 = vmul.f32 %v262, %v265
        %v272 = vmul.f32 %v263, %v265
        %v273 = vmul.f32 %v264, %v265
        %v274 = vld [vmem:[%s227 + $0x1] sm:$0xff]
        %v275 = vld [vmem:[%s227 + $0x9] sm:$0xf]
        %v276 = vld [vmem:[%s227 + $0x11] sm:$0xff]
        %v277 = vld [vmem:[%s227 + $0x19] sm:$0xf]
        %v278 = vld [vmem:[%s227 + $0x21] sm:$0xff]
        %v279 = vld [vmem:[%s227 + $0x29] sm:$0xf]
        %v280 = vld [vmem:[%s227 + $0x31] sm:$0xff]
        %v281 = vld [vmem:[%s227 + $0x39] sm:$0xf]
        %v282 = vperm.slane %v252, 1
        %v283 = vmul.f32 %v274, %v282
        %v284 = vmul.f32 %v275, %v282
        %v285 = vmul.f32 %v276, %v282
        %v286 = vmul.f32 %v277, %v282
        %v287 = vmul.f32 %v278, %v282
        %v288 = vmul.f32 %v279, %v282
        %v289 = vmul.f32 %v280, %v282
        %v290 = vmul.f32 %v281, %v282
        %v291 = vadd.f32 %v266, %v283
        %v292 = vadd.f32 %v267, %v284
        %v293 = vadd.f32 %v268, %v285
        %v294 = vadd.f32 %v269, %v286
        %v295 = vadd.f32 %v270, %v287
        %v296 = vadd.f32 %v271, %v288
        %v297 = vadd.f32 %v272, %v289
        %v298 = vadd.f32 %v273, %v290
        %v299 = vld [vmem:[%s227 + $0x2] sm:$0xff]
        %v300 = vld [vmem:[%s227 + $0xa] sm:$0xf]
        %v301 = vld [vmem:[%s227 + $0x12] sm:$0xff]
        %v302 = vld [vmem:[%s227 + $0x1a] sm:$0xf]
        %v303 = vld [vmem:[%s227 + $0x22] sm:$0xff]
        %v304 = vld [vmem:[%s227 + $0x2a] sm:$0xf]
        %v305 = vld [vmem:[%s227 + $0x32] sm:$0xff]
        %v306 = vld [vmem:[%s227 + $0x3a] sm:$0xf]
        %v307 = vperm.slane %v252, 2
        %v308 = vmul.f32 %v299, %v307
        %v309 = vmul.f32 %v300, %v307
        %v310 = vmul.f32 %v301, %v307
        %v311 = vmul.f32 %v302, %v307
        %v312 = vmul.f32 %v303, %v307
        %v313 = vmul.f32 %v304, %v307
        %v314 = vmul.f32 %v305, %v307
        %v315 = vmul.f32 %v306, %v307
        %v316 = vadd.f32 %v291, %v308
        %v317 = vadd.f32 %v292, %v309
        %v318 = vadd.f32 %v293, %v310
        %v319 = vadd.f32 %v294, %v311
        %v320 = vadd.f32 %v295, %v312
        %v321 = vadd.f32 %v296, %v313
        %v322 = vadd.f32 %v297, %v314
        %v323 = vadd.f32 %v298, %v315
        %v324 = vld [vmem:[%s227 + $0x3] sm:$0xff]
        %v325 = vld [vmem:[%s227 + $0xb] sm:$0xf]
        %v326 = vld [vmem:[%s227 + $0x13] sm:$0xff]
        %v327 = vld [vmem:[%s227 + $0x1b] sm:$0xf]
        %v328 = vld [vmem:[%s227 + $0x23] sm:$0xff]
        %v329 = vld [vmem:[%s227 + $0x2b] sm:$0xf]
        %v330 = vld [vmem:[%s227 + $0x33] sm:$0xff]
        %v331 = vld [vmem:[%s227 + $0x3b] sm:$0xf]
        %v332 = vperm.slane %v252, 3
        %v333 = vmul.f32 %v324, %v332
        %v334 = vmul.f32 %v325, %v332
        %v335 = vmul.f32 %v326, %v332
        %v336 = vmul.f32 %v327, %v332
        %v337 = vmul.f32 %v328, %v332
        %v338 = vmul.f32 %v329, %v332
        %v339 = vmul.f32 %v330, %v332
        %v340 = vmul.f32 %v331, %v332
        %v341 = vadd.f32 %v316, %v333
        %v342 = vadd.f32 %v317, %v334
        %v343 = vadd.f32 %v318, %v335
        %v344 = vadd.f32 %v319, %v336
        %v345 = vadd.f32 %v320, %v337
        %v346 = vadd.f32 %v321, %v338
        %v347 = vadd.f32 %v322, %v339
        %v348 = vadd.f32 %v323, %v340
        %v349 = vld [vmem:[%s227 + $0x4] sm:$0xff]
        %v350 = vld [vmem:[%s227 + $0xc] sm:$0xf]
        %v351 = vld [vmem:[%s227 + $0x14] sm:$0xff]
        %v352 = vld [vmem:[%s227 + $0x1c] sm:$0xf]
        %v353 = vld [vmem:[%s227 + $0x24] sm:$0xff]
        %v354 = vld [vmem:[%s227 + $0x2c] sm:$0xf]
        %v355 = vld [vmem:[%s227 + $0x34] sm:$0xff]
        %v356 = vld [vmem:[%s227 + $0x3c] sm:$0xf]
        %v357 = vperm.slane %v252, 4
        %v358 = vmul.f32 %v349, %v357
        %v359 = vmul.f32 %v350, %v357
        %v360 = vmul.f32 %v351, %v357
        %v361 = vmul.f32 %v352, %v357
        %v362 = vmul.f32 %v353, %v357
        %v363 = vmul.f32 %v354, %v357
        %v364 = vmul.f32 %v355, %v357
        %v365 = vmul.f32 %v356, %v357
        %v366 = vadd.f32 %v341, %v358
        %v367 = vadd.f32 %v342, %v359
        %v368 = vadd.f32 %v343, %v360
        %v369 = vadd.f32 %v344, %v361
        %v370 = vadd.f32 %v345, %v362
        %v371 = vadd.f32 %v346, %v363
        %v372 = vadd.f32 %v347, %v364
        %v373 = vadd.f32 %v348, %v365
        %s374 = scalar_lea.vmem %s227, 16 [#allocation3]
        %v375 = vld [vmem:[%s374] sm:$0xff]
        %v376 = vld [vmem:[%s374 + $0x8] sm:$0xf]
        %v377 = vld [vmem:[%s374 + $0x10] sm:$0xff]
        %v378 = vld [vmem:[%s374 + $0x18] sm:$0xf]
        %v379 = vld [vmem:[%s374 + $0x20] sm:$0xff]
        %v380 = vld [vmem:[%s374 + $0x28] sm:$0xf]
        %v381 = vld [vmem:[%s374 + $0x30] sm:$0xff]
        %v382 = vld [vmem:[%s374 + $0x38] sm:$0xf]
        %v383 = vperm.slane %v253, 0
        %v384 = vmul.f32 %v375, %v383
        %v385 = vmul.f32 %v376, %v383
        %v386 = vmul.f32 %v377, %v383
        %v387 = vmul.f32 %v378, %v383
        %v388 = vmul.f32 %v379, %v383
        %v389 = vmul.f32 %v380, %v383
        %v390 = vmul.f32 %v381, %v383
        %v391 = vmul.f32 %v382, %v383
        %v392 = vadd.f32 %v366, %v384
        %v393 = vadd.f32 %v367, %v385
        %v394 = vadd.f32 %v368, %v386
        %v395 = vadd.f32 %v369, %v387
        %v396 = vadd.f32 %v370, %v388
        %v397 = vadd.f32 %v371, %v389
        %v398 = vadd.f32 %v372, %v390
        %v399 = vadd.f32 %v373, %v391
        %v400 = vld [vmem:[%s374 + $0x1] sm:$0xff]
        %v401 = vld [vmem:[%s374 + $0x9] sm:$0xf]
        %v402 = vld [vmem:[%s374 + $0x11] sm:$0xff]
        %v403 = vld [vmem:[%s374 + $0x19] sm:$0xf]
        %v404 = vld [vmem:[%s374 + $0x21] sm:$0xff]
        %v405 = vld [vmem:[%s374 + $0x29] sm:$0xf]
        %v406 = vld [vmem:[%s374 + $0x31] sm:$0xff]
        %v407 = vld [vmem:[%s374 + $0x39] sm:$0xf]
        %v408 = vperm.slane %v253, 1
        %v409 = vmul.f32 %v400, %v408
        %v410 = vmul.f32 %v401, %v408
        %v411 = vmul.f32 %v402, %v408
        %v412 = vmul.f32 %v403, %v408
        %v413 = vmul.f32 %v404, %v408
        %v414 = vmul.f32 %v405, %v408
        %v415 = vmul.f32 %v406, %v408
        %v416 = vmul.f32 %v407, %v408
        %v417 = vadd.f32 %v392, %v409
        %v418 = vadd.f32 %v393, %v410
        %v419 = vadd.f32 %v394, %v411
        %v420 = vadd.f32 %v395, %v412
        %v421 = vadd.f32 %v396, %v413
        %v422 = vadd.f32 %v397, %v414
        %v423 = vadd.f32 %v398, %v415
        %v424 = vadd.f32 %v399, %v416
        %v425 = vld [vmem:[%s374 + $0x2] sm:$0xff]
        %v426 = vld [vmem:[%s374 + $0xa] sm:$0xf]
        %v427 = vld [vmem:[%s374 + $0x12] sm:$0xff]
        %v428 = vld [vmem:[%s374 + $0x1a] sm:$0xf]
        %v429 = vld [vmem:[%s374 + $0x22] sm:$0xff]
        %v430 = vld [vmem:[%s374 + $0x2a] sm:$0xf]
        %v431 = vld [vmem:[%s374 + $0x32] sm:$0xff]
        %v432 = vld [vmem:[%s374 + $0x3a] sm:$0xf]
        %v433 = vperm.slane %v253, 2
        %v434 = vmul.f32 %v425, %v433
        %v435 = vmul.f32 %v426, %v433
        %v436 = vmul.f32 %v427, %v433
        %v437 = vmul.f32 %v428, %v433
        %v438 = vmul.f32 %v429, %v433
        %v439 = vmul.f32 %v430, %v433
        %v440 = vmul.f32 %v431, %v433
        %v441 = vmul.f32 %v432, %v433
        %v442 = vadd.f32 %v417, %v434
        %v443 = vadd.f32 %v418, %v435
        %v444 = vadd.f32 %v419, %v436
        %v445 = vadd.f32 %v420, %v437
        %v446 = vadd.f32 %v421, %v438
        %v447 = vadd.f32 %v422, %v439
        %v448 = vadd.f32 %v423, %v440
        %v449 = vadd.f32 %v424, %v441
        %v450 = vld [vmem:[%s374 + $0x3] sm:$0xff]
        %v451 = vld [vmem:[%s374 + $0xb] sm:$0xf]
        %v452 = vld [vmem:[%s374 + $0x13] sm:$0xff]
        %v453 = vld [vmem:[%s374 + $0x1b] sm:$0xf]
        %v454 = vld [vmem:[%s374 + $0x23] sm:$0xff]
        %v455 = vld [vmem:[%s374 + $0x2b] sm:$0xf]
        %v456 = vld [vmem:[%s374 + $0x33] sm:$0xff]
        %v457 = vld [vmem:[%s374 + $0x3b] sm:$0xf]
        %v458 = vperm.slane %v253, 3
        %v459 = vmul.f32 %v450, %v458
        %v460 = vmul.f32 %v451, %v458
        %v461 = vmul.f32 %v452, %v458
        %v462 = vmul.f32 %v453, %v458
        %v463 = vmul.f32 %v454, %v458
        %v464 = vmul.f32 %v455, %v458
        %v465 = vmul.f32 %v456, %v458
        %v466 = vmul.f32 %v457, %v458
        %v467 = vadd.f32 %v442, %v459
        %v468 = vadd.f32 %v443, %v460
        %v469 = vadd.f32 %v444, %v461
        %v470 = vadd.f32 %v445, %v462
        %v471 = vadd.f32 %v446, %v463
        %v472 = vadd.f32 %v447, %v464
        %v473 = vadd.f32 %v448, %v465
        %v474 = vadd.f32 %v449, %v466
        %v475 = vld [vmem:[%s374 + $0x4] sm:$0xff]
        %v476 = vld [vmem:[%s374 + $0xc] sm:$0xf]
        %v477 = vld [vmem:[%s374 + $0x14] sm:$0xff]
        %v478 = vld [vmem:[%s374 + $0x1c] sm:$0xf]
        %v479 = vld [vmem:[%s374 + $0x24] sm:$0xff]
        %v480 = vld [vmem:[%s374 + $0x2c] sm:$0xf]
        %v481 = vld [vmem:[%s374 + $0x34] sm:$0xff]
        %v482 = vld [vmem:[%s374 + $0x3c] sm:$0xf]
        %v483 = vperm.slane %v253, 4
        %v484 = vmul.f32 %v475, %v483
        %v485 = vmul.f32 %v476, %v483
        %v486 = vmul.f32 %v477, %v483
        %v487 = vmul.f32 %v478, %v483
        %v488 = vmul.f32 %v479, %v483
        %v489 = vmul.f32 %v480, %v483
        %v490 = vmul.f32 %v481, %v483
        %v491 = vmul.f32 %v482, %v483
        %v492 = vadd.f32 %v467, %v484
        %v493 = vadd.f32 %v468, %v485
        %v494 = vadd.f32 %v469, %v486
        %v495 = vadd.f32 %v470, %v487
        %v496 = vadd.f32 %v471, %v488
        %v497 = vadd.f32 %v472, %v489
        %v498 = vadd.f32 %v473, %v490
        %v499 = vadd.f32 %v474, %v491
        %s500 = scalar_lea.vmem %s227, 32 [#allocation3]
        %v501 = vld [vmem:[%s500] sm:$0xff]
        %v502 = vld [vmem:[%s500 + $0x8] sm:$0xf]
        %v503 = vld [vmem:[%s500 + $0x10] sm:$0xff]
        %v504 = vld [vmem:[%s500 + $0x18] sm:$0xf]
        %v505 = vld [vmem:[%s500 + $0x20] sm:$0xff]
        %v506 = vld [vmem:[%s500 + $0x28] sm:$0xf]
        %v507 = vld [vmem:[%s500 + $0x30] sm:$0xff]
        %v508 = vld [vmem:[%s500 + $0x38] sm:$0xf]
        %v509 = vperm.slane %v254, 0
        %v510 = vmul.f32 %v501, %v509
        %v511 = vmul.f32 %v502, %v509
        %v512 = vmul.f32 %v503, %v509
        %v513 = vmul.f32 %v504, %v509
        %v514 = vmul.f32 %v505, %v509
        %v515 = vmul.f32 %v506, %v509
        %v516 = vmul.f32 %v507, %v509
        %v517 = vmul.f32 %v508, %v509
        %v518 = vadd.f32 %v492, %v510
        %v519 = vadd.f32 %v493, %v511
        %v520 = vadd.f32 %v494, %v512
        %v521 = vadd.f32 %v495, %v513
        %v522 = vadd.f32 %v496, %v514
        %v523 = vadd.f32 %v497, %v515
        %v524 = vadd.f32 %v498, %v516
        %v525 = vadd.f32 %v499, %v517
        %v526 = vld [vmem:[%s500 + $0x1] sm:$0xff]
        %v527 = vld [vmem:[%s500 + $0x9] sm:$0xf]
        %v528 = vld [vmem:[%s500 + $0x11] sm:$0xff]
        %v529 = vld [vmem:[%s500 + $0x19] sm:$0xf]
        %v530 = vld [vmem:[%s500 + $0x21] sm:$0xff]
        %v531 = vld [vmem:[%s500 + $0x29] sm:$0xf]
        %v532 = vld [vmem:[%s500 + $0x31] sm:$0xff]
        %v533 = vld [vmem:[%s500 + $0x39] sm:$0xf]
        %v534 = vperm.slane %v254, 1
        %v535 = vmul.f32 %v526, %v534
        %v536 = vmul.f32 %v527, %v534
        %v537 = vmul.f32 %v528, %v534
        %v538 = vmul.f32 %v529, %v534
        %v539 = vmul.f32 %v530, %v534
        %v540 = vmul.f32 %v531, %v534
        %v541 = vmul.f32 %v532, %v534
        %v542 = vmul.f32 %v533, %v534
        %v543 = vadd.f32 %v518, %v535
        %v544 = vadd.f32 %v519, %v536
        %v545 = vadd.f32 %v520, %v537
        %v546 = vadd.f32 %v521, %v538
        %v547 = vadd.f32 %v522, %v539
        %v548 = vadd.f32 %v523, %v540
        %v549 = vadd.f32 %v524, %v541
        %v550 = vadd.f32 %v525, %v542
        %v551 = vld [vmem:[%s500 + $0x2] sm:$0xff]
        %v552 = vld [vmem:[%s500 + $0xa] sm:$0xf]
        %v553 = vld [vmem:[%s500 + $0x12] sm:$0xff]
        %v554 = vld [vmem:[%s500 + $0x1a] sm:$0xf]
        %v555 = vld [vmem:[%s500 + $0x22] sm:$0xff]
        %v556 = vld [vmem:[%s500 + $0x2a] sm:$0xf]
        %v557 = vld [vmem:[%s500 + $0x32] sm:$0xff]
        %v558 = vld [vmem:[%s500 + $0x3a] sm:$0xf]
        %v559 = vperm.slane %v254, 2
        %v560 = vmul.f32 %v551, %v559
        %v561 = vmul.f32 %v552, %v559
        %v562 = vmul.f32 %v553, %v559
        %v563 = vmul.f32 %v554, %v559
        %v564 = vmul.f32 %v555, %v559
        %v565 = vmul.f32 %v556, %v559
        %v566 = vmul.f32 %v557, %v559
        %v567 = vmul.f32 %v558, %v559
        %v568 = vadd.f32 %v543, %v560
        %v569 = vadd.f32 %v544, %v561
        %v570 = vadd.f32 %v545, %v562
        %v571 = vadd.f32 %v546, %v563
        %v572 = vadd.f32 %v547, %v564
        %v573 = vadd.f32 %v548, %v565
        %v574 = vadd.f32 %v549, %v566
        %v575 = vadd.f32 %v550, %v567
        %v576 = vld [vmem:[%s500 + $0x3] sm:$0xff]
        %v577 = vld [vmem:[%s500 + $0xb] sm:$0xf]
        %v578 = vld [vmem:[%s500 + $0x13] sm:$0xff]
        %v579 = vld [vmem:[%s500 + $0x1b] sm:$0xf]
        %v580 = vld [vmem:[%s500 + $0x23] sm:$0xff]
        %v581 = vld [vmem:[%s500 + $0x2b] sm:$0xf]
        %v582 = vld [vmem:[%s500 + $0x33] sm:$0xff]
        %v583 = vld [vmem:[%s500 + $0x3b] sm:$0xf]
        %v584 = vperm.slane %v254, 3
        %v585 = vmul.f32 %v576, %v584
        %v586 = vmul.f32 %v577, %v584
        %v587 = vmul.f32 %v578, %v584
        %v588 = vmul.f32 %v579, %v584
        %v589 = vmul.f32 %v580, %v584
        %v590 = vmul.f32 %v581, %v584
        %v591 = vmul.f32 %v582, %v584
        %v592 = vmul.f32 %v583, %v584
        %v593 = vadd.f32 %v568, %v585
        %v594 = vadd.f32 %v569, %v586
        %v595 = vadd.f32 %v570, %v587
        %v596 = vadd.f32 %v571, %v588
        %v597 = vadd.f32 %v572, %v589
        %v598 = vadd.f32 %v573, %v590
        %v599 = vadd.f32 %v574, %v591
        %v600 = vadd.f32 %v575, %v592
        %v601 = vld [vmem:[%s500 + $0x4] sm:$0xff]
        %v602 = vld [vmem:[%s500 + $0xc] sm:$0xf]
        %v603 = vld [vmem:[%s500 + $0x14] sm:$0xff]
        %v604 = vld [vmem:[%s500 + $0x1c] sm:$0xf]
        %v605 = vld [vmem:[%s500 + $0x24] sm:$0xff]
        %v606 = vld [vmem:[%s500 + $0x2c] sm:$0xf]
        %v607 = vld [vmem:[%s500 + $0x34] sm:$0xff]
        %v608 = vld [vmem:[%s500 + $0x3c] sm:$0xf]
        %v609 = vperm.slane %v254, 4
        %v610 = vmul.f32 %v601, %v609
        %v611 = vmul.f32 %v602, %v609
        %v612 = vmul.f32 %v603, %v609
        %v613 = vmul.f32 %v604, %v609
        %v614 = vmul.f32 %v605, %v609
        %v615 = vmul.f32 %v606, %v609
        %v616 = vmul.f32 %v607, %v609
        %v617 = vmul.f32 %v608, %v609
        %v618 = vadd.f32 %v593, %v610
        %v619 = vadd.f32 %v594, %v611
        %v620 = vadd.f32 %v595, %v612
        %v621 = vadd.f32 %v596, %v613
        %v622 = vadd.f32 %v597, %v614
        %v623 = vadd.f32 %v598, %v615
        %v624 = vadd.f32 %v599, %v616
        %v625 = vadd.f32 %v600, %v617
        %s626 = scalar_lea.vmem %s227, 48 [#allocation3]
        %v627 = vld [vmem:[%s626] sm:$0xff]
        %v628 = vld [vmem:[%s626 + $0x8] sm:$0xf]
        %v629 = vld [vmem:[%s626 + $0x10] sm:$0xff]
        %v630 = vld [vmem:[%s626 + $0x18] sm:$0xf]
        %v631 = vld [vmem:[%s626 + $0x20] sm:$0xff]
        %v632 = vld [vmem:[%s626 + $0x28] sm:$0xf]
        %v633 = vld [vmem:[%s626 + $0x30] sm:$0xff]
        %v634 = vld [vmem:[%s626 + $0x38] sm:$0xf]
        %v635 = vperm.slane %v255, 0
        %v636 = vmul.f32 %v627, %v635
        %v637 = vmul.f32 %v628, %v635
        %v638 = vmul.f32 %v629, %v635
        %v639 = vmul.f32 %v630, %v635
        %v640 = vmul.f32 %v631, %v635
        %v641 = vmul.f32 %v632, %v635
        %v642 = vmul.f32 %v633, %v635
        %v643 = vmul.f32 %v634, %v635
        %v644 = vadd.f32 %v618, %v636
        %v645 = vadd.f32 %v619, %v637
        %v646 = vadd.f32 %v620, %v638
        %v647 = vadd.f32 %v621, %v639
        %v648 = vadd.f32 %v622, %v640
        %v649 = vadd.f32 %v623, %v641
        %v650 = vadd.f32 %v624, %v642
        %v651 = vadd.f32 %v625, %v643
        %v652 = vld [vmem:[%s626 + $0x1] sm:$0xff]
        %v653 = vld [vmem:[%s626 + $0x9] sm:$0xf]
        %v654 = vld [vmem:[%s626 + $0x11] sm:$0xff]
        %v655 = vld [vmem:[%s626 + $0x19] sm:$0xf]
        %v656 = vld [vmem:[%s626 + $0x21] sm:$0xff]
        %v657 = vld [vmem:[%s626 + $0x29] sm:$0xf]
        %v658 = vld [vmem:[%s626 + $0x31] sm:$0xff]
        %v659 = vld [vmem:[%s626 + $0x39] sm:$0xf]
        %v660 = vperm.slane %v255, 1
        %v661 = vmul.f32 %v652, %v660
        %v662 = vmul.f32 %v653, %v660
        %v663 = vmul.f32 %v654, %v660
        %v664 = vmul.f32 %v655, %v660
        %v665 = vmul.f32 %v656, %v660
        %v666 = vmul.f32 %v657, %v660
        %v667 = vmul.f32 %v658, %v660
        %v668 = vmul.f32 %v659, %v660
        %v669 = vadd.f32 %v644, %v661
        %v670 = vadd.f32 %v645, %v662
        %v671 = vadd.f32 %v646, %v663
        %v672 = vadd.f32 %v647, %v664
        %v673 = vadd.f32 %v648, %v665
        %v674 = vadd.f32 %v649, %v666
        %v675 = vadd.f32 %v650, %v667
        %v676 = vadd.f32 %v651, %v668
        %v677 = vld [vmem:[%s626 + $0x2] sm:$0xff]
        %v678 = vld [vmem:[%s626 + $0xa] sm:$0xf]
        %v679 = vld [vmem:[%s626 + $0x12] sm:$0xff]
        %v680 = vld [vmem:[%s626 + $0x1a] sm:$0xf]
        %v681 = vld [vmem:[%s626 + $0x22] sm:$0xff]
        %v682 = vld [vmem:[%s626 + $0x2a] sm:$0xf]
        %v683 = vld [vmem:[%s626 + $0x32] sm:$0xff]
        %v684 = vld [vmem:[%s626 + $0x3a] sm:$0xf]
        %v685 = vperm.slane %v255, 2
        %v686 = vmul.f32 %v677, %v685
        %v687 = vmul.f32 %v678, %v685
        %v688 = vmul.f32 %v679, %v685
        %v689 = vmul.f32 %v680, %v685
        %v690 = vmul.f32 %v681, %v685
        %v691 = vmul.f32 %v682, %v685
        %v692 = vmul.f32 %v683, %v685
        %v693 = vmul.f32 %v684, %v685
        %v694 = vadd.f32 %v669, %v686
        %v695 = vadd.f32 %v670, %v687
        %v696 = vadd.f32 %v671, %v688
        %v697 = vadd.f32 %v672, %v689
        %v698 = vadd.f32 %v673, %v690
        %v699 = vadd.f32 %v674, %v691
        %v700 = vadd.f32 %v675, %v692
        %v701 = vadd.f32 %v676, %v693
        %v702 = vld [vmem:[%s626 + $0x3] sm:$0xff]
        %v703 = vld [vmem:[%s626 + $0xb] sm:$0xf]
        %v704 = vld [vmem:[%s626 + $0x13] sm:$0xff]
        %v705 = vld [vmem:[%s626 + $0x1b] sm:$0xf]
        %v706 = vld [vmem:[%s626 + $0x23] sm:$0xff]
        %v707 = vld [vmem:[%s626 + $0x2b] sm:$0xf]
        %v708 = vld [vmem:[%s626 + $0x33] sm:$0xff]
        %v709 = vld [vmem:[%s626 + $0x3b] sm:$0xf]
        %v710 = vperm.slane %v255, 3
        %v711 = vmul.f32 %v702, %v710
        %v712 = vmul.f32 %v703, %v710
        %v713 = vmul.f32 %v704, %v710
        %v714 = vmul.f32 %v705, %v710
        %v715 = vmul.f32 %v706, %v710
        %v716 = vmul.f32 %v707, %v710
        %v717 = vmul.f32 %v708, %v710
        %v718 = vmul.f32 %v709, %v710
        %v719 = vadd.f32 %v694, %v711
        %v720 = vadd.f32 %v695, %v712
        %v721 = vadd.f32 %v696, %v713
        %v722 = vadd.f32 %v697, %v714
        %v723 = vadd.f32 %v698, %v715
        %v724 = vadd.f32 %v699, %v716
        %v725 = vadd.f32 %v700, %v717
        %v726 = vadd.f32 %v701, %v718
        %v727 = vld [vmem:[%s626 + $0x4] sm:$0xff]
        %v728 = vld [vmem:[%s626 + $0xc] sm:$0xf]
        %v729 = vld [vmem:[%s626 + $0x14] sm:$0xff]
        %v730 = vld [vmem:[%s626 + $0x1c] sm:$0xf]
        %v731 = vld [vmem:[%s626 + $0x24] sm:$0xff]
        %v732 = vld [vmem:[%s626 + $0x2c] sm:$0xf]
        %v733 = vld [vmem:[%s626 + $0x34] sm:$0xff]
        %v734 = vld [vmem:[%s626 + $0x3c] sm:$0xf]
        %v735 = vperm.slane %v255, 4
        %v736 = vmul.f32 %v727, %v735
        %v737 = vmul.f32 %v728, %v735
        %v738 = vmul.f32 %v729, %v735
        %v739 = vmul.f32 %v730, %v735
        %v740 = vmul.f32 %v731, %v735
        %v741 = vmul.f32 %v732, %v735
        %v742 = vmul.f32 %v733, %v735
        %v743 = vmul.f32 %v734, %v735
        %v744 = vadd.f32 %v719, %v736
        %v745 = vadd.f32 %v720, %v737
        %v746 = vadd.f32 %v721, %v738
        %v747 = vadd.f32 %v722, %v739
        %v748 = vadd.f32 %v723, %v740
        %v749 = vadd.f32 %v724, %v741
        %v750 = vadd.f32 %v725, %v742
        %v751 = vadd.f32 %v726, %v743
        %s752 = scalar_lea.vmem %s227, 64 [#allocation3]
        %v753 = vld [vmem:[%s752] sm:$0xff]
        %v754 = vld [vmem:[%s752 + $0x8] sm:$0xf]
        %v755 = vld [vmem:[%s752 + $0x10] sm:$0xff]
        %v756 = vld [vmem:[%s752 + $0x18] sm:$0xf]
        %v757 = vld [vmem:[%s752 + $0x20] sm:$0xff]
        %v758 = vld [vmem:[%s752 + $0x28] sm:$0xf]
        %v759 = vld [vmem:[%s752 + $0x30] sm:$0xff]
        %v760 = vld [vmem:[%s752 + $0x38] sm:$0xf]
        %v761 = vperm.slane %v256, 0
        %v762 = vmul.f32 %v753, %v761
        %v763 = vmul.f32 %v754, %v761
        %v764 = vmul.f32 %v755, %v761
        %v765 = vmul.f32 %v756, %v761
        %v766 = vmul.f32 %v757, %v761
        %v767 = vmul.f32 %v758, %v761
        %v768 = vmul.f32 %v759, %v761
        %v769 = vmul.f32 %v760, %v761
        %v770 = vadd.f32 %v744, %v762
        %v771 = vadd.f32 %v745, %v763
        %v772 = vadd.f32 %v746, %v764
        %v773 = vadd.f32 %v747, %v765
        %v774 = vadd.f32 %v748, %v766
        %v775 = vadd.f32 %v749, %v767
        %v776 = vadd.f32 %v750, %v768
        %v777 = vadd.f32 %v751, %v769
        %v778 = vld [vmem:[%s752 + $0x1] sm:$0xff]
        %v779 = vld [vmem:[%s752 + $0x9] sm:$0xf]
        %v780 = vld [vmem:[%s752 + $0x11] sm:$0xff]
        %v781 = vld [vmem:[%s752 + $0x19] sm:$0xf]
        %v782 = vld [vmem:[%s752 + $0x21] sm:$0xff]
        %v783 = vld [vmem:[%s752 + $0x29] sm:$0xf]
        %v784 = vld [vmem:[%s752 + $0x31] sm:$0xff]
        %v785 = vld [vmem:[%s752 + $0x39] sm:$0xf]
        %v786 = vperm.slane %v256, 1
        %v787 = vmul.f32 %v778, %v786
        %v788 = vmul.f32 %v779, %v786
        %v789 = vmul.f32 %v780, %v786
        %v790 = vmul.f32 %v781, %v786
        %v791 = vmul.f32 %v782, %v786
        %v792 = vmul.f32 %v783, %v786
        %v793 = vmul.f32 %v784, %v786
        %v794 = vmul.f32 %v785, %v786
        %v795 = vadd.f32 %v770, %v787
        %v796 = vadd.f32 %v771, %v788
        %v797 = vadd.f32 %v772, %v789
        %v798 = vadd.f32 %v773, %v790
        %v799 = vadd.f32 %v774, %v791
        %v800 = vadd.f32 %v775, %v792
        %v801 = vadd.f32 %v776, %v793
        %v802 = vadd.f32 %v777, %v794
        %v803 = vld [vmem:[%s752 + $0x2] sm:$0xff]
        %v804 = vld [vmem:[%s752 + $0xa] sm:$0xf]
        %v805 = vld [vmem:[%s752 + $0x12] sm:$0xff]
        %v806 = vld [vmem:[%s752 + $0x1a] sm:$0xf]
        %v807 = vld [vmem:[%s752 + $0x22] sm:$0xff]
        %v808 = vld [vmem:[%s752 + $0x2a] sm:$0xf]
        %v809 = vld [vmem:[%s752 + $0x32] sm:$0xff]
        %v810 = vld [vmem:[%s752 + $0x3a] sm:$0xf]
        %v811 = vperm.slane %v256, 2
        %v812 = vmul.f32 %v803, %v811
        %v813 = vmul.f32 %v804, %v811
        %v814 = vmul.f32 %v805, %v811
        %v815 = vmul.f32 %v806, %v811
        %v816 = vmul.f32 %v807, %v811
        %v817 = vmul.f32 %v808, %v811
        %v818 = vmul.f32 %v809, %v811
        %v819 = vmul.f32 %v810, %v811
        %v820 = vadd.f32 %v795, %v812
        %v821 = vadd.f32 %v796, %v813
        %v822 = vadd.f32 %v797, %v814
        %v823 = vadd.f32 %v798, %v815
        %v824 = vadd.f32 %v799, %v816
        %v825 = vadd.f32 %v800, %v817
        %v826 = vadd.f32 %v801, %v818
        %v827 = vadd.f32 %v802, %v819
        %v828 = vld [vmem:[%s752 + $0x3] sm:$0xff]
        %v829 = vld [vmem:[%s752 + $0xb] sm:$0xf]
        %v830 = vld [vmem:[%s752 + $0x13] sm:$0xff]
        %v831 = vld [vmem:[%s752 + $0x1b] sm:$0xf]
        %v832 = vld [vmem:[%s752 + $0x23] sm:$0xff]
        %v833 = vld [vmem:[%s752 + $0x2b] sm:$0xf]
        %v834 = vld [vmem:[%s752 + $0x33] sm:$0xff]
        %v835 = vld [vmem:[%s752 + $0x3b] sm:$0xf]
        %v836 = vperm.slane %v256, 3
        %v837 = vmul.f32 %v828, %v836
        %v838 = vmul.f32 %v829, %v836
        %v839 = vmul.f32 %v830, %v836
        %v840 = vmul.f32 %v831, %v836
        %v841 = vmul.f32 %v832, %v836
        %v842 = vmul.f32 %v833, %v836
        %v843 = vmul.f32 %v834, %v836
        %v844 = vmul.f32 %v835, %v836
        %v845 = vadd.f32 %v820, %v837
        %v846 = vadd.f32 %v821, %v838
        %v847 = vadd.f32 %v822, %v839
        %v848 = vadd.f32 %v823, %v840
        %v849 = vadd.f32 %v824, %v841
        %v850 = vadd.f32 %v825, %v842
        %v851 = vadd.f32 %v826, %v843
        %v852 = vadd.f32 %v827, %v844
        %v853 = vld [vmem:[%s752 + $0x4] sm:$0xff]
        %v854 = vld [vmem:[%s752 + $0xc] sm:$0xf]
        %v855 = vld [vmem:[%s752 + $0x14] sm:$0xff]
        %v856 = vld [vmem:[%s752 + $0x1c] sm:$0xf]
        %v857 = vld [vmem:[%s752 + $0x24] sm:$0xff]
        %v858 = vld [vmem:[%s752 + $0x2c] sm:$0xf]
        %v859 = vld [vmem:[%s752 + $0x34] sm:$0xff]
        %v860 = vld [vmem:[%s752 + $0x3c] sm:$0xf]
        %v861 = vperm.slane %v256, 4
        %v862 = vmul.f32 %v853, %v861
        %v863 = vmul.f32 %v854, %v861
        %v864 = vmul.f32 %v855, %v861
        %v865 = vmul.f32 %v856, %v861
        %v866 = vmul.f32 %v857, %v861
        %v867 = vmul.f32 %v858, %v861
        %v868 = vmul.f32 %v859, %v861
        %v869 = vmul.f32 %v860, %v861
        %v870 = vadd.f32 %v845, %v862
        %v871 = vadd.f32 %v846, %v863
        %v872 = vadd.f32 %v847, %v864
        %v873 = vadd.f32 %v848, %v865
        %v874 = vadd.f32 %v849, %v866
        %v875 = vadd.f32 %v850, %v867
        %v876 = vadd.f32 %v851, %v868
        %v877 = vadd.f32 %v852, %v869
        %878 = vst [vmem:[%s251] sm:$0xff] %v870
        %879 = vst [vmem:[%s251 + $0x8] sm:$0xf] %v871
        %880 = vst [vmem:[%s251 + $0x10] sm:$0xff] %v872
        %881 = vst [vmem:[%s251 + $0x18] sm:$0xf] %v873
        %882 = vst [vmem:[%s251 + $0x20] sm:$0xff] %v874
        %883 = vst [vmem:[%s251 + $0x28] sm:$0xf] %v875
        %884 = vst [vmem:[%s251 + $0x30] sm:$0xff] %v876
        %885 = vst [vmem:[%s251 + $0x38] sm:$0xf] %v877
        %v886 = vld [vmem:[%s752] sm:$0xff]
        %v887 = vld [vmem:[%s752 + $0x8] sm:$0xf]
        %v888 = vld [vmem:[%s752 + $0x10] sm:$0xff]
        %v889 = vld [vmem:[%s752 + $0x18] sm:$0xf]
        %v890 = vld [vmem:[%s752 + $0x20] sm:$0xff]
        %v891 = vld [vmem:[%s752 + $0x28] sm:$0xf]
        %v892 = vld [vmem:[%s752 + $0x30] sm:$0xff]
        %v893 = vld [vmem:[%s752 + $0x38] sm:$0xf]
        %v894 = vmul.f32 %v886, %v265
        %v895 = vmul.f32 %v887, %v265
        %v896 = vmul.f32 %v888, %v265
        %v897 = vmul.f32 %v889, %v265
        %v898 = vmul.f32 %v890, %v265
        %v899 = vmul.f32 %v891, %v265
        %v900 = vmul.f32 %v892, %v265
        %v901 = vmul.f32 %v893, %v265
        %v902 = vld [vmem:[%s752 + $0x1] sm:$0xff]
        %v903 = vld [vmem:[%s752 + $0x9] sm:$0xf]
        %v904 = vld [vmem:[%s752 + $0x11] sm:$0xff]
        %v905 = vld [vmem:[%s752 + $0x19] sm:$0xf]
        %v906 = vld [vmem:[%s752 + $0x21] sm:$0xff]
        %v907 = vld [vmem:[%s752 + $0x29] sm:$0xf]
        %v908 = vld [vmem:[%s752 + $0x31] sm:$0xff]
        %v909 = vld [vmem:[%s752 + $0x39] sm:$0xf]
        %v910 = vmul.f32 %v902, %v282
        %v911 = vmul.f32 %v903, %v282
        %v912 = vmul.f32 %v904, %v282
        %v913 = vmul.f32 %v905, %v282
        %v914 = vmul.f32 %v906, %v282
        %v915 = vmul.f32 %v907, %v282
        %v916 = vmul.f32 %v908, %v282
        %v917 = vmul.f32 %v909, %v282
        %v918 = vadd.f32 %v894, %v910
        %v919 = vadd.f32 %v895, %v911
        %v920 = vadd.f32 %v896, %v912
        %v921 = vadd.f32 %v897, %v913
        %v922 = vadd.f32 %v898, %v914
        %v923 = vadd.f32 %v899, %v915
        %v924 = vadd.f32 %v900, %v916
        %v925 = vadd.f32 %v901, %v917
        %v926 = vld [vmem:[%s752 + $0x2] sm:$0xff]
        %v927 = vld [vmem:[%s752 + $0xa] sm:$0xf]
        %v928 = vld [vmem:[%s752 + $0x12] sm:$0xff]
        %v929 = vld [vmem:[%s752 + $0x1a] sm:$0xf]
        %v930 = vld [vmem:[%s752 + $0x22] sm:$0xff]
        %v931 = vld [vmem:[%s752 + $0x2a] sm:$0xf]
        %v932 = vld [vmem:[%s752 + $0x32] sm:$0xff]
        %v933 = vld [vmem:[%s752 + $0x3a] sm:$0xf]
        %v934 = vmul.f32 %v926, %v307
        %v935 = vmul.f32 %v927, %v307
        %v936 = vmul.f32 %v928, %v307
        %v937 = vmul.f32 %v929, %v307
        %v938 = vmul.f32 %v930, %v307
        %v939 = vmul.f32 %v931, %v307
        %v940 = vmul.f32 %v932, %v307
        %v941 = vmul.f32 %v933, %v307
        %v942 = vadd.f32 %v918, %v934
        %v943 = vadd.f32 %v919, %v935
        %v944 = vadd.f32 %v920, %v936
        %v945 = vadd.f32 %v921, %v937
        %v946 = vadd.f32 %v922, %v938
        %v947 = vadd.f32 %v923, %v939
        %v948 = vadd.f32 %v924, %v940
        %v949 = vadd.f32 %v925, %v941
        %v950 = vld [vmem:[%s752 + $0x3] sm:$0xff]
        %v951 = vld [vmem:[%s752 + $0xb] sm:$0xf]
        %v952 = vld [vmem:[%s752 + $0x13] sm:$0xff]
        %v953 = vld [vmem:[%s752 + $0x1b] sm:$0xf]
        %v954 = vld [vmem:[%s752 + $0x23] sm:$0xff]
        %v955 = vld [vmem:[%s752 + $0x2b] sm:$0xf]
        %v956 = vld [vmem:[%s752 + $0x33] sm:$0xff]
        %v957 = vld [vmem:[%s752 + $0x3b] sm:$0xf]
        %v958 = vmul.f32 %v950, %v332
        %v959 = vmul.f32 %v951, %v332
        %v960 = vmul.f32 %v952, %v332
        %v961 = vmul.f32 %v953, %v332
        %v962 = vmul.f32 %v954, %v332
        %v963 = vmul.f32 %v955, %v332
        %v964 = vmul.f32 %v956, %v332
        %v965 = vmul.f32 %v957, %v332
        %v966 = vadd.f32 %v942, %v958
        %v967 = vadd.f32 %v943, %v959
        %v968 = vadd.f32 %v944, %v960
        %v969 = vadd.f32 %v945, %v961
        %v970 = vadd.f32 %v946, %v962
        %v971 = vadd.f32 %v947, %v963
        %v972 = vadd.f32 %v948, %v964
        %v973 = vadd.f32 %v949, %v965
        %v974 = vld [vmem:[%s752 + $0x4] sm:$0xff]
        %v975 = vld [vmem:[%s752 + $0xc] sm:$0xf]
        %v976 = vld [vmem:[%s752 + $0x14] sm:$0xff]
        %v977 = vld [vmem:[%s752 + $0x1c] sm:$0xf]
        %v978 = vld [vmem:[%s752 + $0x24] sm:$0xff]
        %v979 = vld [vmem:[%s752 + $0x2c] sm:$0xf]
        %v980 = vld [vmem:[%s752 + $0x34] sm:$0xff]
        %v981 = vld [vmem:[%s752 + $0x3c] sm:$0xf]
        %v982 = vmul.f32 %v974, %v357
        %v983 = vmul.f32 %v975, %v357
        %v984 = vmul.f32 %v976, %v357
        %v985 = vmul.f32 %v977, %v357
        %v986 = vmul.f32 %v978, %v357
        %v987 = vmul.f32 %v979, %v357
        %v988 = vmul.f32 %v980, %v357
        %v989 = vmul.f32 %v981, %v357
        %v990 = vadd.f32 %v966, %v982
        %v991 = vadd.f32 %v967, %v983
        %v992 = vadd.f32 %v968, %v984
        %v993 = vadd.f32 %v969, %v985
        %v994 = vadd.f32 %v970, %v986
        %v995 = vadd.f32 %v971, %v987
        %v996 = vadd.f32 %v972, %v988
        %v997 = vadd.f32 %v973, %v989
        %s998 = scalar_lea.vmem %s227, 80 [#allocation3]
        %v999 = vld [vmem:[%s998] sm:$0xff]
        %v1000 = vld [vmem:[%s998 + $0x8] sm:$0xf]
        %v1001 = vld [vmem:[%s998 + $0x10] sm:$0xff]
        %v1002 = vld [vmem:[%s998 + $0x18] sm:$0xf]
        %v1003 = vld [vmem:[%s998 + $0x20] sm:$0xff]
        %v1004 = vld [vmem:[%s998 + $0x28] sm:$0xf]
        %v1005 = vld [vmem:[%s998 + $0x30] sm:$0xff]
        %v1006 = vld [vmem:[%s998 + $0x38] sm:$0xf]
        %v1007 = vmul.f32 %v999, %v383
        %v1008 = vmul.f32 %v1000, %v383
        %v1009 = vmul.f32 %v1001, %v383
        %v1010 = vmul.f32 %v1002, %v383
        %v1011 = vmul.f32 %v1003, %v383
        %v1012 = vmul.f32 %v1004, %v383
        %v1013 = vmul.f32 %v1005, %v383
        %v1014 = vmul.f32 %v1006, %v383
        %v1015 = vadd.f32 %v990, %v1007
        %v1016 = vadd.f32 %v991, %v1008
        %v1017 = vadd.f32 %v992, %v1009
        %v1018 = vadd.f32 %v993, %v1010
        %v1019 = vadd.f32 %v994, %v1011
        %v1020 = vadd.f32 %v995, %v1012
        %v1021 = vadd.f32 %v996, %v1013
        %v1022 = vadd.f32 %v997, %v1014
        %v1023 = vld [vmem:[%s998 + $0x1] sm:$0xff]
        %v1024 = vld [vmem:[%s998 + $0x9] sm:$0xf]
        %v1025 = vld [vmem:[%s998 + $0x11] sm:$0xff]
        %v1026 = vld [vmem:[%s998 + $0x19] sm:$0xf]
        %v1027 = vld [vmem:[%s998 + $0x21] sm:$0xff]
        %v1028 = vld [vmem:[%s998 + $0x29] sm:$0xf]
        %v1029 = vld [vmem:[%s998 + $0x31] sm:$0xff]
        %v1030 = vld [vmem:[%s998 + $0x39] sm:$0xf]
        %v1031 = vmul.f32 %v1023, %v408
        %v1032 = vmul.f32 %v1024, %v408
        %v1033 = vmul.f32 %v1025, %v408
        %v1034 = vmul.f32 %v1026, %v408
        %v1035 = vmul.f32 %v1027, %v408
        %v1036 = vmul.f32 %v1028, %v408
        %v1037 = vmul.f32 %v1029, %v408
        %v1038 = vmul.f32 %v1030, %v408
        %v1039 = vadd.f32 %v1015, %v1031
        %v1040 = vadd.f32 %v1016, %v1032
        %v1041 = vadd.f32 %v1017, %v1033
        %v1042 = vadd.f32 %v1018, %v1034
        %v1043 = vadd.f32 %v1019, %v1035
        %v1044 = vadd.f32 %v1020, %v1036
        %v1045 = vadd.f32 %v1021, %v1037
        %v1046 = vadd.f32 %v1022, %v1038
        %v1047 = vld [vmem:[%s998 + $0x2] sm:$0xff]
        %v1048 = vld [vmem:[%s998 + $0xa] sm:$0xf]
        %v1049 = vld [vmem:[%s998 + $0x12] sm:$0xff]
        %v1050 = vld [vmem:[%s998 + $0x1a] sm:$0xf]
        %v1051 = vld [vmem:[%s998 + $0x22] sm:$0xff]
        %v1052 = vld [vmem:[%s998 + $0x2a] sm:$0xf]
        %v1053 = vld [vmem:[%s998 + $0x32] sm:$0xff]
        %v1054 = vld [vmem:[%s998 + $0x3a] sm:$0xf]
        %v1055 = vmul.f32 %v1047, %v433
        %v1056 = vmul.f32 %v1048, %v433
        %v1057 = vmul.f32 %v1049, %v433
        %v1058 = vmul.f32 %v1050, %v433
        %v1059 = vmul.f32 %v1051, %v433
        %v1060 = vmul.f32 %v1052, %v433
        %v1061 = vmul.f32 %v1053, %v433
        %v1062 = vmul.f32 %v1054, %v433
        %v1063 = vadd.f32 %v1039, %v1055
        %v1064 = vadd.f32 %v1040, %v1056
        %v1065 = vadd.f32 %v1041, %v1057
        %v1066 = vadd.f32 %v1042, %v1058
        %v1067 = vadd.f32 %v1043, %v1059
        %v1068 = vadd.f32 %v1044, %v1060
        %v1069 = vadd.f32 %v1045, %v1061
        %v1070 = vadd.f32 %v1046, %v1062
        %v1071 = vld [vmem:[%s998 + $0x3] sm:$0xff]
        %v1072 = vld [vmem:[%s998 + $0xb] sm:$0xf]
        %v1073 = vld [vmem:[%s998 + $0x13] sm:$0xff]
        %v1074 = vld [vmem:[%s998 + $0x1b] sm:$0xf]
        %v1075 = vld [vmem:[%s998 + $0x23] sm:$0xff]
        %v1076 = vld [vmem:[%s998 + $0x2b] sm:$0xf]
        %v1077 = vld [vmem:[%s998 + $0x33] sm:$0xff]
        %v1078 = vld [vmem:[%s998 + $0x3b] sm:$0xf]
        %v1079 = vmul.f32 %v1071, %v458
        %v1080 = vmul.f32 %v1072, %v458
        %v1081 = vmul.f32 %v1073, %v458
        %v1082 = vmul.f32 %v1074, %v458
        %v1083 = vmul.f32 %v1075, %v458
        %v1084 = vmul.f32 %v1076, %v458
        %v1085 = vmul.f32 %v1077, %v458
        %v1086 = vmul.f32 %v1078, %v458
        %v1087 = vadd.f32 %v1063, %v1079
        %v1088 = vadd.f32 %v1064, %v1080
        %v1089 = vadd.f32 %v1065, %v1081
        %v1090 = vadd.f32 %v1066, %v1082
        %v1091 = vadd.f32 %v1067, %v1083
        %v1092 = vadd.f32 %v1068, %v1084
        %v1093 = vadd.f32 %v1069, %v1085
        %v1094 = vadd.f32 %v1070, %v1086
        %v1095 = vld [vmem:[%s998 + $0x4] sm:$0xff]
        %v1096 = vld [vmem:[%s998 + $0xc] sm:$0xf]
        %v1097 = vld [vmem:[%s998 + $0x14] sm:$0xff]
        %v1098 = vld [vmem:[%s998 + $0x1c] sm:$0xf]
        %v1099 = vld [vmem:[%s998 + $0x24] sm:$0xff]
        %v1100 = vld [vmem:[%s998 + $0x2c] sm:$0xf]
        %v1101 = vld [vmem:[%s998 + $0x34] sm:$0xff]
        %v1102 = vld [vmem:[%s998 + $0x3c] sm:$0xf]
        %v1103 = vmul.f32 %v1095, %v483
        %v1104 = vmul.f32 %v1096, %v483
        %v1105 = vmul.f32 %v1097, %v483
        %v1106 = vmul.f32 %v1098, %v483
        %v1107 = vmul.f32 %v1099, %v483
        %v1108 = vmul.f32 %v1100, %v483
        %v1109 = vmul.f32 %v1101, %v483
        %v1110 = vmul.f32 %v1102, %v483
        %v1111 = vadd.f32 %v1087, %v1103
        %v1112 = vadd.f32 %v1088, %v1104
        %v1113 = vadd.f32 %v1089, %v1105
        %v1114 = vadd.f32 %v1090, %v1106
        %v1115 = vadd.f32 %v1091, %v1107
        %v1116 = vadd.f32 %v1092, %v1108
        %v1117 = vadd.f32 %v1093, %v1109
        %v1118 = vadd.f32 %v1094, %v1110
        %s1119 = scalar_lea.vmem %s227, 96 [#allocation3]
        %v1120 = vld [vmem:[%s1119] sm:$0xff]
        %v1121 = vld [vmem:[%s1119 + $0x8] sm:$0xf]
        %v1122 = vld [vmem:[%s1119 + $0x10] sm:$0xff]
        %v1123 = vld [vmem:[%s1119 + $0x18] sm:$0xf]
        %v1124 = vld [vmem:[%s1119 + $0x20] sm:$0xff]
        %v1125 = vld [vmem:[%s1119 + $0x28] sm:$0xf]
        %v1126 = vld [vmem:[%s1119 + $0x30] sm:$0xff]
        %v1127 = vld [vmem:[%s1119 + $0x38] sm:$0xf]
        %v1128 = vmul.f32 %v1120, %v509
        %v1129 = vmul.f32 %v1121, %v509
        %v1130 = vmul.f32 %v1122, %v509
        %v1131 = vmul.f32 %v1123, %v509
        %v1132 = vmul.f32 %v1124, %v509
        %v1133 = vmul.f32 %v1125, %v509
        %v1134 = vmul.f32 %v1126, %v509
        %v1135 = vmul.f32 %v1127, %v509
        %v1136 = vadd.f32 %v1111, %v1128
        %v1137 = vadd.f32 %v1112, %v1129
        %v1138 = vadd.f32 %v1113, %v1130
        %v1139 = vadd.f32 %v1114, %v1131
        %v1140 = vadd.f32 %v1115, %v1132
        %v1141 = vadd.f32 %v1116, %v1133
        %v1142 = vadd.f32 %v1117, %v1134
        %v1143 = vadd.f32 %v1118, %v1135
        %v1144 = vld [vmem:[%s1119 + $0x1] sm:$0xff]
        %v1145 = vld [vmem:[%s1119 + $0x9] sm:$0xf]
        %v1146 = vld [vmem:[%s1119 + $0x11] sm:$0xff]
        %v1147 = vld [vmem:[%s1119 + $0x19] sm:$0xf]
        %v1148 = vld [vmem:[%s1119 + $0x21] sm:$0xff]
        %v1149 = vld [vmem:[%s1119 + $0x29] sm:$0xf]
        %v1150 = vld [vmem:[%s1119 + $0x31] sm:$0xff]
        %v1151 = vld [vmem:[%s1119 + $0x39] sm:$0xf]
        %v1152 = vmul.f32 %v1144, %v534
        %v1153 = vmul.f32 %v1145, %v534
        %v1154 = vmul.f32 %v1146, %v534
        %v1155 = vmul.f32 %v1147, %v534
        %v1156 = vmul.f32 %v1148, %v534
        %v1157 = vmul.f32 %v1149, %v534
        %v1158 = vmul.f32 %v1150, %v534
        %v1159 = vmul.f32 %v1151, %v534
        %v1160 = vadd.f32 %v1136, %v1152
        %v1161 = vadd.f32 %v1137, %v1153
        %v1162 = vadd.f32 %v1138, %v1154
        %v1163 = vadd.f32 %v1139, %v1155
        %v1164 = vadd.f32 %v1140, %v1156
        %v1165 = vadd.f32 %v1141, %v1157
        %v1166 = vadd.f32 %v1142, %v1158
        %v1167 = vadd.f32 %v1143, %v1159
        %v1168 = vld [vmem:[%s1119 + $0x2] sm:$0xff]
        %v1169 = vld [vmem:[%s1119 + $0xa] sm:$0xf]
        %v1170 = vld [vmem:[%s1119 + $0x12] sm:$0xff]
        %v1171 = vld [vmem:[%s1119 + $0x1a] sm:$0xf]
        %v1172 = vld [vmem:[%s1119 + $0x22] sm:$0xff]
        %v1173 = vld [vmem:[%s1119 + $0x2a] sm:$0xf]
        %v1174 = vld [vmem:[%s1119 + $0x32] sm:$0xff]
        %v1175 = vld [vmem:[%s1119 + $0x3a] sm:$0xf]
        %v1176 = vmul.f32 %v1168, %v559
        %v1177 = vmul.f32 %v1169, %v559
        %v1178 = vmul.f32 %v1170, %v559
        %v1179 = vmul.f32 %v1171, %v559
        %v1180 = vmul.f32 %v1172, %v559
        %v1181 = vmul.f32 %v1173, %v559
        %v1182 = vmul.f32 %v1174, %v559
        %v1183 = vmul.f32 %v1175, %v559
        %v1184 = vadd.f32 %v1160, %v1176
        %v1185 = vadd.f32 %v1161, %v1177
        %v1186 = vadd.f32 %v1162, %v1178
        %v1187 = vadd.f32 %v1163, %v1179
        %v1188 = vadd.f32 %v1164, %v1180
        %v1189 = vadd.f32 %v1165, %v1181
        %v1190 = vadd.f32 %v1166, %v1182
        %v1191 = vadd.f32 %v1167, %v1183
        %v1192 = vld [vmem:[%s1119 + $0x3] sm:$0xff]
        %v1193 = vld [vmem:[%s1119 + $0xb] sm:$0xf]
        %v1194 = vld [vmem:[%s1119 + $0x13] sm:$0xff]
        %v1195 = vld [vmem:[%s1119 + $0x1b] sm:$0xf]
        %v1196 = vld [vmem:[%s1119 + $0x23] sm:$0xff]
        %v1197 = vld [vmem:[%s1119 + $0x2b] sm:$0xf]
        %v1198 = vld [vmem:[%s1119 + $0x33] sm:$0xff]
        %v1199 = vld [vmem:[%s1119 + $0x3b] sm:$0xf]
        %v1200 = vmul.f32 %v1192, %v584
        %v1201 = vmul.f32 %v1193, %v584
        %v1202 = vmul.f32 %v1194, %v584
        %v1203 = vmul.f32 %v1195, %v584
        %v1204 = vmul.f32 %v1196, %v584
        %v1205 = vmul.f32 %v1197, %v584
        %v1206 = vmul.f32 %v1198, %v584
        %v1207 = vmul.f32 %v1199, %v584
        %v1208 = vadd.f32 %v1184, %v1200
        %v1209 = vadd.f32 %v1185, %v1201
        %v1210 = vadd.f32 %v1186, %v1202
        %v1211 = vadd.f32 %v1187, %v1203
        %v1212 = vadd.f32 %v1188, %v1204
        %v1213 = vadd.f32 %v1189, %v1205
        %v1214 = vadd.f32 %v1190, %v1206
        %v1215 = vadd.f32 %v1191, %v1207
        %v1216 = vld [vmem:[%s1119 + $0x4] sm:$0xff]
        %v1217 = vld [vmem:[%s1119 + $0xc] sm:$0xf]
        %v1218 = vld [vmem:[%s1119 + $0x14] sm:$0xff]
        %v1219 = vld [vmem:[%s1119 + $0x1c] sm:$0xf]
        %v1220 = vld [vmem:[%s1119 + $0x24] sm:$0xff]
        %v1221 = vld [vmem:[%s1119 + $0x2c] sm:$0xf]
        %v1222 = vld [vmem:[%s1119 + $0x34] sm:$0xff]
        %v1223 = vld [vmem:[%s1119 + $0x3c] sm:$0xf]
        %v1224 = vmul.f32 %v1216, %v609
        %v1225 = vmul.f32 %v1217, %v609
        %v1226 = vmul.f32 %v1218, %v609
        %v1227 = vmul.f32 %v1219, %v609
        %v1228 = vmul.f32 %v1220, %v609
        %v1229 = vmul.f32 %v1221, %v609
        %v1230 = vmul.f32 %v1222, %v609
        %v1231 = vmul.f32 %v1223, %v609
        %v1232 = vadd.f32 %v1208, %v1224
        %v1233 = vadd.f32 %v1209, %v1225
        %v1234 = vadd.f32 %v1210, %v1226
        %v1235 = vadd.f32 %v1211, %v1227
        %v1236 = vadd.f32 %v1212, %v1228
        %v1237 = vadd.f32 %v1213, %v1229
        %v1238 = vadd.f32 %v1214, %v1230
        %v1239 = vadd.f32 %v1215, %v1231
        %s1240 = scalar_lea.vmem %s227, 112 [#allocation3]
        %v1241 = vld [vmem:[%s1240] sm:$0xff]
        %v1242 = vld [vmem:[%s1240 + $0x8] sm:$0xf]
        %v1243 = vld [vmem:[%s1240 + $0x10] sm:$0xff]
        %v1244 = vld [vmem:[%s1240 + $0x18] sm:$0xf]
        %v1245 = vld [vmem:[%s1240 + $0x20] sm:$0xff]
        %v1246 = vld [vmem:[%s1240 + $0x28] sm:$0xf]
        %v1247 = vld [vmem:[%s1240 + $0x30] sm:$0xff]
        %v1248 = vld [vmem:[%s1240 + $0x38] sm:$0xf]
        %v1249 = vmul.f32 %v1241, %v635
        %v1250 = vmul.f32 %v1242, %v635
        %v1251 = vmul.f32 %v1243, %v635
        %v1252 = vmul.f32 %v1244, %v635
        %v1253 = vmul.f32 %v1245, %v635
        %v1254 = vmul.f32 %v1246, %v635
        %v1255 = vmul.f32 %v1247, %v635
        %v1256 = vmul.f32 %v1248, %v635
        %v1257 = vadd.f32 %v1232, %v1249
        %v1258 = vadd.f32 %v1233, %v1250
        %v1259 = vadd.f32 %v1234, %v1251
        %v1260 = vadd.f32 %v1235, %v1252
        %v1261 = vadd.f32 %v1236, %v1253
        %v1262 = vadd.f32 %v1237, %v1254
        %v1263 = vadd.f32 %v1238, %v1255
        %v1264 = vadd.f32 %v1239, %v1256
        %v1265 = vld [vmem:[%s1240 + $0x1] sm:$0xff]
        %v1266 = vld [vmem:[%s1240 + $0x9] sm:$0xf]
        %v1267 = vld [vmem:[%s1240 + $0x11] sm:$0xff]
        %v1268 = vld [vmem:[%s1240 + $0x19] sm:$0xf]
        %v1269 = vld [vmem:[%s1240 + $0x21] sm:$0xff]
        %v1270 = vld [vmem:[%s1240 + $0x29] sm:$0xf]
        %v1271 = vld [vmem:[%s1240 + $0x31] sm:$0xff]
        %v1272 = vld [vmem:[%s1240 + $0x39] sm:$0xf]
        %v1273 = vmul.f32 %v1265, %v660
        %v1274 = vmul.f32 %v1266, %v660
        %v1275 = vmul.f32 %v1267, %v660
        %v1276 = vmul.f32 %v1268, %v660
        %v1277 = vmul.f32 %v1269, %v660
        %v1278 = vmul.f32 %v1270, %v660
        %v1279 = vmul.f32 %v1271, %v660
        %v1280 = vmul.f32 %v1272, %v660
        %v1281 = vadd.f32 %v1257, %v1273
        %v1282 = vadd.f32 %v1258, %v1274
        %v1283 = vadd.f32 %v1259, %v1275
        %v1284 = vadd.f32 %v1260, %v1276
        %v1285 = vadd.f32 %v1261, %v1277
        %v1286 = vadd.f32 %v1262, %v1278
        %v1287 = vadd.f32 %v1263, %v1279
        %v1288 = vadd.f32 %v1264, %v1280
        %v1289 = vld [vmem:[%s1240 + $0x2] sm:$0xff]
        %v1290 = vld [vmem:[%s1240 + $0xa] sm:$0xf]
        %v1291 = vld [vmem:[%s1240 + $0x12] sm:$0xff]
        %v1292 = vld [vmem:[%s1240 + $0x1a] sm:$0xf]
        %v1293 = vld [vmem:[%s1240 + $0x22] sm:$0xff]
        %v1294 = vld [vmem:[%s1240 + $0x2a] sm:$0xf]
        %v1295 = vld [vmem:[%s1240 + $0x32] sm:$0xff]
        %v1296 = vld [vmem:[%s1240 + $0x3a] sm:$0xf]
        %v1297 = vmul.f32 %v1289, %v685
        %v1298 = vmul.f32 %v1290, %v685
        %v1299 = vmul.f32 %v1291, %v685
        %v1300 = vmul.f32 %v1292, %v685
        %v1301 = vmul.f32 %v1293, %v685
        %v1302 = vmul.f32 %v1294, %v685
        %v1303 = vmul.f32 %v1295, %v685
        %v1304 = vmul.f32 %v1296, %v685
        %v1305 = vadd.f32 %v1281, %v1297
        %v1306 = vadd.f32 %v1282, %v1298
        %v1307 = vadd.f32 %v1283, %v1299
        %v1308 = vadd.f32 %v1284, %v1300
        %v1309 = vadd.f32 %v1285, %v1301
        %v1310 = vadd.f32 %v1286, %v1302
        %v1311 = vadd.f32 %v1287, %v1303
        %v1312 = vadd.f32 %v1288, %v1304
        %v1313 = vld [vmem:[%s1240 + $0x3] sm:$0xff]
        %v1314 = vld [vmem:[%s1240 + $0xb] sm:$0xf]
        %v1315 = vld [vmem:[%s1240 + $0x13] sm:$0xff]
        %v1316 = vld [vmem:[%s1240 + $0x1b] sm:$0xf]
        %v1317 = vld [vmem:[%s1240 + $0x23] sm:$0xff]
        %v1318 = vld [vmem:[%s1240 + $0x2b] sm:$0xf]
        %v1319 = vld [vmem:[%s1240 + $0x33] sm:$0xff]
        %v1320 = vld [vmem:[%s1240 + $0x3b] sm:$0xf]
        %v1321 = vmul.f32 %v1313, %v710
        %v1322 = vmul.f32 %v1314, %v710
        %v1323 = vmul.f32 %v1315, %v710
        %v1324 = vmul.f32 %v1316, %v710
        %v1325 = vmul.f32 %v1317, %v710
        %v1326 = vmul.f32 %v1318, %v710
        %v1327 = vmul.f32 %v1319, %v710
        %v1328 = vmul.f32 %v1320, %v710
        %v1329 = vadd.f32 %v1305, %v1321
        %v1330 = vadd.f32 %v1306, %v1322
        %v1331 = vadd.f32 %v1307, %v1323
        %v1332 = vadd.f32 %v1308, %v1324
        %v1333 = vadd.f32 %v1309, %v1325
        %v1334 = vadd.f32 %v1310, %v1326
        %v1335 = vadd.f32 %v1311, %v1327
        %v1336 = vadd.f32 %v1312, %v1328
        %v1337 = vld [vmem:[%s1240 + $0x4] sm:$0xff]
        %v1338 = vld [vmem:[%s1240 + $0xc] sm:$0xf]
        %v1339 = vld [vmem:[%s1240 + $0x14] sm:$0xff]
        %v1340 = vld [vmem:[%s1240 + $0x1c] sm:$0xf]
        %v1341 = vld [vmem:[%s1240 + $0x24] sm:$0xff]
        %v1342 = vld [vmem:[%s1240 + $0x2c] sm:$0xf]
        %v1343 = vld [vmem:[%s1240 + $0x34] sm:$0xff]
        %v1344 = vld [vmem:[%s1240 + $0x3c] sm:$0xf]
        %v1345 = vmul.f32 %v1337, %v735
        %v1346 = vmul.f32 %v1338, %v735
        %v1347 = vmul.f32 %v1339, %v735
        %v1348 = vmul.f32 %v1340, %v735
        %v1349 = vmul.f32 %v1341, %v735
        %v1350 = vmul.f32 %v1342, %v735
        %v1351 = vmul.f32 %v1343, %v735
        %v1352 = vmul.f32 %v1344, %v735
        %v1353 = vadd.f32 %v1329, %v1345
        %v1354 = vadd.f32 %v1330, %v1346
        %v1355 = vadd.f32 %v1331, %v1347
        %v1356 = vadd.f32 %v1332, %v1348
        %v1357 = vadd.f32 %v1333, %v1349
        %v1358 = vadd.f32 %v1334, %v1350
        %v1359 = vadd.f32 %v1335, %v1351
        %v1360 = vadd.f32 %v1336, %v1352
        %s1361 = scalar_lea.vmem %s227, 128 [#allocation3]
        %v1362 = vld [vmem:[%s1361] sm:$0xff]
        %v1363 = vld [vmem:[%s1361 + $0x8] sm:$0xf]
        %v1364 = vld [vmem:[%s1361 + $0x10] sm:$0xff]
        %v1365 = vld [vmem:[%s1361 + $0x18] sm:$0xf]
        %v1366 = vld [vmem:[%s1361 + $0x20] sm:$0xff]
        %v1367 = vld [vmem:[%s1361 + $0x28] sm:$0xf]
        %v1368 = vld [vmem:[%s1361 + $0x30] sm:$0xff]
        %v1369 = vld [vmem:[%s1361 + $0x38] sm:$0xf]
        %v1370 = vmul.f32 %v1362, %v761
        %v1371 = vmul.f32 %v1363, %v761
        %v1372 = vmul.f32 %v1364, %v761
        %v1373 = vmul.f32 %v1365, %v761
        %v1374 = vmul.f32 %v1366, %v761
        %v1375 = vmul.f32 %v1367, %v761
        %v1376 = vmul.f32 %v1368, %v761
        %v1377 = vmul.f32 %v1369, %v761
        %v1378 = vadd.f32 %v1353, %v1370
        %v1379 = vadd.f32 %v1354, %v1371
        %v1380 = vadd.f32 %v1355, %v1372
        %v1381 = vadd.f32 %v1356, %v1373
        %v1382 = vadd.f32 %v1357, %v1374
        %v1383 = vadd.f32 %v1358, %v1375
        %v1384 = vadd.f32 %v1359, %v1376
        %v1385 = vadd.f32 %v1360, %v1377
        %v1386 = vld [vmem:[%s1361 + $0x1] sm:$0xff]
        %v1387 = vld [vmem:[%s1361 + $0x9] sm:$0xf]
        %v1388 = vld [vmem:[%s1361 + $0x11] sm:$0xff]
        %v1389 = vld [vmem:[%s1361 + $0x19] sm:$0xf]
        %v1390 = vld [vmem:[%s1361 + $0x21] sm:$0xff]
        %v1391 = vld [vmem:[%s1361 + $0x29] sm:$0xf]
        %v1392 = vld [vmem:[%s1361 + $0x31] sm:$0xff]
        %v1393 = vld [vmem:[%s1361 + $0x39] sm:$0xf]
        %v1394 = vmul.f32 %v1386, %v786
        %v1395 = vmul.f32 %v1387, %v786
        %v1396 = vmul.f32 %v1388, %v786
        %v1397 = vmul.f32 %v1389, %v786
        %v1398 = vmul.f32 %v1390, %v786
        %v1399 = vmul.f32 %v1391, %v786
        %v1400 = vmul.f32 %v1392, %v786
        %v1401 = vmul.f32 %v1393, %v786
        %v1402 = vadd.f32 %v1378, %v1394
        %v1403 = vadd.f32 %v1379, %v1395
        %v1404 = vadd.f32 %v1380, %v1396
        %v1405 = vadd.f32 %v1381, %v1397
        %v1406 = vadd.f32 %v1382, %v1398
        %v1407 = vadd.f32 %v1383, %v1399
        %v1408 = vadd.f32 %v1384, %v1400
        %v1409 = vadd.f32 %v1385, %v1401
        %v1410 = vld [vmem:[%s1361 + $0x2] sm:$0xff]
        %v1411 = vld [vmem:[%s1361 + $0xa] sm:$0xf]
        %v1412 = vld [vmem:[%s1361 + $0x12] sm:$0xff]
        %v1413 = vld [vmem:[%s1361 + $0x1a] sm:$0xf]
        %v1414 = vld [vmem:[%s1361 + $0x22] sm:$0xff]
        %v1415 = vld [vmem:[%s1361 + $0x2a] sm:$0xf]
        %v1416 = vld [vmem:[%s1361 + $0x32] sm:$0xff]
        %v1417 = vld [vmem:[%s1361 + $0x3a] sm:$0xf]
        %v1418 = vmul.f32 %v1410, %v811
        %v1419 = vmul.f32 %v1411, %v811
        %v1420 = vmul.f32 %v1412, %v811
        %v1421 = vmul.f32 %v1413, %v811
        %v1422 = vmul.f32 %v1414, %v811
        %v1423 = vmul.f32 %v1415, %v811
        %v1424 = vmul.f32 %v1416, %v811
        %v1425 = vmul.f32 %v1417, %v811
        %v1426 = vadd.f32 %v1402, %v1418
        %v1427 = vadd.f32 %v1403, %v1419
        %v1428 = vadd.f32 %v1404, %v1420
        %v1429 = vadd.f32 %v1405, %v1421
        %v1430 = vadd.f32 %v1406, %v1422
        %v1431 = vadd.f32 %v1407, %v1423
        %v1432 = vadd.f32 %v1408, %v1424
        %v1433 = vadd.f32 %v1409, %v1425
        %v1434 = vld [vmem:[%s1361 + $0x3] sm:$0xff]
        %v1435 = vld [vmem:[%s1361 + $0xb] sm:$0xf]
        %v1436 = vld [vmem:[%s1361 + $0x13] sm:$0xff]
        %v1437 = vld [vmem:[%s1361 + $0x1b] sm:$0xf]
        %v1438 = vld [vmem:[%s1361 + $0x23] sm:$0xff]
        %v1439 = vld [vmem:[%s1361 + $0x2b] sm:$0xf]
        %v1440 = vld [vmem:[%s1361 + $0x33] sm:$0xff]
        %v1441 = vld [vmem:[%s1361 + $0x3b] sm:$0xf]
        %v1442 = vmul.f32 %v1434, %v836
        %v1443 = vmul.f32 %v1435, %v836
        %v1444 = vmul.f32 %v1436, %v836
        %v1445 = vmul.f32 %v1437, %v836
        %v1446 = vmul.f32 %v1438, %v836
        %v1447 = vmul.f32 %v1439, %v836
        %v1448 = vmul.f32 %v1440, %v836
        %v1449 = vmul.f32 %v1441, %v836
        %v1450 = vadd.f32 %v1426, %v1442
        %v1451 = vadd.f32 %v1427, %v1443
        %v1452 = vadd.f32 %v1428, %v1444
        %v1453 = vadd.f32 %v1429, %v1445
        %v1454 = vadd.f32 %v1430, %v1446
        %v1455 = vadd.f32 %v1431, %v1447
        %v1456 = vadd.f32 %v1432, %v1448
        %v1457 = vadd.f32 %v1433, %v1449
        %v1458 = vld [vmem:[%s1361 + $0x4] sm:$0xff]
        %v1459 = vld [vmem:[%s1361 + $0xc] sm:$0xf]
        %v1460 = vld [vmem:[%s1361 + $0x14] sm:$0xff]
        %v1461 = vld [vmem:[%s1361 + $0x1c] sm:$0xf]
        %v1462 = vld [vmem:[%s1361 + $0x24] sm:$0xff]
        %v1463 = vld [vmem:[%s1361 + $0x2c] sm:$0xf]
        %v1464 = vld [vmem:[%s1361 + $0x34] sm:$0xff]
        %v1465 = vld [vmem:[%s1361 + $0x3c] sm:$0xf]
        %v1466 = vmul.f32 %v1458, %v861
        %v1467 = vmul.f32 %v1459, %v861
        %v1468 = vmul.f32 %v1460, %v861
        %v1469 = vmul.f32 %v1461, %v861
        %v1470 = vmul.f32 %v1462, %v861
        %v1471 = vmul.f32 %v1463, %v861
        %v1472 = vmul.f32 %v1464, %v861
        %v1473 = vmul.f32 %v1465, %v861
        %v1474 = vadd.f32 %v1450, %v1466
        %v1475 = vadd.f32 %v1451, %v1467
        %v1476 = vadd.f32 %v1452, %v1468
        %v1477 = vadd.f32 %v1453, %v1469
        %v1478 = vadd.f32 %v1454, %v1470
        %v1479 = vadd.f32 %v1455, %v1471
        %v1480 = vadd.f32 %v1456, %v1472
        %v1481 = vadd.f32 %v1457, %v1473
        %s1482 = scalar_lea.vmem %s251, 64 [#allocation5]
        %1483 = vst [vmem:[%s1482] sm:$0xff] %v1474
        %1484 = vst [vmem:[%s1482 + $0x8] sm:$0xf] %v1475
        %1485 = vst [vmem:[%s1482 + $0x10] sm:$0xff] %v1476
        %1486 = vst [vmem:[%s1482 + $0x18] sm:$0xf] %v1477
        %1487 = vst [vmem:[%s1482 + $0x20] sm:$0xff] %v1478
        %1488 = vst [vmem:[%s1482 + $0x28] sm:$0xf] %v1479
        %1489 = vst [vmem:[%s1482 + $0x30] sm:$0xff] %v1480
        %1490 = vst [vmem:[%s1482 + $0x38] sm:$0xf] %v1481
        %v1491 = vld [vmem:[%s1361] sm:$0xff]
        %v1492 = vld [vmem:[%s1361 + $0x8] sm:$0xf]
        %v1493 = vld [vmem:[%s1361 + $0x10] sm:$0xff]
        %v1494 = vld [vmem:[%s1361 + $0x18] sm:$0xf]
        %v1495 = vld [vmem:[%s1361 + $0x20] sm:$0xff]
        %v1496 = vld [vmem:[%s1361 + $0x28] sm:$0xf]
        %v1497 = vld [vmem:[%s1361 + $0x30] sm:$0xff]
        %v1498 = vld [vmem:[%s1361 + $0x38] sm:$0xf]
        %v1499 = vmul.f32 %v1491, %v265
        %v1500 = vmul.f32 %v1492, %v265
        %v1501 = vmul.f32 %v1493, %v265
        %v1502 = vmul.f32 %v1494, %v265
        %v1503 = vmul.f32 %v1495, %v265
        %v1504 = vmul.f32 %v1496, %v265
        %v1505 = vmul.f32 %v1497, %v265
        %v1506 = vmul.f32 %v1498, %v265
        %v1507 = vld [vmem:[%s1361 + $0x1] sm:$0xff]
        %v1508 = vld [vmem:[%s1361 + $0x9] sm:$0xf]
        %v1509 = vld [vmem:[%s1361 + $0x11] sm:$0xff]
        %v1510 = vld [vmem:[%s1361 + $0x19] sm:$0xf]
        %v1511 = vld [vmem:[%s1361 + $0x21] sm:$0xff]
        %v1512 = vld [vmem:[%s1361 + $0x29] sm:$0xf]
        %v1513 = vld [vmem:[%s1361 + $0x31] sm:$0xff]
        %v1514 = vld [vmem:[%s1361 + $0x39] sm:$0xf]
        %v1515 = vmul.f32 %v1507, %v282
        %v1516 = vmul.f32 %v1508, %v282
        %v1517 = vmul.f32 %v1509, %v282
        %v1518 = vmul.f32 %v1510, %v282
        %v1519 = vmul.f32 %v1511, %v282
        %v1520 = vmul.f32 %v1512, %v282
        %v1521 = vmul.f32 %v1513, %v282
        %v1522 = vmul.f32 %v1514, %v282
        %v1523 = vadd.f32 %v1499, %v1515
        %v1524 = vadd.f32 %v1500, %v1516
        %v1525 = vadd.f32 %v1501, %v1517
        %v1526 = vadd.f32 %v1502, %v1518
        %v1527 = vadd.f32 %v1503, %v1519
        %v1528 = vadd.f32 %v1504, %v1520
        %v1529 = vadd.f32 %v1505, %v1521
        %v1530 = vadd.f32 %v1506, %v1522
        %v1531 = vld [vmem:[%s1361 + $0x2] sm:$0xff]
        %v1532 = vld [vmem:[%s1361 + $0xa] sm:$0xf]
        %v1533 = vld [vmem:[%s1361 + $0x12] sm:$0xff]
        %v1534 = vld [vmem:[%s1361 + $0x1a] sm:$0xf]
        %v1535 = vld [vmem:[%s1361 + $0x22] sm:$0xff]
        %v1536 = vld [vmem:[%s1361 + $0x2a] sm:$0xf]
        %v1537 = vld [vmem:[%s1361 + $0x32] sm:$0xff]
        %v1538 = vld [vmem:[%s1361 + $0x3a] sm:$0xf]
        %v1539 = vmul.f32 %v1531, %v307
        %v1540 = vmul.f32 %v1532, %v307
        %v1541 = vmul.f32 %v1533, %v307
        %v1542 = vmul.f32 %v1534, %v307
        %v1543 = vmul.f32 %v1535, %v307
        %v1544 = vmul.f32 %v1536, %v307
        %v1545 = vmul.f32 %v1537, %v307
        %v1546 = vmul.f32 %v1538, %v307
        %v1547 = vadd.f32 %v1523, %v1539
        %v1548 = vadd.f32 %v1524, %v1540
        %v1549 = vadd.f32 %v1525, %v1541
        %v1550 = vadd.f32 %v1526, %v1542
        %v1551 = vadd.f32 %v1527, %v1543
        %v1552 = vadd.f32 %v1528, %v1544
        %v1553 = vadd.f32 %v1529, %v1545
        %v1554 = vadd.f32 %v1530, %v1546
        %v1555 = vld [vmem:[%s1361 + $0x3] sm:$0xff]
        %v1556 = vld [vmem:[%s1361 + $0xb] sm:$0xf]
        %v1557 = vld [vmem:[%s1361 + $0x13] sm:$0xff]
        %v1558 = vld [vmem:[%s1361 + $0x1b] sm:$0xf]
        %v1559 = vld [vmem:[%s1361 + $0x23] sm:$0xff]
        %v1560 = vld [vmem:[%s1361 + $0x2b] sm:$0xf]
        %v1561 = vld [vmem:[%s1361 + $0x33] sm:$0xff]
        %v1562 = vld [vmem:[%s1361 + $0x3b] sm:$0xf]
        %v1563 = vmul.f32 %v1555, %v332
        %v1564 = vmul.f32 %v1556, %v332
        %v1565 = vmul.f32 %v1557, %v332
        %v1566 = vmul.f32 %v1558, %v332
        %v1567 = vmul.f32 %v1559, %v332
        %v1568 = vmul.f32 %v1560, %v332
        %v1569 = vmul.f32 %v1561, %v332
        %v1570 = vmul.f32 %v1562, %v332
        %v1571 = vadd.f32 %v1547, %v1563
        %v1572 = vadd.f32 %v1548, %v1564
        %v1573 = vadd.f32 %v1549, %v1565
        %v1574 = vadd.f32 %v1550, %v1566
        %v1575 = vadd.f32 %v1551, %v1567
        %v1576 = vadd.f32 %v1552, %v1568
        %v1577 = vadd.f32 %v1553, %v1569
        %v1578 = vadd.f32 %v1554, %v1570
        %v1579 = vld [vmem:[%s1361 + $0x4] sm:$0xff]
        %v1580 = vld [vmem:[%s1361 + $0xc] sm:$0xf]
        %v1581 = vld [vmem:[%s1361 + $0x14] sm:$0xff]
        %v1582 = vld [vmem:[%s1361 + $0x1c] sm:$0xf]
        %v1583 = vld [vmem:[%s1361 + $0x24] sm:$0xff]
        %v1584 = vld [vmem:[%s1361 + $0x2c] sm:$0xf]
        %v1585 = vld [vmem:[%s1361 + $0x34] sm:$0xff]
        %v1586 = vld [vmem:[%s1361 + $0x3c] sm:$0xf]
        %v1587 = vmul.f32 %v1579, %v357
        %v1588 = vmul.f32 %v1580, %v357
        %v1589 = vmul.f32 %v1581, %v357
        %v1590 = vmul.f32 %v1582, %v357
        %v1591 = vmul.f32 %v1583, %v357
        %v1592 = vmul.f32 %v1584, %v357
        %v1593 = vmul.f32 %v1585, %v357
        %v1594 = vmul.f32 %v1586, %v357
        %v1595 = vadd.f32 %v1571, %v1587
        %v1596 = vadd.f32 %v1572, %v1588
        %v1597 = vadd.f32 %v1573, %v1589
        %v1598 = vadd.f32 %v1574, %v1590
        %v1599 = vadd.f32 %v1575, %v1591
        %v1600 = vadd.f32 %v1576, %v1592
        %v1601 = vadd.f32 %v1577, %v1593
        %v1602 = vadd.f32 %v1578, %v1594
        %s1603 = scalar_lea.vmem %s227, 144 [#allocation3]
        %v1604 = vld [vmem:[%s1603] sm:$0xff]
        %v1605 = vld [vmem:[%s1603 + $0x8] sm:$0xf]
        %v1606 = vld [vmem:[%s1603 + $0x10] sm:$0xff]
        %v1607 = vld [vmem:[%s1603 + $0x18] sm:$0xf]
        %v1608 = vld [vmem:[%s1603 + $0x20] sm:$0xff]
        %v1609 = vld [vmem:[%s1603 + $0x28] sm:$0xf]
        %v1610 = vld [vmem:[%s1603 + $0x30] sm:$0xff]
        %v1611 = vld [vmem:[%s1603 + $0x38] sm:$0xf]
        %v1612 = vmul.f32 %v1604, %v383
        %v1613 = vmul.f32 %v1605, %v383
        %v1614 = vmul.f32 %v1606, %v383
        %v1615 = vmul.f32 %v1607, %v383
        %v1616 = vmul.f32 %v1608, %v383
        %v1617 = vmul.f32 %v1609, %v383
        %v1618 = vmul.f32 %v1610, %v383
        %v1619 = vmul.f32 %v1611, %v383
        %v1620 = vadd.f32 %v1595, %v1612
        %v1621 = vadd.f32 %v1596, %v1613
        %v1622 = vadd.f32 %v1597, %v1614
        %v1623 = vadd.f32 %v1598, %v1615
        %v1624 = vadd.f32 %v1599, %v1616
        %v1625 = vadd.f32 %v1600, %v1617
        %v1626 = vadd.f32 %v1601, %v1618
        %v1627 = vadd.f32 %v1602, %v1619
        %v1628 = vld [vmem:[%s1603 + $0x1] sm:$0xff]
        %v1629 = vld [vmem:[%s1603 + $0x9] sm:$0xf]
        %v1630 = vld [vmem:[%s1603 + $0x11] sm:$0xff]
        %v1631 = vld [vmem:[%s1603 + $0x19] sm:$0xf]
        %v1632 = vld [vmem:[%s1603 + $0x21] sm:$0xff]
        %v1633 = vld [vmem:[%s1603 + $0x29] sm:$0xf]
        %v1634 = vld [vmem:[%s1603 + $0x31] sm:$0xff]
        %v1635 = vld [vmem:[%s1603 + $0x39] sm:$0xf]
        %v1636 = vmul.f32 %v1628, %v408
        %v1637 = vmul.f32 %v1629, %v408
        %v1638 = vmul.f32 %v1630, %v408
        %v1639 = vmul.f32 %v1631, %v408
        %v1640 = vmul.f32 %v1632, %v408
        %v1641 = vmul.f32 %v1633, %v408
        %v1642 = vmul.f32 %v1634, %v408
        %v1643 = vmul.f32 %v1635, %v408
        %v1644 = vadd.f32 %v1620, %v1636
        %v1645 = vadd.f32 %v1621, %v1637
        %v1646 = vadd.f32 %v1622, %v1638
        %v1647 = vadd.f32 %v1623, %v1639
        %v1648 = vadd.f32 %v1624, %v1640
        %v1649 = vadd.f32 %v1625, %v1641
        %v1650 = vadd.f32 %v1626, %v1642
        %v1651 = vadd.f32 %v1627, %v1643
        %v1652 = vld [vmem:[%s1603 + $0x2] sm:$0xff]
        %v1653 = vld [vmem:[%s1603 + $0xa] sm:$0xf]
        %v1654 = vld [vmem:[%s1603 + $0x12] sm:$0xff]
        %v1655 = vld [vmem:[%s1603 + $0x1a] sm:$0xf]
        %v1656 = vld [vmem:[%s1603 + $0x22] sm:$0xff]
        %v1657 = vld [vmem:[%s1603 + $0x2a] sm:$0xf]
        %v1658 = vld [vmem:[%s1603 + $0x32] sm:$0xff]
        %v1659 = vld [vmem:[%s1603 + $0x3a] sm:$0xf]
        %v1660 = vmul.f32 %v1652, %v433
        %v1661 = vmul.f32 %v1653, %v433
        %v1662 = vmul.f32 %v1654, %v433
        %v1663 = vmul.f32 %v1655, %v433
        %v1664 = vmul.f32 %v1656, %v433
        %v1665 = vmul.f32 %v1657, %v433
        %v1666 = vmul.f32 %v1658, %v433
        %v1667 = vmul.f32 %v1659, %v433
        %v1668 = vadd.f32 %v1644, %v1660
        %v1669 = vadd.f32 %v1645, %v1661
        %v1670 = vadd.f32 %v1646, %v1662
        %v1671 = vadd.f32 %v1647, %v1663
        %v1672 = vadd.f32 %v1648, %v1664
        %v1673 = vadd.f32 %v1649, %v1665
        %v1674 = vadd.f32 %v1650, %v1666
        %v1675 = vadd.f32 %v1651, %v1667
        %v1676 = vld [vmem:[%s1603 + $0x3] sm:$0xff]
        %v1677 = vld [vmem:[%s1603 + $0xb] sm:$0xf]
        %v1678 = vld [vmem:[%s1603 + $0x13] sm:$0xff]
        %v1679 = vld [vmem:[%s1603 + $0x1b] sm:$0xf]
        %v1680 = vld [vmem:[%s1603 + $0x23] sm:$0xff]
        %v1681 = vld [vmem:[%s1603 + $0x2b] sm:$0xf]
        %v1682 = vld [vmem:[%s1603 + $0x33] sm:$0xff]
        %v1683 = vld [vmem:[%s1603 + $0x3b] sm:$0xf]
        %v1684 = vmul.f32 %v1676, %v458
        %v1685 = vmul.f32 %v1677, %v458
        %v1686 = vmul.f32 %v1678, %v458
        %v1687 = vmul.f32 %v1679, %v458
        %v1688 = vmul.f32 %v1680, %v458
        %v1689 = vmul.f32 %v1681, %v458
        %v1690 = vmul.f32 %v1682, %v458
        %v1691 = vmul.f32 %v1683, %v458
        %v1692 = vadd.f32 %v1668, %v1684
        %v1693 = vadd.f32 %v1669, %v1685
        %v1694 = vadd.f32 %v1670, %v1686
        %v1695 = vadd.f32 %v1671, %v1687
        %v1696 = vadd.f32 %v1672, %v1688
        %v1697 = vadd.f32 %v1673, %v1689
        %v1698 = vadd.f32 %v1674, %v1690
        %v1699 = vadd.f32 %v1675, %v1691
        %v1700 = vld [vmem:[%s1603 + $0x4] sm:$0xff]
        %v1701 = vld [vmem:[%s1603 + $0xc] sm:$0xf]
        %v1702 = vld [vmem:[%s1603 + $0x14] sm:$0xff]
        %v1703 = vld [vmem:[%s1603 + $0x1c] sm:$0xf]
        %v1704 = vld [vmem:[%s1603 + $0x24] sm:$0xff]
        %v1705 = vld [vmem:[%s1603 + $0x2c] sm:$0xf]
        %v1706 = vld [vmem:[%s1603 + $0x34] sm:$0xff]
        %v1707 = vld [vmem:[%s1603 + $0x3c] sm:$0xf]
        %v1708 = vmul.f32 %v1700, %v483
        %v1709 = vmul.f32 %v1701, %v483
        %v1710 = vmul.f32 %v1702, %v483
        %v1711 = vmul.f32 %v1703, %v483
        %v1712 = vmul.f32 %v1704, %v483
        %v1713 = vmul.f32 %v1705, %v483
        %v1714 = vmul.f32 %v1706, %v483
        %v1715 = vmul.f32 %v1707, %v483
        %v1716 = vadd.f32 %v1692, %v1708
        %v1717 = vadd.f32 %v1693, %v1709
        %v1718 = vadd.f32 %v1694, %v1710
        %v1719 = vadd.f32 %v1695, %v1711
        %v1720 = vadd.f32 %v1696, %v1712
        %v1721 = vadd.f32 %v1697, %v1713
        %v1722 = vadd.f32 %v1698, %v1714
        %v1723 = vadd.f32 %v1699, %v1715
        %s1724 = scalar_lea.vmem %s227, 160 [#allocation3]
        %v1725 = vld [vmem:[%s1724] sm:$0xff]
        %v1726 = vld [vmem:[%s1724 + $0x8] sm:$0xf]
        %v1727 = vld [vmem:[%s1724 + $0x10] sm:$0xff]
        %v1728 = vld [vmem:[%s1724 + $0x18] sm:$0xf]
        %v1729 = vld [vmem:[%s1724 + $0x20] sm:$0xff]
        %v1730 = vld [vmem:[%s1724 + $0x28] sm:$0xf]
        %v1731 = vld [vmem:[%s1724 + $0x30] sm:$0xff]
        %v1732 = vld [vmem:[%s1724 + $0x38] sm:$0xf]
        %v1733 = vmul.f32 %v1725, %v509
        %v1734 = vmul.f32 %v1726, %v509
        %v1735 = vmul.f32 %v1727, %v509
        %v1736 = vmul.f32 %v1728, %v509
        %v1737 = vmul.f32 %v1729, %v509
        %v1738 = vmul.f32 %v1730, %v509
        %v1739 = vmul.f32 %v1731, %v509
        %v1740 = vmul.f32 %v1732, %v509
        %v1741 = vadd.f32 %v1716, %v1733
        %v1742 = vadd.f32 %v1717, %v1734
        %v1743 = vadd.f32 %v1718, %v1735
        %v1744 = vadd.f32 %v1719, %v1736
        %v1745 = vadd.f32 %v1720, %v1737
        %v1746 = vadd.f32 %v1721, %v1738
        %v1747 = vadd.f32 %v1722, %v1739
        %v1748 = vadd.f32 %v1723, %v1740
        %v1749 = vld [vmem:[%s1724 + $0x1] sm:$0xff]
        %v1750 = vld [vmem:[%s1724 + $0x9] sm:$0xf]
        %v1751 = vld [vmem:[%s1724 + $0x11] sm:$0xff]
        %v1752 = vld [vmem:[%s1724 + $0x19] sm:$0xf]
        %v1753 = vld [vmem:[%s1724 + $0x21] sm:$0xff]
        %v1754 = vld [vmem:[%s1724 + $0x29] sm:$0xf]
        %v1755 = vld [vmem:[%s1724 + $0x31] sm:$0xff]
        %v1756 = vld [vmem:[%s1724 + $0x39] sm:$0xf]
        %v1757 = vmul.f32 %v1749, %v534
        %v1758 = vmul.f32 %v1750, %v534
        %v1759 = vmul.f32 %v1751, %v534
        %v1760 = vmul.f32 %v1752, %v534
        %v1761 = vmul.f32 %v1753, %v534
        %v1762 = vmul.f32 %v1754, %v534
        %v1763 = vmul.f32 %v1755, %v534
        %v1764 = vmul.f32 %v1756, %v534
        %v1765 = vadd.f32 %v1741, %v1757
        %v1766 = vadd.f32 %v1742, %v1758
        %v1767 = vadd.f32 %v1743, %v1759
        %v1768 = vadd.f32 %v1744, %v1760
        %v1769 = vadd.f32 %v1745, %v1761
        %v1770 = vadd.f32 %v1746, %v1762
        %v1771 = vadd.f32 %v1747, %v1763
        %v1772 = vadd.f32 %v1748, %v1764
        %v1773 = vld [vmem:[%s1724 + $0x2] sm:$0xff]
        %v1774 = vld [vmem:[%s1724 + $0xa] sm:$0xf]
        %v1775 = vld [vmem:[%s1724 + $0x12] sm:$0xff]
        %v1776 = vld [vmem:[%s1724 + $0x1a] sm:$0xf]
        %v1777 = vld [vmem:[%s1724 + $0x22] sm:$0xff]
        %v1778 = vld [vmem:[%s1724 + $0x2a] sm:$0xf]
        %v1779 = vld [vmem:[%s1724 + $0x32] sm:$0xff]
        %v1780 = vld [vmem:[%s1724 + $0x3a] sm:$0xf]
        %v1781 = vmul.f32 %v1773, %v559
        %v1782 = vmul.f32 %v1774, %v559
        %v1783 = vmul.f32 %v1775, %v559
        %v1784 = vmul.f32 %v1776, %v559
        %v1785 = vmul.f32 %v1777, %v559
        %v1786 = vmul.f32 %v1778, %v559
        %v1787 = vmul.f32 %v1779, %v559
        %v1788 = vmul.f32 %v1780, %v559
        %v1789 = vadd.f32 %v1765, %v1781
        %v1790 = vadd.f32 %v1766, %v1782
        %v1791 = vadd.f32 %v1767, %v1783
        %v1792 = vadd.f32 %v1768, %v1784
        %v1793 = vadd.f32 %v1769, %v1785
        %v1794 = vadd.f32 %v1770, %v1786
        %v1795 = vadd.f32 %v1771, %v1787
        %v1796 = vadd.f32 %v1772, %v1788
        %v1797 = vld [vmem:[%s1724 + $0x3] sm:$0xff]
        %v1798 = vld [vmem:[%s1724 + $0xb] sm:$0xf]
        %v1799 = vld [vmem:[%s1724 + $0x13] sm:$0xff]
        %v1800 = vld [vmem:[%s1724 + $0x1b] sm:$0xf]
        %v1801 = vld [vmem:[%s1724 + $0x23] sm:$0xff]
        %v1802 = vld [vmem:[%s1724 + $0x2b] sm:$0xf]
        %v1803 = vld [vmem:[%s1724 + $0x33] sm:$0xff]
        %v1804 = vld [vmem:[%s1724 + $0x3b] sm:$0xf]
        %v1805 = vmul.f32 %v1797, %v584
        %v1806 = vmul.f32 %v1798, %v584
        %v1807 = vmul.f32 %v1799, %v584
        %v1808 = vmul.f32 %v1800, %v584
        %v1809 = vmul.f32 %v1801, %v584
        %v1810 = vmul.f32 %v1802, %v584
        %v1811 = vmul.f32 %v1803, %v584
        %v1812 = vmul.f32 %v1804, %v584
        %v1813 = vadd.f32 %v1789, %v1805
        %v1814 = vadd.f32 %v1790, %v1806
        %v1815 = vadd.f32 %v1791, %v1807
        %v1816 = vadd.f32 %v1792, %v1808
        %v1817 = vadd.f32 %v1793, %v1809
        %v1818 = vadd.f32 %v1794, %v1810
        %v1819 = vadd.f32 %v1795, %v1811
        %v1820 = vadd.f32 %v1796, %v1812
        %v1821 = vld [vmem:[%s1724 + $0x4] sm:$0xff]
        %v1822 = vld [vmem:[%s1724 + $0xc] sm:$0xf]
        %v1823 = vld [vmem:[%s1724 + $0x14] sm:$0xff]
        %v1824 = vld [vmem:[%s1724 + $0x1c] sm:$0xf]
        %v1825 = vld [vmem:[%s1724 + $0x24] sm:$0xff]
        %v1826 = vld [vmem:[%s1724 + $0x2c] sm:$0xf]
        %v1827 = vld [vmem:[%s1724 + $0x34] sm:$0xff]
        %v1828 = vld [vmem:[%s1724 + $0x3c] sm:$0xf]
        %v1829 = vmul.f32 %v1821, %v609
        %v1830 = vmul.f32 %v1822, %v609
        %v1831 = vmul.f32 %v1823, %v609
        %v1832 = vmul.f32 %v1824, %v609
        %v1833 = vmul.f32 %v1825, %v609
        %v1834 = vmul.f32 %v1826, %v609
        %v1835 = vmul.f32 %v1827, %v609
        %v1836 = vmul.f32 %v1828, %v609
        %v1837 = vadd.f32 %v1813, %v1829
        %v1838 = vadd.f32 %v1814, %v1830
        %v1839 = vadd.f32 %v1815, %v1831
        %v1840 = vadd.f32 %v1816, %v1832
        %v1841 = vadd.f32 %v1817, %v1833
        %v1842 = vadd.f32 %v1818, %v1834
        %v1843 = vadd.f32 %v1819, %v1835
        %v1844 = vadd.f32 %v1820, %v1836
        %s1845 = scalar_lea.vmem %s227, 176 [#allocation3]
        %v1846 = vld [vmem:[%s1845] sm:$0xff]
        %v1847 = vld [vmem:[%s1845 + $0x8] sm:$0xf]
        %v1848 = vld [vmem:[%s1845 + $0x10] sm:$0xff]
        %v1849 = vld [vmem:[%s1845 + $0x18] sm:$0xf]
        %v1850 = vld [vmem:[%s1845 + $0x20] sm:$0xff]
        %v1851 = vld [vmem:[%s1845 + $0x28] sm:$0xf]
        %v1852 = vld [vmem:[%s1845 + $0x30] sm:$0xff]
        %v1853 = vld [vmem:[%s1845 + $0x38] sm:$0xf]
        %v1854 = vmul.f32 %v1846, %v635
        %v1855 = vmul.f32 %v1847, %v635
        %v1856 = vmul.f32 %v1848, %v635
        %v1857 = vmul.f32 %v1849, %v635
        %v1858 = vmul.f32 %v1850, %v635
        %v1859 = vmul.f32 %v1851, %v635
        %v1860 = vmul.f32 %v1852, %v635
        %v1861 = vmul.f32 %v1853, %v635
        %v1862 = vadd.f32 %v1837, %v1854
        %v1863 = vadd.f32 %v1838, %v1855
        %v1864 = vadd.f32 %v1839, %v1856
        %v1865 = vadd.f32 %v1840, %v1857
        %v1866 = vadd.f32 %v1841, %v1858
        %v1867 = vadd.f32 %v1842, %v1859
        %v1868 = vadd.f32 %v1843, %v1860
        %v1869 = vadd.f32 %v1844, %v1861
        %v1870 = vld [vmem:[%s1845 + $0x1] sm:$0xff]
        %v1871 = vld [vmem:[%s1845 + $0x9] sm:$0xf]
        %v1872 = vld [vmem:[%s1845 + $0x11] sm:$0xff]
        %v1873 = vld [vmem:[%s1845 + $0x19] sm:$0xf]
        %v1874 = vld [vmem:[%s1845 + $0x21] sm:$0xff]
        %v1875 = vld [vmem:[%s1845 + $0x29] sm:$0xf]
        %v1876 = vld [vmem:[%s1845 + $0x31] sm:$0xff]
        %v1877 = vld [vmem:[%s1845 + $0x39] sm:$0xf]
        %v1878 = vmul.f32 %v1870, %v660
        %v1879 = vmul.f32 %v1871, %v660
        %v1880 = vmul.f32 %v1872, %v660
        %v1881 = vmul.f32 %v1873, %v660
        %v1882 = vmul.f32 %v1874, %v660
        %v1883 = vmul.f32 %v1875, %v660
        %v1884 = vmul.f32 %v1876, %v660
        %v1885 = vmul.f32 %v1877, %v660
        %v1886 = vadd.f32 %v1862, %v1878
        %v1887 = vadd.f32 %v1863, %v1879
        %v1888 = vadd.f32 %v1864, %v1880
        %v1889 = vadd.f32 %v1865, %v1881
        %v1890 = vadd.f32 %v1866, %v1882
        %v1891 = vadd.f32 %v1867, %v1883
        %v1892 = vadd.f32 %v1868, %v1884
        %v1893 = vadd.f32 %v1869, %v1885
        %v1894 = vld [vmem:[%s1845 + $0x2] sm:$0xff]
        %v1895 = vld [vmem:[%s1845 + $0xa] sm:$0xf]
        %v1896 = vld [vmem:[%s1845 + $0x12] sm:$0xff]
        %v1897 = vld [vmem:[%s1845 + $0x1a] sm:$0xf]
        %v1898 = vld [vmem:[%s1845 + $0x22] sm:$0xff]
        %v1899 = vld [vmem:[%s1845 + $0x2a] sm:$0xf]
        %v1900 = vld [vmem:[%s1845 + $0x32] sm:$0xff]
        %v1901 = vld [vmem:[%s1845 + $0x3a] sm:$0xf]
        %v1902 = vmul.f32 %v1894, %v685
        %v1903 = vmul.f32 %v1895, %v685
        %v1904 = vmul.f32 %v1896, %v685
        %v1905 = vmul.f32 %v1897, %v685
        %v1906 = vmul.f32 %v1898, %v685
        %v1907 = vmul.f32 %v1899, %v685
        %v1908 = vmul.f32 %v1900, %v685
        %v1909 = vmul.f32 %v1901, %v685
        %v1910 = vadd.f32 %v1886, %v1902
        %v1911 = vadd.f32 %v1887, %v1903
        %v1912 = vadd.f32 %v1888, %v1904
        %v1913 = vadd.f32 %v1889, %v1905
        %v1914 = vadd.f32 %v1890, %v1906
        %v1915 = vadd.f32 %v1891, %v1907
        %v1916 = vadd.f32 %v1892, %v1908
        %v1917 = vadd.f32 %v1893, %v1909
        %v1918 = vld [vmem:[%s1845 + $0x3] sm:$0xff]
        %v1919 = vld [vmem:[%s1845 + $0xb] sm:$0xf]
        %v1920 = vld [vmem:[%s1845 + $0x13] sm:$0xff]
        %v1921 = vld [vmem:[%s1845 + $0x1b] sm:$0xf]
        %v1922 = vld [vmem:[%s1845 + $0x23] sm:$0xff]
        %v1923 = vld [vmem:[%s1845 + $0x2b] sm:$0xf]
        %v1924 = vld [vmem:[%s1845 + $0x33] sm:$0xff]
        %v1925 = vld [vmem:[%s1845 + $0x3b] sm:$0xf]
        %v1926 = vmul.f32 %v1918, %v710
        %v1927 = vmul.f32 %v1919, %v710
        %v1928 = vmul.f32 %v1920, %v710
        %v1929 = vmul.f32 %v1921, %v710
        %v1930 = vmul.f32 %v1922, %v710
        %v1931 = vmul.f32 %v1923, %v710
        %v1932 = vmul.f32 %v1924, %v710
        %v1933 = vmul.f32 %v1925, %v710
        %v1934 = vadd.f32 %v1910, %v1926
        %v1935 = vadd.f32 %v1911, %v1927
        %v1936 = vadd.f32 %v1912, %v1928
        %v1937 = vadd.f32 %v1913, %v1929
        %v1938 = vadd.f32 %v1914, %v1930
        %v1939 = vadd.f32 %v1915, %v1931
        %v1940 = vadd.f32 %v1916, %v1932
        %v1941 = vadd.f32 %v1917, %v1933
        %v1942 = vld [vmem:[%s1845 + $0x4] sm:$0xff]
        %v1943 = vld [vmem:[%s1845 + $0xc] sm:$0xf]
        %v1944 = vld [vmem:[%s1845 + $0x14] sm:$0xff]
        %v1945 = vld [vmem:[%s1845 + $0x1c] sm:$0xf]
        %v1946 = vld [vmem:[%s1845 + $0x24] sm:$0xff]
        %v1947 = vld [vmem:[%s1845 + $0x2c] sm:$0xf]
        %v1948 = vld [vmem:[%s1845 + $0x34] sm:$0xff]
        %v1949 = vld [vmem:[%s1845 + $0x3c] sm:$0xf]
        %v1950 = vmul.f32 %v1942, %v735
        %v1951 = vmul.f32 %v1943, %v735
        %v1952 = vmul.f32 %v1944, %v735
        %v1953 = vmul.f32 %v1945, %v735
        %v1954 = vmul.f32 %v1946, %v735
        %v1955 = vmul.f32 %v1947, %v735
        %v1956 = vmul.f32 %v1948, %v735
        %v1957 = vmul.f32 %v1949, %v735
        %v1958 = vadd.f32 %v1934, %v1950
        %v1959 = vadd.f32 %v1935, %v1951
        %v1960 = vadd.f32 %v1936, %v1952
        %v1961 = vadd.f32 %v1937, %v1953
        %v1962 = vadd.f32 %v1938, %v1954
        %v1963 = vadd.f32 %v1939, %v1955
        %v1964 = vadd.f32 %v1940, %v1956
        %v1965 = vadd.f32 %v1941, %v1957
        %s1966 = scalar_lea.vmem %s227, 192 [#allocation3]
        %v1967 = vld [vmem:[%s1966] sm:$0xff]
        %v1968 = vld [vmem:[%s1966 + $0x8] sm:$0xf]
        %v1969 = vld [vmem:[%s1966 + $0x10] sm:$0xff]
        %v1970 = vld [vmem:[%s1966 + $0x18] sm:$0xf]
        %v1971 = vld [vmem:[%s1966 + $0x20] sm:$0xff]
        %v1972 = vld [vmem:[%s1966 + $0x28] sm:$0xf]
        %v1973 = vld [vmem:[%s1966 + $0x30] sm:$0xff]
        %v1974 = vld [vmem:[%s1966 + $0x38] sm:$0xf]
        %v1975 = vmul.f32 %v1967, %v761
        %v1976 = vmul.f32 %v1968, %v761
        %v1977 = vmul.f32 %v1969, %v761
        %v1978 = vmul.f32 %v1970, %v761
        %v1979 = vmul.f32 %v1971, %v761
        %v1980 = vmul.f32 %v1972, %v761
        %v1981 = vmul.f32 %v1973, %v761
        %v1982 = vmul.f32 %v1974, %v761
        %v1983 = vadd.f32 %v1958, %v1975
        %v1984 = vadd.f32 %v1959, %v1976
        %v1985 = vadd.f32 %v1960, %v1977
        %v1986 = vadd.f32 %v1961, %v1978
        %v1987 = vadd.f32 %v1962, %v1979
        %v1988 = vadd.f32 %v1963, %v1980
        %v1989 = vadd.f32 %v1964, %v1981
        %v1990 = vadd.f32 %v1965, %v1982
        %v1991 = vld [vmem:[%s1966 + $0x1] sm:$0xff]
        %v1992 = vld [vmem:[%s1966 + $0x9] sm:$0xf]
        %v1993 = vld [vmem:[%s1966 + $0x11] sm:$0xff]
        %v1994 = vld [vmem:[%s1966 + $0x19] sm:$0xf]
        %v1995 = vld [vmem:[%s1966 + $0x21] sm:$0xff]
        %v1996 = vld [vmem:[%s1966 + $0x29] sm:$0xf]
        %v1997 = vld [vmem:[%s1966 + $0x31] sm:$0xff]
        %v1998 = vld [vmem:[%s1966 + $0x39] sm:$0xf]
        %v1999 = vmul.f32 %v1991, %v786
        %v2000 = vmul.f32 %v1992, %v786
        %v2001 = vmul.f32 %v1993, %v786
        %v2002 = vmul.f32 %v1994, %v786
        %v2003 = vmul.f32 %v1995, %v786
        %v2004 = vmul.f32 %v1996, %v786
        %v2005 = vmul.f32 %v1997, %v786
        %v2006 = vmul.f32 %v1998, %v786
        %v2007 = vadd.f32 %v1983, %v1999
        %v2008 = vadd.f32 %v1984, %v2000
        %v2009 = vadd.f32 %v1985, %v2001
        %v2010 = vadd.f32 %v1986, %v2002
        %v2011 = vadd.f32 %v1987, %v2003
        %v2012 = vadd.f32 %v1988, %v2004
        %v2013 = vadd.f32 %v1989, %v2005
        %v2014 = vadd.f32 %v1990, %v2006
        %v2015 = vld [vmem:[%s1966 + $0x2] sm:$0xff]
        %v2016 = vld [vmem:[%s1966 + $0xa] sm:$0xf]
        %v2017 = vld [vmem:[%s1966 + $0x12] sm:$0xff]
        %v2018 = vld [vmem:[%s1966 + $0x1a] sm:$0xf]
        %v2019 = vld [vmem:[%s1966 + $0x22] sm:$0xff]
        %v2020 = vld [vmem:[%s1966 + $0x2a] sm:$0xf]
        %v2021 = vld [vmem:[%s1966 + $0x32] sm:$0xff]
        %v2022 = vld [vmem:[%s1966 + $0x3a] sm:$0xf]
        %v2023 = vmul.f32 %v2015, %v811
        %v2024 = vmul.f32 %v2016, %v811
        %v2025 = vmul.f32 %v2017, %v811
        %v2026 = vmul.f32 %v2018, %v811
        %v2027 = vmul.f32 %v2019, %v811
        %v2028 = vmul.f32 %v2020, %v811
        %v2029 = vmul.f32 %v2021, %v811
        %v2030 = vmul.f32 %v2022, %v811
        %v2031 = vadd.f32 %v2007, %v2023
        %v2032 = vadd.f32 %v2008, %v2024
        %v2033 = vadd.f32 %v2009, %v2025
        %v2034 = vadd.f32 %v2010, %v2026
        %v2035 = vadd.f32 %v2011, %v2027
        %v2036 = vadd.f32 %v2012, %v2028
        %v2037 = vadd.f32 %v2013, %v2029
        %v2038 = vadd.f32 %v2014, %v2030
        %v2039 = vld [vmem:[%s1966 + $0x3] sm:$0xff]
        %v2040 = vld [vmem:[%s1966 + $0xb] sm:$0xf]
        %v2041 = vld [vmem:[%s1966 + $0x13] sm:$0xff]
        %v2042 = vld [vmem:[%s1966 + $0x1b] sm:$0xf]
        %v2043 = vld [vmem:[%s1966 + $0x23] sm:$0xff]
        %v2044 = vld [vmem:[%s1966 + $0x2b] sm:$0xf]
        %v2045 = vld [vmem:[%s1966 + $0x33] sm:$0xff]
        %v2046 = vld [vmem:[%s1966 + $0x3b] sm:$0xf]
        %v2047 = vmul.f32 %v2039, %v836
        %v2048 = vmul.f32 %v2040, %v836
        %v2049 = vmul.f32 %v2041, %v836
        %v2050 = vmul.f32 %v2042, %v836
        %v2051 = vmul.f32 %v2043, %v836
        %v2052 = vmul.f32 %v2044, %v836
        %v2053 = vmul.f32 %v2045, %v836
        %v2054 = vmul.f32 %v2046, %v836
        %v2055 = vadd.f32 %v2031, %v2047
        %v2056 = vadd.f32 %v2032, %v2048
        %v2057 = vadd.f32 %v2033, %v2049
        %v2058 = vadd.f32 %v2034, %v2050
        %v2059 = vadd.f32 %v2035, %v2051
        %v2060 = vadd.f32 %v2036, %v2052
        %v2061 = vadd.f32 %v2037, %v2053
        %v2062 = vadd.f32 %v2038, %v2054
        %v2063 = vld [vmem:[%s1966 + $0x4] sm:$0xff]
        %v2064 = vld [vmem:[%s1966 + $0xc] sm:$0xf]
        %v2065 = vld [vmem:[%s1966 + $0x14] sm:$0xff]
        %v2066 = vld [vmem:[%s1966 + $0x1c] sm:$0xf]
        %v2067 = vld [vmem:[%s1966 + $0x24] sm:$0xff]
        %v2068 = vld [vmem:[%s1966 + $0x2c] sm:$0xf]
        %v2069 = vld [vmem:[%s1966 + $0x34] sm:$0xff]
        %v2070 = vld [vmem:[%s1966 + $0x3c] sm:$0xf]
        %v2071 = vmul.f32 %v2063, %v861
        %v2072 = vmul.f32 %v2064, %v861
        %v2073 = vmul.f32 %v2065, %v861
        %v2074 = vmul.f32 %v2066, %v861
        %v2075 = vmul.f32 %v2067, %v861
        %v2076 = vmul.f32 %v2068, %v861
        %v2077 = vmul.f32 %v2069, %v861
        %v2078 = vmul.f32 %v2070, %v861
        %v2079 = vadd.f32 %v2055, %v2071
        %v2080 = vadd.f32 %v2056, %v2072
        %v2081 = vadd.f32 %v2057, %v2073
        %v2082 = vadd.f32 %v2058, %v2074
        %v2083 = vadd.f32 %v2059, %v2075
        %v2084 = vadd.f32 %v2060, %v2076
        %v2085 = vadd.f32 %v2061, %v2077
        %v2086 = vadd.f32 %v2062, %v2078
        %s2087 = scalar_lea.vmem %s251, 128 [#allocation5]
        %2088 = vst [vmem:[%s2087] sm:$0xff] %v2079
        %2089 = vst [vmem:[%s2087 + $0x8] sm:$0xf] %v2080
        %2090 = vst [vmem:[%s2087 + $0x10] sm:$0xff] %v2081
        %2091 = vst [vmem:[%s2087 + $0x18] sm:$0xf] %v2082
        %2092 = vst [vmem:[%s2087 + $0x20] sm:$0xff] %v2083
        %2093 = vst [vmem:[%s2087 + $0x28] sm:$0xf] %v2084
        %2094 = vst [vmem:[%s2087 + $0x30] sm:$0xff] %v2085
        %2095 = vst [vmem:[%s2087 + $0x38] sm:$0xf] %v2086
        %s2096 = sand.u32 %s94, 1
        %s2097 = sand.u32 %s94, 1
        %s2098 = smul.addr %s2097, 192
        %s2099 = scalar_lea.vmem [#allocation5], %s2098
        // Predicated region
        $region71: #{fdam_forward_nhwc.1} parent=61 // pred_check
          %p2100 = pneg %p104
        $region72: #{fdam_forward_nhwc.1} parent=61 // pred_check_branch
          %2102 = sbr.rel (%p2100) target = $region74
        $region73: #{fdam_forward_nhwc.1} parent=61 // pred_region
          %s2103 = smul.addr %s20, 48
          %s2104 = sadd.s32 %s21, %s2103
          %s2105 = smul.addr %s2104, 8
          %s2106 = scalar_lea.vmem %s2, %s2105
          // Predicated region
          $region75: #{fdam_forward_nhwc.1} parent=73 // pred_check
            _
          $region76: #{fdam_forward_nhwc.1} parent=73 // pred_check_branch
            %2108 = sbr.rel (0) target = $region78
          $region77: #{fdam_forward_nhwc.1} parent=73 // pred_region
            // Predicated region
            $region79: #{fdam_forward_nhwc.1} parent=77 // pred_check
              _
            $region80: #{fdam_forward_nhwc.1} parent=77 // pred_check_branch
              %2110 = sbr.rel (0) target = $region82
            $region81: #{fdam_forward_nhwc.1} parent=77 // pred_region
              // Predicated region
              $region94: #{fdam_forward_nhwc.1} parent=81 // pred_check
                _
              $region95: #{fdam_forward_nhwc.1} parent=81 // pred_check_branch
                %2172 = sbr.rel (0) target = $region97
              $region96: #{fdam_forward_nhwc.1} parent=81 // pred_region
                loop: start=0, step=1, limit=1
                $region98: #{fdam_forward_nhwc.1} parent=96 // loop_pre_header
                  _
                $region99: #{fdam_forward_nhwc.1} parent=96 // loop_header
                  %s2174 = sphi 0, %s2178
                  %p2175 = scmp.ge.s32.totalorder %s2174, 1
                  %s2179 = sphi %s2099, %s2099
                  %s2180 = sphi %s2106, %s2106
                $region100: #{fdam_forward_nhwc.1} parent=96 // loop_header_branch
                  %2177 = sbr.rel (%p2175) target = $region104
                $region101: #{fdam_forward_nhwc.1} parent=96 // loop_body
                  %v2181 = vld [vmem:[%s2179] sm:$0xff]
                  %2182 = vst [vmem:[%s2180] sm:$0xff] %v2181
                  %v2183 = vld [vmem:[%s2179 + $0x8] sm:$0xff]
                  %2184 = vst [vmem:[%s2180 + $0x10] sm:$0xff] %v2183
                  %v2185 = vld [vmem:[%s2179 + $0x10] sm:$0xff]
                  %2186 = vst [vmem:[%s2180 + $0x20] sm:$0xff] %v2185
                  %v2187 = vld [vmem:[%s2179 + $0x18] sm:$0xff]
                  %2188 = vst [vmem:[%s2180 + $0x30] sm:$0xff] %v2187
                  %v2189 = vld [vmem:[%s2179 + $0x20] sm:$0xff]
                  %2190 = vst [vmem:[%s2180 + $0x40] sm:$0xff] %v2189
                  %v2191 = vld [vmem:[%s2179 + $0x28] sm:$0xff]
                  %2192 = vst [vmem:[%s2180 + $0x50] sm:$0xff] %v2191
                  %v2193 = vld [vmem:[%s2179 + $0x30] sm:$0xff]
                  %2194 = vst [vmem:[%s2180 + $0x60] sm:$0xff] %v2193
                  %v2195 = vld [vmem:[%s2179 + $0x38] sm:$0xff]
                  %2196 = vst [vmem:[%s2180 + $0x70] sm:$0xff] %v2195
                  %v2197 = vld [vmem:[%s2179 + $0x40] sm:$0xff]
                  %2198 = vst [vmem:[%s2180 + $0x80] sm:$0xff] %v2197
                  %v2199 = vld [vmem:[%s2179 + $0x48] sm:$0xff]
                  %2200 = vst [vmem:[%s2180 + $0x90] sm:$0xff] %v2199
                  %v2201 = vld [vmem:[%s2179 + $0x50] sm:$0xff]
                  %2202 = vst [vmem:[%s2180 + $0xa0] sm:$0xff] %v2201
                  %v2203 = vld [vmem:[%s2179 + $0x58] sm:$0xff]
                  %2204 = vst [vmem:[%s2180 + $0xb0] sm:$0xff] %v2203
                  %v2205 = vld [vmem:[%s2179 + $0x60] sm:$0xff]
                  %2206 = vst [vmem:[%s2180 + $0xc0] sm:$0xff] %v2205
                  %v2207 = vld [vmem:[%s2179 + $0x68] sm:$0xff]
                  %2208 = vst [vmem:[%s2180 + $0xd0] sm:$0xff] %v2207
                  %v2209 = vld [vmem:[%s2179 + $0x70] sm:$0xff]
                  %2210 = vst [vmem:[%s2180 + $0xe0] sm:$0xff] %v2209
                  %v2211 = vld [vmem:[%s2179 + $0x78] sm:$0xff]
                  %2212 = vst [vmem:[%s2180 + $0xf0] sm:$0xff] %v2211
                  %v2213 = vld [vmem:[%s2179 + $0x80] sm:$0xff]
                  %2214 = vst [vmem:[%s2180 + $0x100] sm:$0xff] %v2213
                  %v2215 = vld [vmem:[%s2179 + $0x88] sm:$0xff]
                  %2216 = vst [vmem:[%s2180 + $0x110] sm:$0xff] %v2215
                  %v2217 = vld [vmem:[%s2179 + $0x90] sm:$0xff]
                  %2218 = vst [vmem:[%s2180 + $0x120] sm:$0xff] %v2217
                  %v2219 = vld [vmem:[%s2179 + $0x98] sm:$0xff]
                  %2220 = vst [vmem:[%s2180 + $0x130] sm:$0xff] %v2219
                  %v2221 = vld [vmem:[%s2179 + $0xa0] sm:$0xff]
                  %2222 = vst [vmem:[%s2180 + $0x140] sm:$0xff] %v2221
                  %v2223 = vld [vmem:[%s2179 + $0xa8] sm:$0xff]
                  %2224 = vst [vmem:[%s2180 + $0x150] sm:$0xff] %v2223
                  %v2225 = vld [vmem:[%s2179 + $0xb0] sm:$0xff]
                  %2226 = vst [vmem:[%s2180 + $0x160] sm:$0xff] %v2225
                  %v2227 = vld [vmem:[%s2179 + $0xb8] sm:$0xff]
                  %2228 = vst [vmem:[%s2180 + $0x170] sm:$0xff] %v2227
                $region102: #{fdam_forward_nhwc.1} parent=96 // loop_footer
                  %s2178 = sadd.s32 1, %s2174
                $region103: #{fdam_forward_nhwc.1} parent=96 // loop_footer_branch
                  %2173 = sbr.rel target = $region99
                $region104: #{fdam_forward_nhwc.1} parent=96 // loop_exit
                  _
              $region97: #{fdam_forward_nhwc.1} parent=81 // pred_fallthru
                _
              // Predicated region
              $region105: #{fdam_forward_nhwc.1} parent=81 // pred_check
                _
              $region106: #{fdam_forward_nhwc.1} parent=81 // pred_check_branch
                %2230 = sbr.rel target = $region108
              $region107: #{fdam_forward_nhwc.1} parent=81 // pred_region
                _
              $region108: #{fdam_forward_nhwc.1} parent=81 // pred_fallthru
                _
            $region82: #{fdam_forward_nhwc.1} parent=77 // pred_fallthru
              _
            // Predicated region
            $region83: #{fdam_forward_nhwc.1} parent=77 // pred_check
              _
            $region84: #{fdam_forward_nhwc.1} parent=77 // pred_check_branch
              %2112 = sbr.rel target = $region86
            $region85: #{fdam_forward_nhwc.1} parent=77 // pred_region
              %s2114 = ssub.s32 256, 1
              loop: start=0, step=1, limit=1
              $region87: #{fdam_forward_nhwc.1} parent=85 // loop_pre_header
                _
              $region88: #{fdam_forward_nhwc.1} parent=85 // loop_header
                %s2116 = sphi 0, %s2120
                %p2117 = scmp.ge.s32.totalorder %s2116, 1
                %s2121 = sphi %s2099, %s2099
                %s2122 = sphi %s2106, %s2106
              $region89: #{fdam_forward_nhwc.1} parent=85 // loop_header_branch
                %2119 = sbr.rel (%p2117) target = $region93
              $region90: #{fdam_forward_nhwc.1} parent=85 // loop_body
                %v2123 = vld [vmem:[%s2121] sm:%s2114]
                %2124 = vst [vmem:[%s2122] sm:%s2114] %v2123
                %v2125 = vld [vmem:[%s2121 + $0x8] sm:%s2114]
                %2126 = vst [vmem:[%s2122 + $0x10] sm:%s2114] %v2125
                %v2127 = vld [vmem:[%s2121 + $0x10] sm:%s2114]
                %2128 = vst [vmem:[%s2122 + $0x20] sm:%s2114] %v2127
                %v2129 = vld [vmem:[%s2121 + $0x18] sm:%s2114]
                %2130 = vst [vmem:[%s2122 + $0x30] sm:%s2114] %v2129
                %v2131 = vld [vmem:[%s2121 + $0x20] sm:%s2114]
                %2132 = vst [vmem:[%s2122 + $0x40] sm:%s2114] %v2131
                %v2133 = vld [vmem:[%s2121 + $0x28] sm:%s2114]
                %2134 = vst [vmem:[%s2122 + $0x50] sm:%s2114] %v2133
                %v2135 = vld [vmem:[%s2121 + $0x30] sm:%s2114]
                %2136 = vst [vmem:[%s2122 + $0x60] sm:%s2114] %v2135
                %v2137 = vld [vmem:[%s2121 + $0x38] sm:%s2114]
                %2138 = vst [vmem:[%s2122 + $0x70] sm:%s2114] %v2137
                %v2139 = vld [vmem:[%s2121 + $0x40] sm:%s2114]
                %2140 = vst [vmem:[%s2122 + $0x80] sm:%s2114] %v2139
                %v2141 = vld [vmem:[%s2121 + $0x48] sm:%s2114]
                %2142 = vst [vmem:[%s2122 + $0x90] sm:%s2114] %v2141
                %v2143 = vld [vmem:[%s2121 + $0x50] sm:%s2114]
                %2144 = vst [vmem:[%s2122 + $0xa0] sm:%s2114] %v2143
                %v2145 = vld [vmem:[%s2121 + $0x58] sm:%s2114]
                %2146 = vst [vmem:[%s2122 + $0xb0] sm:%s2114] %v2145
                %v2147 = vld [vmem:[%s2121 + $0x60] sm:%s2114]
                %2148 = vst [vmem:[%s2122 + $0xc0] sm:%s2114] %v2147
                %v2149 = vld [vmem:[%s2121 + $0x68] sm:%s2114]
                %2150 = vst [vmem:[%s2122 + $0xd0] sm:%s2114] %v2149
                %v2151 = vld [vmem:[%s2121 + $0x70] sm:%s2114]
                %2152 = vst [vmem:[%s2122 + $0xe0] sm:%s2114] %v2151
                %v2153 = vld [vmem:[%s2121 + $0x78] sm:%s2114]
                %2154 = vst [vmem:[%s2122 + $0xf0] sm:%s2114] %v2153
                %v2155 = vld [vmem:[%s2121 + $0x80] sm:%s2114]
                %2156 = vst [vmem:[%s2122 + $0x100] sm:%s2114] %v2155
                %v2157 = vld [vmem:[%s2121 + $0x88] sm:%s2114]
                %2158 = vst [vmem:[%s2122 + $0x110] sm:%s2114] %v2157
                %v2159 = vld [vmem:[%s2121 + $0x90] sm:%s2114]
                %2160 = vst [vmem:[%s2122 + $0x120] sm:%s2114] %v2159
                %v2161 = vld [vmem:[%s2121 + $0x98] sm:%s2114]
                %2162 = vst [vmem:[%s2122 + $0x130] sm:%s2114] %v2161
                %v2163 = vld [vmem:[%s2121 + $0xa0] sm:%s2114]
                %2164 = vst [vmem:[%s2122 + $0x140] sm:%s2114] %v2163
                %v2165 = vld [vmem:[%s2121 + $0xa8] sm:%s2114]
                %2166 = vst [vmem:[%s2122 + $0x150] sm:%s2114] %v2165
                %v2167 = vld [vmem:[%s2121 + $0xb0] sm:%s2114]
                %2168 = vst [vmem:[%s2122 + $0x160] sm:%s2114] %v2167
                %v2169 = vld [vmem:[%s2121 + $0xb8] sm:%s2114]
                %2170 = vst [vmem:[%s2122 + $0x170] sm:%s2114] %v2169
              $region91: #{fdam_forward_nhwc.1} parent=85 // loop_footer
                %s2120 = sadd.s32 1, %s2116
              $region92: #{fdam_forward_nhwc.1} parent=85 // loop_footer_branch
                %2115 = sbr.rel target = $region88
              $region93: #{fdam_forward_nhwc.1} parent=85 // loop_exit
                _
            $region86: #{fdam_forward_nhwc.1} parent=77 // pred_fallthru
              _
          $region78: #{fdam_forward_nhwc.1} parent=73 // pred_fallthru
            _
          %2231 = vnop
        $region74: #{fdam_forward_nhwc.1} parent=61 // pred_fallthru
          _
      $region62: #{fdam_forward_nhwc.1} parent=5 // pred_fallthru
        _
      %p2232 = scmp.le.s32.totalorder 2, %s11
      // Predicated region
      $region109: #{fdam_forward_nhwc.1} parent=5 // pred_check
        %p2233 = pneg %p2232
      $region110: #{fdam_forward_nhwc.1} parent=5 // pred_check_branch
        %2235 = sbr.rel (%p2233) target = $region112
      $region111: #{fdam_forward_nhwc.1} parent=5 // pred_region
        %s2236 = ssub.s32 %s11, 2
        // Predicated region
        $region113: #{fdam_forward_nhwc.1} parent=111 // pred_check
          %p2237 = pneg %p110
        $region114: #{fdam_forward_nhwc.1} parent=111 // pred_check_branch
          %2239 = sbr.rel (%p2237) target = $region116
        $region115: #{fdam_forward_nhwc.1} parent=111 // pred_region
          %s2240 = sand.u32 %s95, 1
          %s2241 = sand.u32 %s95, 1
          %s2242 = smul.addr %s2241, 192
          %s2243 = scalar_lea.vmem [#allocation5], %s2242
        $region116: #{fdam_forward_nhwc.1} parent=111 // pred_fallthru
          _
      $region112: #{fdam_forward_nhwc.1} parent=5 // pred_fallthru
        _
    $region6: #{fdam_forward_nhwc.1} parent=1 // loop_footer
      %s15 = sadd.s32 1, %s11
    $region7: #{fdam_forward_nhwc.1} parent=1 // loop_footer_branch
      %10 = sbr.rel target = $region3
    $region8: #{fdam_forward_nhwc.1} parent=1 // loop_exit
      _
    %2244 = vsyncpa [#allocation4], 1
    %s2245 = scalar_lea.sflag [#allocation4], 1
    %2246 = vsyncpa %s2245, 1

</llo_original>
